<compile_context>
chip_gen: v7x
topology: tpu7x:2x2x1
jax: 0.10.0
libtpu: 0.0.40
codegen_flags: <defaults>
</compile_context>

<pallas_src>
import functools
import math

import jax
import jax.numpy as jnp
from jax import lax
from jax.experimental import pallas as pl
from jax.experimental.pallas import tpu as pltpu


def _sigmoid(x):
    # Numerically stable sigmoid: tanh saturates, no exp overflow path.
    return 0.5 * (jnp.tanh(0.5 * x) + 1.0)


def _cbam_kernel(width, hw_real, margin,
                 x_ref, wfc_ref, bfc_ref, cmask_ref, wtap_ref,
                 o_ref, y_ref, pad_ref):
    """Fused CBAM forward for a block of B images.

    Static args:
      width:   image width W (row stride of the flattened H*W axis)
      hw_real: true H*W (pooling divisor; padded lanes are zero)
      margin:  zero margin (lanes) on each side of the flattened maps
    Refs:
      x_ref:     (B, C, HWp)   input images, C on sublanes, padded H*W on lanes
      wfc_ref:   (C, C)        channel-attention 1x1 fc weight (C_out, C_in)
      bfc_ref:   (C, 1)        fc bias
      cmask_ref: (K, HWp)      column-validity mask per horizontal tap offset
      wtap_ref:  (2B, K*K)     spatial taps, column kh*K+kw, rows [mean,max]*B
      o_ref:     (B, C, HWp)   output images
      y_ref:     (B, C, HWp)   f32 scratch: channel-attended activations
      pad_ref:   (2B, HWp+2*margin) f32 scratch: zero-margined [mean,max] maps
    """
    B, C, HWp = x_ref.shape
    K = cmask_ref.shape[0]
    pad = (K - 1) // 2
    f32 = jnp.float32

    # ---- Channel attention: ca_b = sigmoid(Wfc @ mean_HW(x_b) + b) --------
    # TODO(synk): fuse the B matvecs into one (C,C)@(C,B) MXU matmul (needs an
    # in-kernel lane-concat of the pooled columns); negligible for small B.
    inv_hw = 1.0 / float(hw_real)        # padded lanes are zero -> sum is exact
    ca_cols = []
    for b in range(B):
        pooled = jnp.sum(x_ref[b].astype(f32), axis=1, keepdims=True) * inv_hw
        logits = jnp.dot(wfc_ref[...], pooled,
                         preferred_element_type=f32) + bfc_ref[...]   # (C, 1)
        ca_cols.append(_sigmoid(logits))                              # (C, 1)

    # ---- y = x * ca, computed once into VMEM and reused three times -------
    for b in range(B):
        y_ref[b] = x_ref[b].astype(f32) * ca_cols[b]

    # ---- Spatial statistics, packed on sublanes: row 2b = mean_b, 2b+1 = max_b
    # Only the margins are zeroed (cheap) and they are zeroed every step:
    # gating on program_id==0 would be wrong under megacore 'parallel'
    # partitioning (the second TensorCore never executes step 0).
    zmargin = jnp.zeros((2 * B, margin), f32)
    pad_ref[:, 0:margin] = zmargin
    pad_ref[:, margin + HWp:margin + HWp + margin] = zmargin
    inv_c_row = jnp.full((1, C), 1.0 / float(C), f32)        # hoisted constant
    for b in range(B):
        # Channel mean on the MXU (frees VPU slots for the conv below).
        mean_b = jnp.dot(inv_c_row, y_ref[b], preferred_element_type=f32)
        max_b = jnp.max(y_ref[b], axis=0, keepdims=True)
        pad_ref[2 * b:2 * b + 1, margin:margin + HWp] = mean_b
        pad_ref[2 * b + 1:2 * b + 2, margin:margin + HWp] = max_b

    # ---- KxK spatial conv (2 -> 1 channel) on the flattened maps ----------
    # Both stat channels of all B images ride the sublane axis, so each tap is
    # a single (2B, HWp) fma against a (2B, 1) weight column; the column mask
    # is hoisted to one multiply per kw (K total) instead of one per tap.
    # TODO(synk): try one slice per kh + pltpu.roll for the kw shift (XLU slot)
    # once verified on a bundle dump.
    acc = jnp.zeros((2 * B, HWp), f32)
    for kw in range(K):
        partial = jnp.zeros((2 * B, HWp), f32)
        for kh in range(K):
            start = margin + (kh - pad) * width + (kw - pad)
            src = pad_ref[:, start:start + HWp]                 # (2B, HWp)
            t = kh * K + kw
            wvec = wtap_ref[:, t:t + 1]                         # (2B, 1)
            partial = partial + src * wvec
        acc = acc + partial * cmask_ref[kw:kw + 1, :]

    # ---- Spatial sigmoid + apply: pure lane/sublane broadcasts -------------
    for b in range(B):
        sa = _sigmoid(acc[2 * b:2 * b + 1, :] + acc[2 * b + 1:2 * b + 2, :])
        o_ref[b] = (y_ref[b] * sa).astype(o_ref.dtype)


def _vmem_capacity_bytes():
    """Per-core VMEM capacity; conservative 64 MiB (v7x) fallback."""
    try:
        info_fn = getattr(pltpu, "get_tpu_info", None)
        if info_fn is not None:
            cap = getattr(info_fn(), "vmem_capacity_bytes", None)
            if cap:
                return int(cap)
    except Exception:
        pass
    return 64 << 20


def _pick_batch(n, c, hwp, itemsize, vmem_cap):
    """Images per grid step: amortize the ~0.35us per-step overhead for small
    maps while (a) keeping >=2 'parallel' steps when possible (v7x has 2
    TensorCores sharing the parallel axis) and (b) staying well inside VMEM."""
    per_img = c * hwp * (4 * itemsize + 4)   # 2x dbuf in + 2x dbuf out + f32 y
    budget = min(max(vmem_cap // 4, 4 << 20), 16 << 20)
    best = 1
    for b in range(1, min(n, 16) + 1):
        if n % b:
            continue
        if n >= 2 and (n // b) < 2:
            continue
        if b * per_img > budget:
            continue
        best = b
    return best


def cbam_forward(x_nchw, w_fc, b_fc, w_sp):
    """CBAM forward pass.

    x_nchw: (N, C, H, W)    input (f32 or bf16)
    w_fc:   (C, C, 1, 1)    channel-attention 1x1 conv weight (PyTorch layout)
    b_fc:   (C,)            channel-attention bias
    w_sp:   (1, 2, K, K)    spatial-attention conv weight, K in {3, 7}, no bias
    """
    N, C, H, W = x_nchw.shape
    K = w_sp.shape[-1]
    assert K in (3, 7) and w_sp.shape == (1, 2, K, K)
    assert w_fc.shape == (C, C, 1, 1) and b_fc.shape == (C,)
    pad = (K - 1) // 2
    HW = H * W
    HWp = ((HW + 127) // 128) * 128          # lane-dense (unmasked vld/vst)
    in_dtype = x_nchw.dtype
    itemsize = x_nchw.dtype.itemsize

    # ---- plain-JAX glue: reshape, zero-pad, weight repack, mask precompute --
    x_flat = x_nchw.reshape(N, C, HW)
    if HWp != HW:
        x_flat = jnp.pad(x_flat, ((0, 0), (0, 0), (0, HWp - HW)))

    wfc = w_fc[:, :, 0, 0].astype(jnp.float32)                 # (C_out, C_in)
    bfc = b_fc.reshape(C, 1).astype(jnp.float32)               # (C, 1)

    # Column-validity masks: for horizontal tap offset dw = kw - pad, a pure
    # lane shift of the flattened map would wrap across row boundaries; zero
    # destination columns whose source column w + dw is outside [0, W).
    col = jnp.arange(HWp, dtype=jnp.int32) % W                 # (HWp,)
    kw_off = jnp.arange(K, dtype=jnp.int32)[:, None] - pad     # (K, 1)
    cmask = ((col[None, :] + kw_off >= 0) &
             (col[None, :] + kw_off < W)).astype(jnp.float32)  # (K, HWp)

    # Lane-aligned zero margin covering the largest flattened tap offset.
    margin = ((pad * W + pad) + 127) // 128 * 128

    vmem_cap = _vmem_capacity_bytes()
    B = _pick_batch(N, C, HWp, itemsize, vmem_cap)

    # Per-tap weight columns: rows interleaved [mean, max] per image.
    w2 = w_sp[0].reshape(2, K * K).astype(jnp.float32)         # (2, K*K)
    wtap = jnp.tile(w2, (B, 1))                                # (2B, K*K)

    kernel = functools.partial(_cbam_kernel, W, HW, margin)

    # VMEM estimate: double-buffered in/out image blocks, double-buffered
    # constants, f32 y scratch, padded-map scratch, Mosaic internal headroom.
    blk = B * C * HWp
    need = (4 * blk * itemsize
            + blk * 4
            + 2 * B * (HWp + 2 * margin) * 4
            + 2 * (C * C + C + K * HWp + 2 * B * K * K) * 4
            + (2 << 20))
    vmem_limit = int(min(max(need, 8 << 20), int(0.8 * vmem_cap)))

    cost = pl.CostEstimate(
        flops=int(N * (2 * C * C + 6 * C * HWp + 4 * K * K * HWp)),
        transcendentals=int(N * (C + HWp)),
        bytes_accessed=int(2 * N * C * HW * itemsize
                           + (C * C + C + K * HWp + 2 * B * K * K) * 4))

    out_flat = pl.pallas_call(
        kernel,
        out_shape=jax.ShapeDtypeStruct((N, C, HWp), in_dtype),
        grid_spec=pltpu.PrefetchScalarGridSpec(
            num_scalar_prefetch=0,
            grid=(N // B,),
            in_specs=[
                pl.BlockSpec((B, C, HWp), lambda n: (n, 0, 0)),
                pl.BlockSpec((C, C), lambda n: (0, 0)),
                pl.BlockSpec((C, 1), lambda n: (0, 0)),
                pl.BlockSpec((K, HWp), lambda n: (0, 0)),
                pl.BlockSpec((2 * B, K * K), lambda n: (0, 0)),
            ],
            out_specs=pl.BlockSpec((B, C, HWp), lambda n: (n, 0, 0)),
            scratch_shapes=[
                pltpu.VMEM((B, C, HWp), jnp.float32),
                pltpu.VMEM((2 * B, HWp + 2 * margin), jnp.float32),
            ],
        ),
        compiler_params=pltpu.CompilerParams(
            dimension_semantics=("parallel",),
            vmem_limit_bytes=vmem_limit,
        ),
        cost_estimate=cost,
    )(x_flat, wfc, bfc, cmask, wtap)

    return out_flat[:, :, :HW].reshape(N, C, H, W)


def reference_forward(x, w_fc, b_fc, w_sp):
    """Pure-JAX NCHW reference for correctness checking."""
    N, C, H, W = x.shape
    K = w_sp.shape[-1]
    pad = (K - 1) // 2
    pooled = jnp.mean(x, axis=(2, 3), keepdims=True)                  # (N,C,1,1)
    logits = jnp.einsum('nihw,oi->nohw', pooled, w_fc[:, :, 0, 0],
                        precision=lax.Precision.HIGHEST) \
        + b_fc.reshape(1, C, 1, 1)
    y = x * jax.nn.sigmoid(logits)
    cat = jnp.concatenate([jnp.mean(y, axis=1, keepdims=True),
                           jnp.max(y, axis=1, keepdims=True)], axis=1)
    dn = lax.conv_dimension_numbers(cat.shape, w_sp.shape,
                                    ('NCHW', 'OIHW', 'NCHW'))
    s = lax.conv_general_dilated(cat, w_sp, (1, 1), ((pad, pad), (pad, pad)),
                                 dimension_numbers=dn,
                                 precision=lax.Precision.HIGHEST)
    return y * jax.nn.sigmoid(s)


def _run_case(key, N, C, H, W, KSIZE):
    k_x, k_wfc, k_bfc, k_wsp = jax.random.split(key, 4)
    x = jax.random.normal(k_x, (N, C, H, W), dtype=jnp.float32)

    bound_fc = 1.0 / math.sqrt(C)
    w_fc = jax.random.uniform(k_wfc, (C, C, 1, 1), jnp.float32,
                              minval=-bound_fc, maxval=bound_fc)
    b_fc = jax.random.uniform(k_bfc, (C,), jnp.float32,
                              minval=-bound_fc, maxval=bound_fc)
    bound_sp = 1.0 / math.sqrt(2 * KSIZE * KSIZE)
    w_sp = jax.random.uniform(k_wsp, (1, 2, KSIZE, KSIZE), jnp.float32,
                              minval=-bound_sp, maxval=bound_sp)

    out = jax.block_until_ready(cbam_forward(x, w_fc, b_fc, w_sp))
    ref = reference_forward(x, w_fc, b_fc, w_sp)
    assert out.shape == (N, C, H, W)
    max_err = float(jnp.max(jnp.abs(out - ref)))
    # 5e-4: in-kernel MXU matmuls (fc + channel-mean) may use a multi-pass
    # bf16 decomposition for f32 operands.
    assert jnp.allclose(out, ref, atol=5e-4, rtol=5e-4), max_err


if __name__ == "__main__":
    key = jax.random.PRNGKey(0)
    k1, k2 = jax.random.split(key)

    # Lane-aligned feature map (H*W = 256): batched grid, 2 images per step,
    # 2 parallel grid steps.
    _run_case(k1, 4, 64, 16, 16, 7)

    # Non-multiple-of-128 feature map (H*W = 120 -> padded to 128 lanes):
    # exercises the zero-pad / crop / mask path.
    _run_case(k2, 3, 48, 10, 12, 7)

    print("KERNEL_OK")
</pallas_src>

<mosaic_0001>
module attributes {stable_mosaic.version = 11 : i64} {
  func.func @_cbam_kernel(%arg0: i32, %arg1: memref<2x64x256xf32, #tpu.memory_space<vmem>>, %arg2: memref<64x64xf32, #tpu.memory_space<vmem>>, %arg3: memref<64x1xf32, #tpu.memory_space<vmem>>, %arg4: memref<7x256xf32, #tpu.memory_space<vmem>>, %arg5: memref<4x49xf32, #tpu.memory_space<vmem>>, %arg6: memref<2x64x256xf32, #tpu.memory_space<vmem>>, %arg7: memref<2x64x256xf32, #tpu.memory_space<vmem>>, %arg8: memref<4x512xf32, #tpu.memory_space<vmem>>) attributes {dimension_semantics = [#tpu.dimension_semantics<parallel>], iteration_bounds = array<i64: 2>, scalar_prefetch = 0 : i64, scratch_operands = 2 : i64, tpu.core_type = #tpu.core_type<tc>, window_params = [{transform_indices = @transform_0, window_bounds = array<i64: 2, 64, 256>}, {pipeline_mode = #tpu.pipeline_mode<synchronous>, transform_indices = @transform_1, window_bounds = array<i64: 64, 64>}, {pipeline_mode = #tpu.pipeline_mode<synchronous>, transform_indices = @transform_2, window_bounds = array<i64: 64, 1>}, {pipeline_mode = #tpu.pipeline_mode<synchronous>, transform_indices = @transform_3, window_bounds = array<i64: 7, 256>}, {pipeline_mode = #tpu.pipeline_mode<synchronous>, transform_indices = @transform_4, window_bounds = array<i64: 4, 49>}, {transform_indices = @transform_5, window_bounds = array<i64: 2, 64, 256>}]} {
    %c0 = arith.constant 0 : index
    %c0_0 = arith.constant 0 : index
    %c0_1 = arith.constant 0 : index
    %0 = vector.load %arg1[%c0, %c0_0, %c0_1] : memref<2x64x256xf32, #tpu.memory_space<vmem>>, vector<1x64x256xf32>
    %1 = vector.shape_cast %0 : vector<1x64x256xf32> to vector<64x256xf32>
    %cst = arith.constant dense<0.000000e+00> : vector<64xf32>
    %2 = vector.multi_reduction <add>, %1, %cst [1] : vector<64x256xf32> to vector<64xf32>
    %3 = vector.shape_cast %2 : vector<64xf32> to vector<64x1xf32>
    %cst_2 = arith.constant 3.906250e-03 : f32
    %4 = vector.broadcast %cst_2 : f32 to vector<64x1xf32>
    %5 = arith.mulf %3, %4 : vector<64x1xf32>
    %c0_3 = arith.constant 0 : index
    %c0_4 = arith.constant 0 : index
    %6 = vector.load %arg2[%c0_3, %c0_4] : memref<64x64xf32, #tpu.memory_space<vmem>>, vector<64x64xf32>
    %cst_5 = arith.constant dense<0.000000e+00> : vector<64x1xf32>
    %7 = tpu.matmul %6, %5, %cst_5 {dimension_numbers = #tpu.dot_dimension_numbers<[1], [0], [0], [1], [0, 0, 1, 1], [], []>} : vector<64x64xf32>, vector<64x1xf32>, vector<64x1xf32> -> vector<64x1xf32>
    %c0_6 = arith.constant 0 : index
    %c0_7 = arith.constant 0 : index
    %8 = vector.load %arg3[%c0_6, %c0_7] : memref<64x1xf32, #tpu.memory_space<vmem>>, vector<64x1xf32>
    %9 = arith.addf %7, %8 : vector<64x1xf32>
    %cst_8 = arith.constant 5.000000e-01 : f32
    %10 = vector.broadcast %cst_8 : f32 to vector<64x1xf32>
    %11 = arith.mulf %10, %9 : vector<64x1xf32>
    %12 = math.tanh %11 : vector<64x1xf32>
    %cst_9 = arith.constant 1.000000e+00 : f32
    %13 = vector.broadcast %cst_9 : f32 to vector<64x1xf32>
    %14 = arith.addf %12, %13 : vector<64x1xf32>
    %cst_10 = arith.constant 5.000000e-01 : f32
    %15 = vector.broadcast %cst_10 : f32 to vector<64x1xf32>
    %16 = arith.mulf %15, %14 : vector<64x1xf32>
    %c1 = arith.constant 1 : index
    %c0_11 = arith.constant 0 : index
    %c0_12 = arith.constant 0 : index
    %17 = vector.load %arg1[%c1, %c0_11, %c0_12] : memref<2x64x256xf32, #tpu.memory_space<vmem>>, vector<1x64x256xf32>
    %18 = vector.shape_cast %17 : vector<1x64x256xf32> to vector<64x256xf32>
    %cst_13 = arith.constant dense<0.000000e+00> : vector<64xf32>
    %19 = vector.multi_reduction <add>, %18, %cst_13 [1] : vector<64x256xf32> to vector<64xf32>
    %20 = vector.shape_cast %19 : vector<64xf32> to vector<64x1xf32>
    %cst_14 = arith.constant 3.906250e-03 : f32
    %21 = vector.broadcast %cst_14 : f32 to vector<64x1xf32>
    %22 = arith.mulf %20, %21 : vector<64x1xf32>
    %c0_15 = arith.constant 0 : index
    %c0_16 = arith.constant 0 : index
    %23 = vector.load %arg2[%c0_15, %c0_16] : memref<64x64xf32, #tpu.memory_space<vmem>>, vector<64x64xf32>
    %cst_17 = arith.constant dense<0.000000e+00> : vector<64x1xf32>
    %24 = tpu.matmul %23, %22, %cst_17 {dimension_numbers = #tpu.dot_dimension_numbers<[1], [0], [0], [1], [0, 0, 1, 1], [], []>} : vector<64x64xf32>, vector<64x1xf32>, vector<64x1xf32> -> vector<64x1xf32>
    %c0_18 = arith.constant 0 : index
    %c0_19 = arith.constant 0 : index
    %25 = vector.load %arg3[%c0_18, %c0_19] : memref<64x1xf32, #tpu.memory_space<vmem>>, vector<64x1xf32>
    %26 = arith.addf %24, %25 : vector<64x1xf32>
    %cst_20 = arith.constant 5.000000e-01 : f32
    %27 = vector.broadcast %cst_20 : f32 to vector<64x1xf32>
    %28 = arith.mulf %27, %26 : vector<64x1xf32>
    %29 = math.tanh %28 : vector<64x1xf32>
    %cst_21 = arith.constant 1.000000e+00 : f32
    %30 = vector.broadcast %cst_21 : f32 to vector<64x1xf32>
    %31 = arith.addf %29, %30 : vector<64x1xf32>
    %cst_22 = arith.constant 5.000000e-01 : f32
    %32 = vector.broadcast %cst_22 : f32 to vector<64x1xf32>
    %33 = arith.mulf %32, %31 : vector<64x1xf32>
    %c0_23 = arith.constant 0 : index
    %c0_24 = arith.constant 0 : index
    %c0_25 = arith.constant 0 : index
    %34 = vector.load %arg1[%c0_23, %c0_24, %c0_25] : memref<2x64x256xf32, #tpu.memory_space<vmem>>, vector<1x64x256xf32>
    %35 = vector.shape_cast %34 : vector<1x64x256xf32> to vector<64x256xf32>
    %36 = vector.broadcast %16 : vector<64x1xf32> to vector<64x256xf32>
    %37 = arith.mulf %35, %36 : vector<64x256xf32>
    %c0_26 = arith.constant 0 : index
    %c0_27 = arith.constant 0 : index
    %c0_28 = arith.constant 0 : index
    %38 = vector.load %arg7[%c0_26, %c0_27, %c0_28] : memref<2x64x256xf32, #tpu.memory_space<vmem>>, vector<1x64x256xf32>
    %39 = vector.shape_cast %38 : vector<1x64x256xf32> to vector<64x256xf32>
    %40 = vector.shape_cast %37 : vector<64x256xf32> to vector<1x64x256xf32>
    tpu.vector_store %arg7[%c0_26, %c0_27, %c0_28], %40 {strides = array<i32>} : memref<2x64x256xf32, #tpu.memory_space<vmem>>, vector<1x64x256xf32>,
    %c1_29 = arith.constant 1 : index
    %c0_30 = arith.constant 0 : index
    %c0_31 = arith.constant 0 : index
    %41 = vector.load %arg1[%c1_29, %c0_30, %c0_31] : memref<2x64x256xf32, #tpu.memory_space<vmem>>, vector<1x64x256xf32>
    %42 = vector.shape_cast %41 : vector<1x64x256xf32> to vector<64x256xf32>
    %43 = vector.broadcast %33 : vector<64x1xf32> to vector<64x256xf32>
    %44 = arith.mulf %42, %43 : vector<64x256xf32>
    %c1_32 = arith.constant 1 : index
    %c0_33 = arith.constant 0 : index
    %c0_34 = arith.constant 0 : index
    %45 = vector.load %arg7[%c1_32, %c0_33, %c0_34] : memref<2x64x256xf32, #tpu.memory_space<vmem>>, vector<1x64x256xf32>
    %46 = vector.shape_cast %45 : vector<1x64x256xf32> to vector<64x256xf32>
    %47 = vector.shape_cast %44 : vector<64x256xf32> to vector<1x64x256xf32>
    tpu.vector_store %arg7[%c1_32, %c0_33, %c0_34], %47 {strides = array<i32>} : memref<2x64x256xf32, #tpu.memory_space<vmem>>, vector<1x64x256xf32>,
    %cst_35 = arith.constant 0.000000e+00 : f32
    %48 = vector.broadcast %cst_35 : f32 to vector<4x128xf32>
    %c0_36 = arith.constant 0 : index
    %c0_37 = arith.constant 0 : index
    %49 = vector.load %arg8[%c0_36, %c0_37] : memref<4x512xf32, #tpu.memory_space<vmem>>, vector<4x128xf32>
    tpu.vector_store %arg8[%c0_36, %c0_37], %48 {strides = array<i32>} : memref<4x512xf32, #tpu.memory_space<vmem>>, vector<4x128xf32>,
    %c0_38 = arith.constant 0 : index
    %c384 = arith.constant 384 : index
    %50 = vector.load %arg8[%c0_38, %c384] : memref<4x512xf32, #tpu.memory_space<vmem>>, vector<4x128xf32>
    tpu.vector_store %arg8[%c0_38, %c384], %48 {strides = array<i32>} : memref<4x512xf32, #tpu.memory_space<vmem>>, vector<4x128xf32>,
    %cst_39 = arith.constant 1.562500e-02 : f32
    %51 = vector.broadcast %cst_39 : f32 to vector<1x64xf32>
    %c0_40 = arith.constant 0 : index
    %c0_41 = arith.constant 0 : index
    %c0_42 = arith.constant 0 : index
    %52 = vector.load %arg7[%c0_40, %c0_41, %c0_42] : memref<2x64x256xf32, #tpu.memory_space<vmem>>, vector<1x64x256xf32>
    %53 = vector.shape_cast %52 : vector<1x64x256xf32> to vector<64x256xf32>
    %cst_43 = arith.constant dense<0.000000e+00> : vector<1x256xf32>
    %54 = tpu.matmul %51, %53, %cst_43 {dimension_numbers = #tpu.dot_dimension_numbers<[1], [0], [0], [1], [0, 0, 1, 1], [], []>} : vector<1x64xf32>, vector<64x256xf32>, vector<1x256xf32> -> vector<1x256xf32>
    %c0_44 = arith.constant 0 : index
    %c0_45 = arith.constant 0 : index
    %c0_46 = arith.constant 0 : index
    %55 = vector.load %arg7[%c0_44, %c0_45, %c0_46] : memref<2x64x256xf32, #tpu.memory_space<vmem>>, vector<1x64x256xf32>
    %56 = vector.shape_cast %55 : vector<1x64x256xf32> to vector<64x256xf32>
    %cst_47 = arith.constant dense<0xFF800000> : vector<256xf32>
    %57 = vector.multi_reduction <maximumf>, %56, %cst_47 [0] : vector<64x256xf32> to vector<256xf32>
    %58 = vector.shape_cast %57 : vector<256xf32> to vector<1x256xf32>
    %c0_48 = arith.constant 0 : index
    %c128 = arith.constant 128 : index
    %59 = vector.load %arg8[%c0_48, %c128] : memref<4x512xf32, #tpu.memory_space<vmem>>, vector<1x256xf32>
    tpu.vector_store %arg8[%c0_48, %c128], %54 {strides = array<i32>} : memref<4x512xf32, #tpu.memory_space<vmem>>, vector<1x256xf32>,
    %c1_49 = arith.constant 1 : index
    %c128_50 = arith.constant 128 : index
    %60 = vector.load %arg8[%c1_49, %c128_50] : memref<4x512xf32, #tpu.memory_space<vmem>>, vector<1x256xf32>
    tpu.vector_store %arg8[%c1_49, %c128_50], %58 {strides = array<i32>} : memref<4x512xf32, #tpu.memory_space<vmem>>, vector<1x256xf32>,
    %c1_51 = arith.constant 1 : index
    %c0_52 = arith.constant 0 : index
    %c0_53 = arith.constant 0 : index
    %61 = vector.load %arg7[%c1_51, %c0_52, %c0_53] : memref<2x64x256xf32, #tpu.memory_space<vmem>>, vector<1x64x256xf32>
    %62 = vector.shape_cast %61 : vector<1x64x256xf32> to vector<64x256xf32>
    %cst_54 = arith.constant dense<0.000000e+00> : vector<1x256xf32>
    %63 = tpu.matmul %51, %62, %cst_54 {dimension_numbers = #tpu.dot_dimension_numbers<[1], [0], [0], [1], [0, 0, 1, 1], [], []>} : vector<1x64xf32>, vector<64x256xf32>, vector<1x256xf32> -> vector<1x256xf32>
    %c1_55 = arith.constant 1 : index
    %c0_56 = arith.constant 0 : index
    %c0_57 = arith.constant 0 : index
    %64 = vector.load %arg7[%c1_55, %c0_56, %c0_57] : memref<2x64x256xf32, #tpu.memory_space<vmem>>, vector<1x64x256xf32>
    %65 = vector.shape_cast %64 : vector<1x64x256xf32> to vector<64x256xf32>
    %cst_58 = arith.constant dense<0xFF800000> : vector<256xf32>
    %66 = vector.multi_reduction <maximumf>, %65, %cst_58 [0] : vector<64x256xf32> to vector<256xf32>
    %67 = vector.shape_cast %66 : vector<256xf32> to vector<1x256xf32>
    %c2 = arith.constant 2 : index
    %c128_59 = arith.constant 128 : index
    %68 = vector.load %arg8[%c2, %c128_59] : memref<4x512xf32, #tpu.memory_space<vmem>>, vector<1x256xf32>
    tpu.vector_store %arg8[%c2, %c128_59], %63 {strides = array<i32>} : memref<4x512xf32, #tpu.memory_space<vmem>>, vector<1x256xf32>,
    %c3 = arith.constant 3 : index
    %c128_60 = arith.constant 128 : index
    %69 = vector.load %arg8[%c3, %c128_60] : memref<4x512xf32, #tpu.memory_space<vmem>>, vector<1x256xf32>
    tpu.vector_store %arg8[%c3, %c128_60], %67 {strides = array<i32>} : memref<4x512xf32, #tpu.memory_space<vmem>>, vector<1x256xf32>,
    %cst_61 = arith.constant 0.000000e+00 : f32
    %70 = vector.broadcast %cst_61 : f32 to vector<4x256xf32>
    %cst_62 = arith.constant 0.000000e+00 : f32
    %71 = vector.broadcast %cst_62 : f32 to vector<4x256xf32>
    %c0_63 = arith.constant 0 : index
    %c77 = arith.constant 77 : index
    %72 = vector.load %arg8[%c0_63, %c77] : memref<4x512xf32, #tpu.memory_space<vmem>>, vector<4x256xf32>
    %c0_64 = arith.constant 0 : index
    %c0_65 = arith.constant 0 : index
    %73 = vector.load %arg5[%c0_64, %c0_65] : memref<4x49xf32, #tpu.memory_space<vmem>>, vector<4x1xf32>
    %74 = vector.broadcast %73 : vector<4x1xf32> to vector<4x256xf32>
    %75 = arith.mulf %72, %74 : vector<4x256xf32>
    %76 = arith.addf %71, %75 : vector<4x256xf32>
    %c0_66 = arith.constant 0 : index
    %c93 = arith.constant 93 : index
    %77 = vector.load %arg8[%c0_66, %c93] : memref<4x512xf32, #tpu.memory_space<vmem>>, vector<4x256xf32>
    %c0_67 = arith.constant 0 : index
    %c7 = arith.constant 7 : index
    %78 = vector.load %arg5[%c0_67, %c7] : memref<4x49xf32, #tpu.memory_space<vmem>>, vector<4x1xf32>
    %79 = vector.broadcast %78 : vector<4x1xf32> to vector<4x256xf32>
    %80 = arith.mulf %77, %79 : vector<4x256xf32>
    %81 = arith.addf %76, %80 : vector<4x256xf32>
    %c0_68 = arith.constant 0 : index
    %c109 = arith.constant 109 : index
    %82 = vector.load %arg8[%c0_68, %c109] : memref<4x512xf32, #tpu.memory_space<vmem>>, vector<4x256xf32>
    %c0_69 = arith.constant 0 : index
    %c14 = arith.constant 14 : index
    %83 = vector.load %arg5[%c0_69, %c14] : memref<4x49xf32, #tpu.memory_space<vmem>>, vector<4x1xf32>
    %84 = vector.broadcast %83 : vector<4x1xf32> to vector<4x256xf32>
    %85 = arith.mulf %82, %84 : vector<4x256xf32>
    %86 = arith.addf %81, %85 : vector<4x256xf32>
    %c0_70 = arith.constant 0 : index
    %c125 = arith.constant 125 : index
    %87 = vector.load %arg8[%c0_70, %c125] : memref<4x512xf32, #tpu.memory_space<vmem>>, vector<4x256xf32>
    %c0_71 = arith.constant 0 : index
    %c21 = arith.constant 21 : index
    %88 = vector.load %arg5[%c0_71, %c21] : memref<4x49xf32, #tpu.memory_space<vmem>>, vector<4x1xf32>
    %89 = vector.broadcast %88 : vector<4x1xf32> to vector<4x256xf32>
    %90 = arith.mulf %87, %89 : vector<4x256xf32>
    %91 = arith.addf %86, %90 : vector<4x256xf32>
    %c0_72 = arith.constant 0 : index
    %c141 = arith.constant 141 : index
    %92 = vector.load %arg8[%c0_72, %c141] : memref<4x512xf32, #tpu.memory_space<vmem>>, vector<4x256xf32>
    %c0_73 = arith.constant 0 : index
    %c28 = arith.constant 28 : index
    %93 = vector.load %arg5[%c0_73, %c28] : memref<4x49xf32, #tpu.memory_space<vmem>>, vector<4x1xf32>
    %94 = vector.broadcast %93 : vector<4x1xf32> to vector<4x256xf32>
    %95 = arith.mulf %92, %94 : vector<4x256xf32>
    %96 = arith.addf %91, %95 : vector<4x256xf32>
    %c0_74 = arith.constant 0 : index
    %c157 = arith.constant 157 : index
    %97 = vector.load %arg8[%c0_74, %c157] : memref<4x512xf32, #tpu.memory_space<vmem>>, vector<4x256xf32>
    %c0_75 = arith.constant 0 : index
    %c35 = arith.constant 35 : index
    %98 = vector.load %arg5[%c0_75, %c35] : memref<4x49xf32, #tpu.memory_space<vmem>>, vector<4x1xf32>
    %99 = vector.broadcast %98 : vector<4x1xf32> to vector<4x256xf32>
    %100 = arith.mulf %97, %99 : vector<4x256xf32>
    %101 = arith.addf %96, %100 : vector<4x256xf32>
    %c0_76 = arith.constant 0 : index
    %c173 = arith.constant 173 : index
    %102 = vector.load %arg8[%c0_76, %c173] : memref<4x512xf32, #tpu.memory_space<vmem>>, vector<4x256xf32>
    %c0_77 = arith.constant 0 : index
    %c42 = arith.constant 42 : index
    %103 = vector.load %arg5[%c0_77, %c42] : memref<4x49xf32, #tpu.memory_space<vmem>>, vector<4x1xf32>
    %104 = vector.broadcast %103 : vector<4x1xf32> to vector<4x256xf32>
    %105 = arith.mulf %102, %104 : vector<4x256xf32>
    %106 = arith.addf %101, %105 : vector<4x256xf32>
    %c0_78 = arith.constant 0 : index
    %c0_79 = arith.constant 0 : index
    %107 = vector.load %arg4[%c0_78, %c0_79] : memref<7x256xf32, #tpu.memory_space<vmem>>, vector<1x256xf32>
    %108 = vector.broadcast %107 : vector<1x256xf32> to vector<4x256xf32>
    %109 = arith.mulf %106, %108 : vector<4x256xf32>
    %110 = arith.addf %70, %109 : vector<4x256xf32>
    %cst_80 = arith.constant 0.000000e+00 : f32
    %111 = vector.broadcast %cst_80 : f32 to vector<4x256xf32>
    %c0_81 = arith.constant 0 : index
    %c78 = arith.constant 78 : index
    %112 = vector.load %arg8[%c0_81, %c78] : memref<4x512xf32, #tpu.memory_space<vmem>>, vector<4x256xf32>
    %c0_82 = arith.constant 0 : index
    %c1_83 = arith.constant 1 : index
    %113 = vector.load %arg5[%c0_82, %c1_83] : memref<4x49xf32, #tpu.memory_space<vmem>>, vector<4x1xf32>
    %114 = vector.broadcast %113 : vector<4x1xf32> to vector<4x256xf32>
    %115 = arith.mulf %112, %114 : vector<4x256xf32>
    %116 = arith.addf %111, %115 : vector<4x256xf32>
    %c0_84 = arith.constant 0 : index
    %c94 = arith.constant 94 : index
    %117 = vector.load %arg8[%c0_84, %c94] : memref<4x512xf32, #tpu.memory_space<vmem>>, vector<4x256xf32>
    %c0_85 = arith.constant 0 : index
    %c8 = arith.constant 8 : index
    %118 = vector.load %arg5[%c0_85, %c8] : memref<4x49xf32, #tpu.memory_space<vmem>>, vector<4x1xf32>
    %119 = vector.broadcast %118 : vector<4x1xf32> to vector<4x256xf32>
    %120 = arith.mulf %117, %119 : vector<4x256xf32>
    %121 = arith.addf %116, %120 : vector<4x256xf32>
    %c0_86 = arith.constant 0 : index
    %c110 = arith.constant 110 : index
    %122 = vector.load %arg8[%c0_86, %c110] : memref<4x512xf32, #tpu.memory_space<vmem>>, vector<4x256xf32>
    %c0_87 = arith.constant 0 : index
    %c15 = arith.constant 15 : index
    %123 = vector.load %arg5[%c0_87, %c15] : memref<4x49xf32, #tpu.memory_space<vmem>>, vector<4x1xf32>
    %124 = vector.broadcast %123 : vector<4x1xf32> to vector<4x256xf32>
    %125 = arith.mulf %122, %124 : vector<4x256xf32>
    %126 = arith.addf %121, %125 : vector<4x256xf32>
    %c0_88 = arith.constant 0 : index
    %c126 = arith.constant 126 : index
    %127 = vector.load %arg8[%c0_88, %c126] : memref<4x512xf32, #tpu.memory_space<vmem>>, vector<4x256xf32>
    %c0_89 = arith.constant 0 : index
    %c22 = arith.constant 22 : index
    %128 = vector.load %arg5[%c0_89, %c22] : memref<4x49xf32, #tpu.memory_space<vmem>>, vector<4x1xf32>
    %129 = vector.broadcast %128 : vector<4x1xf32> to vector<4x256xf32>
    %130 = arith.mulf %127, %129 : vector<4x256xf32>
    %131 = arith.addf %126, %130 : vector<4x256xf32>
    %c0_90 = arith.constant 0 : index
    %c142 = arith.constant 142 : index
    %132 = vector.load %arg8[%c0_90, %c142] : memref<4x512xf32, #tpu.memory_space<vmem>>, vector<4x256xf32>
    %c0_91 = arith.constant 0 : index
    %c29 = arith.constant 29 : index
    %133 = vector.load %arg5[%c0_91, %c29] : memref<4x49xf32, #tpu.memory_space<vmem>>, vector<4x1xf32>
    %134 = vector.broadcast %133 : vector<4x1xf32> to vector<4x256xf32>
    %135 = arith.mulf %132, %134 : vector<4x256xf32>
    %136 = arith.addf %131, %135 : vector<4x256xf32>
    %c0_92 = arith.constant 0 : index
    %c158 = arith.constant 158 : index
    %137 = vector.load %arg8[%c0_92, %c158] : memref<4x512xf32, #tpu.memory_space<vmem>>, vector<4x256xf32>
    %c0_93 = arith.constant 0 : index
    %c36 = arith.constant 36 : index
    %138 = vector.load %arg5[%c0_93, %c36] : memref<4x49xf32, #tpu.memory_space<vmem>>, vector<4x1xf32>
    %139 = vector.broadcast %138 : vector<4x1xf32> to vector<4x256xf32>
    %140 = arith.mulf %137, %139 : vector<4x256xf32>
    %141 = arith.addf %136, %140 : vector<4x256xf32>
    %c0_94 = arith.constant 0 : index
    %c174 = arith.constant 174 : index
    %142 = vector.load %arg8[%c0_94, %c174] : memref<4x512xf32, #tpu.memory_space<vmem>>, vector<4x256xf32>
    %c0_95 = arith.constant 0 : index
    %c43 = arith.constant 43 : index
    %143 = vector.load %arg5[%c0_95, %c43] : memref<4x49xf32, #tpu.memory_space<vmem>>, vector<4x1xf32>
    %144 = vector.broadcast %143 : vector<4x1xf32> to vector<4x256xf32>
    %145 = arith.mulf %142, %144 : vector<4x256xf32>
    %146 = arith.addf %141, %145 : vector<4x256xf32>
    %c1_96 = arith.constant 1 : index
    %c0_97 = arith.constant 0 : index
    %147 = vector.load %arg4[%c1_96, %c0_97] : memref<7x256xf32, #tpu.memory_space<vmem>>, vector<1x256xf32>
    %148 = vector.broadcast %147 : vector<1x256xf32> to vector<4x256xf32>
    %149 = arith.mulf %146, %148 : vector<4x256xf32>
    %150 = arith.addf %110, %149 : vector<4x256xf32>
    %cst_98 = arith.constant 0.000000e+00 : f32
    %151 = vector.broadcast %cst_98 : f32 to vector<4x256xf32>
    %c0_99 = arith.constant 0 : index
    %c79 = arith.constant 79 : index
    %152 = vector.load %arg8[%c0_99, %c79] : memref<4x512xf32, #tpu.memory_space<vmem>>, vector<4x256xf32>
    %c0_100 = arith.constant 0 : index
    %c2_101 = arith.constant 2 : index
    %153 = vector.load %arg5[%c0_100, %c2_101] : memref<4x49xf32, #tpu.memory_space<vmem>>, vector<4x1xf32>
    %154 = vector.broadcast %153 : vector<4x1xf32> to vector<4x256xf32>
    %155 = arith.mulf %152, %154 : vector<4x256xf32>
    %156 = arith.addf %151, %155 : vector<4x256xf32>
    %c0_102 = arith.constant 0 : index
    %c95 = arith.constant 95 : index
    %157 = vector.load %arg8[%c0_102, %c95] : memref<4x512xf32, #tpu.memory_space<vmem>>, vector<4x256xf32>
    %c0_103 = arith.constant 0 : index
    %c9 = arith.constant 9 : index
    %158 = vector.load %arg5[%c0_103, %c9] : memref<4x49xf32, #tpu.memory_space<vmem>>, vector<4x1xf32>
    %159 = vector.broadcast %158 : vector<4x1xf32> to vector<4x256xf32>
    %160 = arith.mulf %157, %159 : vector<4x256xf32>
    %161 = arith.addf %156, %160 : vector<4x256xf32>
    %c0_104 = arith.constant 0 : index
    %c111 = arith.constant 111 : index
    %162 = vector.load %arg8[%c0_104, %c111] : memref<4x512xf32, #tpu.memory_space<vmem>>, vector<4x256xf32>
    %c0_105 = arith.constant 0 : index
    %c16 = arith.constant 16 : index
    %163 = vector.load %arg5[%c0_105, %c16] : memref<4x49xf32, #tpu.memory_space<vmem>>, vector<4x1xf32>
    %164 = vector.broadcast %163 : vector<4x1xf32> to vector<4x256xf32>
    %165 = arith.mulf %162, %164 : vector<4x256xf32>
    %166 = arith.addf %161, %165 : vector<4x256xf32>
    %c0_106 = arith.constant 0 : index
    %c127 = arith.constant 127 : index
    %167 = vector.load %arg8[%c0_106, %c127] : memref<4x512xf32, #tpu.memory_space<vmem>>, vector<4x256xf32>
    %c0_107 = arith.constant 0 : index
    %c23 = arith.constant 23 : index
    %168 = vector.load %arg5[%c0_107, %c23] : memref<4x49xf32, #tpu.memory_space<vmem>>, vector<4x1xf32>
    %169 = vector.broadcast %168 : vector<4x1xf32> to vector<4x256xf32>
    %170 = arith.mulf %167, %169 : vector<4x256xf32>
    %171 = arith.addf %166, %170 : vector<4x256xf32>
    %c0_108 = arith.constant 0 : index
    %c143 = arith.constant 143 : index
    %172 = vector.load %arg8[%c0_108, %c143] : memref<4x512xf32, #tpu.memory_space<vmem>>, vector<4x256xf32>
    %c0_109 = arith.constant 0 : index
    %c30 = arith.constant 30 : index
    %173 = vector.load %arg5[%c0_109, %c30] : memref<4x49xf32, #tpu.memory_space<vmem>>, vector<4x1xf32>
    %174 = vector.broadcast %173 : vector<4x1xf32> to vector<4x256xf32>
    %175 = arith.mulf %172, %174 : vector<4x256xf32>
    %176 = arith.addf %171, %175 : vector<4x256xf32>
    %c0_110 = arith.constant 0 : index
    %c159 = arith.constant 159 : index
    %177 = vector.load %arg8[%c0_110, %c159] : memref<4x512xf32, #tpu.memory_space<vmem>>, vector<4x256xf32>
    %c0_111 = arith.constant 0 : index
    %c37 = arith.constant 37 : index
    %178 = vector.load %arg5[%c0_111, %c37] : memref<4x49xf32, #tpu.memory_space<vmem>>, vector<4x1xf32>
    %179 = vector.broadcast %178 : vector<4x1xf32> to vector<4x256xf32>
    %180 = arith.mulf %177, %179 : vector<4x256xf32>
    %181 = arith.addf %176, %180 : vector<4x256xf32>
    %c0_112 = arith.constant 0 : index
    %c175 = arith.constant 175 : index
    %182 = vector.load %arg8[%c0_112, %c175] : memref<4x512xf32, #tpu.memory_space<vmem>>, vector<4x256xf32>
    %c0_113 = arith.constant 0 : index
    %c44 = arith.constant 44 : index
    %183 = vector.load %arg5[%c0_113, %c44] : memref<4x49xf32, #tpu.memory_space<vmem>>, vector<4x1xf32>
    %184 = vector.broadcast %183 : vector<4x1xf32> to vector<4x256xf32>
    %185 = arith.mulf %182, %184 : vector<4x256xf32>
    %186 = arith.addf %181, %185 : vector<4x256xf32>
    %c2_114 = arith.constant 2 : index
    %c0_115 = arith.constant 0 : index
    %187 = vector.load %arg4[%c2_114, %c0_115] : memref<7x256xf32, #tpu.memory_space<vmem>>, vector<1x256xf32>
    %188 = vector.broadcast %187 : vector<1x256xf32> to vector<4x256xf32>
    %189 = arith.mulf %186, %188 : vector<4x256xf32>
    %190 = arith.addf %150, %189 : vector<4x256xf32>
    %cst_116 = arith.constant 0.000000e+00 : f32
    %191 = vector.broadcast %cst_116 : f32 to vector<4x256xf32>
    %c0_117 = arith.constant 0 : index
    %c80 = arith.constant 80 : index
    %192 = vector.load %arg8[%c0_117, %c80] : memref<4x512xf32, #tpu.memory_space<vmem>>, vector<4x256xf32>
    %c0_118 = arith.constant 0 : index
    %c3_119 = arith.constant 3 : index
    %193 = vector.load %arg5[%c0_118, %c3_119] : memref<4x49xf32, #tpu.memory_space<vmem>>, vector<4x1xf32>
    %194 = vector.broadcast %193 : vector<4x1xf32> to vector<4x256xf32>
    %195 = arith.mulf %192, %194 : vector<4x256xf32>
    %196 = arith.addf %191, %195 : vector<4x256xf32>
    %c0_120 = arith.constant 0 : index
    %c96 = arith.constant 96 : index
    %197 = vector.load %arg8[%c0_120, %c96] : memref<4x512xf32, #tpu.memory_space<vmem>>, vector<4x256xf32>
    %c0_121 = arith.constant 0 : index
    %c10 = arith.constant 10 : index
    %198 = vector.load %arg5[%c0_121, %c10] : memref<4x49xf32, #tpu.memory_space<vmem>>, vector<4x1xf32>
    %199 = vector.broadcast %198 : vector<4x1xf32> to vector<4x256xf32>
    %200 = arith.mulf %197, %199 : vector<4x256xf32>
    %201 = arith.addf %196, %200 : vector<4x256xf32>
    %c0_122 = arith.constant 0 : index
    %c112 = arith.constant 112 : index
    %202 = vector.load %arg8[%c0_122, %c112] : memref<4x512xf32, #tpu.memory_space<vmem>>, vector<4x256xf32>
    %c0_123 = arith.constant 0 : index
    %c17 = arith.constant 17 : index
    %203 = vector.load %arg5[%c0_123, %c17] : memref<4x49xf32, #tpu.memory_space<vmem>>, vector<4x1xf32>
    %204 = vector.broadcast %203 : vector<4x1xf32> to vector<4x256xf32>
    %205 = arith.mulf %202, %204 : vector<4x256xf32>
    %206 = arith.addf %201, %205 : vector<4x256xf32>
    %c0_124 = arith.constant 0 : index
    %c128_125 = arith.constant 128 : index
    %207 = vector.load %arg8[%c0_124, %c128_125] : memref<4x512xf32, #tpu.memory_space<vmem>>, vector<4x256xf32>
    %c0_126 = arith.constant 0 : index
    %c24 = arith.constant 24 : index
    %208 = vector.load %arg5[%c0_126, %c24] : memref<4x49xf32, #tpu.memory_space<vmem>>, vector<4x1xf32>
    %209 = vector.broadcast %208 : vector<4x1xf32> to vector<4x256xf32>
    %210 = arith.mulf %207, %209 : vector<4x256xf32>
    %211 = arith.addf %206, %210 : vector<4x256xf32>
    %c0_127 = arith.constant 0 : index
    %c144 = arith.constant 144 : index
    %212 = vector.load %arg8[%c0_127, %c144] : memref<4x512xf32, #tpu.memory_space<vmem>>, vector<4x256xf32>
    %c0_128 = arith.constant 0 : index
    %c31 = arith.constant 31 : index
    %213 = vector.load %arg5[%c0_128, %c31] : memref<4x49xf32, #tpu.memory_space<vmem>>, vector<4x1xf32>
    %214 = vector.broadcast %213 : vector<4x1xf32> to vector<4x256xf32>
    %215 = arith.mulf %212, %214 : vector<4x256xf32>
    %216 = arith.addf %211, %215 : vector<4x256xf32>
    %c0_129 = arith.constant 0 : index
    %c160 = arith.constant 160 : index
    %217 = vector.load %arg8[%c0_129, %c160] : memref<4x512xf32, #tpu.memory_space<vmem>>, vector<4x256xf32>
    %c0_130 = arith.constant 0 : index
    %c38 = arith.constant 38 : index
    %218 = vector.load %arg5[%c0_130, %c38] : memref<4x49xf32, #tpu.memory_space<vmem>>, vector<4x1xf32>
    %219 = vector.broadcast %218 : vector<4x1xf32> to vector<4x256xf32>
    %220 = arith.mulf %217, %219 : vector<4x256xf32>
    %221 = arith.addf %216, %220 : vector<4x256xf32>
    %c0_131 = arith.constant 0 : index
    %c176 = arith.constant 176 : index
    %222 = vector.load %arg8[%c0_131, %c176] : memref<4x512xf32, #tpu.memory_space<vmem>>, vector<4x256xf32>
    %c0_132 = arith.constant 0 : index
    %c45 = arith.constant 45 : index
    %223 = vector.load %arg5[%c0_132, %c45] : memref<4x49xf32, #tpu.memory_space<vmem>>, vector<4x1xf32>
    %224 = vector.broadcast %223 : vector<4x1xf32> to vector<4x256xf32>
    %225 = arith.mulf %222, %224 : vector<4x256xf32>
    %226 = arith.addf %221, %225 : vector<4x256xf32>
    %c3_133 = arith.constant 3 : index
    %c0_134 = arith.constant 0 : index
    %227 = vector.load %arg4[%c3_133, %c0_134] : memref<7x256xf32, #tpu.memory_space<vmem>>, vector<1x256xf32>
    %228 = vector.broadcast %227 : vector<1x256xf32> to vector<4x256xf32>
    %229 = arith.mulf %226, %228 : vector<4x256xf32>
    %230 = arith.addf %190, %229 : vector<4x256xf32>
    %cst_135 = arith.constant 0.000000e+00 : f32
    %231 = vector.broadcast %cst_135 : f32 to vector<4x256xf32>
    %c0_136 = arith.constant 0 : index
    %c81 = arith.constant 81 : index
    %232 = vector.load %arg8[%c0_136, %c81] : memref<4x512xf32, #tpu.memory_space<vmem>>, vector<4x256xf32>
    %c0_137 = arith.constant 0 : index
    %c4 = arith.constant 4 : index
    %233 = vector.load %arg5[%c0_137, %c4] : memref<4x49xf32, #tpu.memory_space<vmem>>, vector<4x1xf32>
    %234 = vector.broadcast %233 : vector<4x1xf32> to vector<4x256xf32>
    %235 = arith.mulf %232, %234 : vector<4x256xf32>
    %236 = arith.addf %231, %235 : vector<4x256xf32>
    %c0_138 = arith.constant 0 : index
    %c97 = arith.constant 97 : index
    %237 = vector.load %arg8[%c0_138, %c97] : memref<4x512xf32, #tpu.memory_space<vmem>>, vector<4x256xf32>
    %c0_139 = arith.constant 0 : index
    %c11 = arith.constant 11 : index
    %238 = vector.load %arg5[%c0_139, %c11] : memref<4x49xf32, #tpu.memory_space<vmem>>, vector<4x1xf32>
    %239 = vector.broadcast %238 : vector<4x1xf32> to vector<4x256xf32>
    %240 = arith.mulf %237, %239 : vector<4x256xf32>
    %241 = arith.addf %236, %240 : vector<4x256xf32>
    %c0_140 = arith.constant 0 : index
    %c113 = arith.constant 113 : index
    %242 = vector.load %arg8[%c0_140, %c113] : memref<4x512xf32, #tpu.memory_space<vmem>>, vector<4x256xf32>
    %c0_141 = arith.constant 0 : index
    %c18 = arith.constant 18 : index
    %243 = vector.load %arg5[%c0_141, %c18] : memref<4x49xf32, #tpu.memory_space<vmem>>, vector<4x1xf32>
    %244 = vector.broadcast %243 : vector<4x1xf32> to vector<4x256xf32>
    %245 = arith.mulf %242, %244 : vector<4x256xf32>
    %246 = arith.addf %241, %245 : vector<4x256xf32>
    %c0_142 = arith.constant 0 : index
    %c129 = arith.constant 129 : index
    %247 = vector.load %arg8[%c0_142, %c129] : memref<4x512xf32, #tpu.memory_space<vmem>>, vector<4x256xf32>
    %c0_143 = arith.constant 0 : index
    %c25 = arith.constant 25 : index
    %248 = vector.load %arg5[%c0_143, %c25] : memref<4x49xf32, #tpu.memory_space<vmem>>, vector<4x1xf32>
    %249 = vector.broadcast %248 : vector<4x1xf32> to vector<4x256xf32>
    %250 = arith.mulf %247, %249 : vector<4x256xf32>
    %251 = arith.addf %246, %250 : vector<4x256xf32>
    %c0_144 = arith.constant 0 : index
    %c145 = arith.constant 145 : index
    %252 = vector.load %arg8[%c0_144, %c145] : memref<4x512xf32, #tpu.memory_space<vmem>>, vector<4x256xf32>
    %c0_145 = arith.constant 0 : index
    %c32 = arith.constant 32 : index
    %253 = vector.load %arg5[%c0_145, %c32] : memref<4x49xf32, #tpu.memory_space<vmem>>, vector<4x1xf32>
    %254 = vector.broadcast %253 : vector<4x1xf32> to vector<4x256xf32>
    %255 = arith.mulf %252, %254 : vector<4x256xf32>
    %256 = arith.addf %251, %255 : vector<4x256xf32>
    %c0_146 = arith.constant 0 : index
    %c161 = arith.constant 161 : index
    %257 = vector.load %arg8[%c0_146, %c161] : memref<4x512xf32, #tpu.memory_space<vmem>>, vector<4x256xf32>
    %c0_147 = arith.constant 0 : index
    %c39 = arith.constant 39 : index
    %258 = vector.load %arg5[%c0_147, %c39] : memref<4x49xf32, #tpu.memory_space<vmem>>, vector<4x1xf32>
    %259 = vector.broadcast %258 : vector<4x1xf32> to vector<4x256xf32>
    %260 = arith.mulf %257, %259 : vector<4x256xf32>
    %261 = arith.addf %256, %260 : vector<4x256xf32>
    %c0_148 = arith.constant 0 : index
    %c177 = arith.constant 177 : index
    %262 = vector.load %arg8[%c0_148, %c177] : memref<4x512xf32, #tpu.memory_space<vmem>>, vector<4x256xf32>
    %c0_149 = arith.constant 0 : index
    %c46 = arith.constant 46 : index
    %263 = vector.load %arg5[%c0_149, %c46] : memref<4x49xf32, #tpu.memory_space<vmem>>, vector<4x1xf32>
    %264 = vector.broadcast %263 : vector<4x1xf32> to vector<4x256xf32>
    %265 = arith.mulf %262, %264 : vector<4x256xf32>
    %266 = arith.addf %261, %265 : vector<4x256xf32>
    %c4_150 = arith.constant 4 : index
    %c0_151 = arith.constant 0 : index
    %267 = vector.load %arg4[%c4_150, %c0_151] : memref<7x256xf32, #tpu.memory_space<vmem>>, vector<1x256xf32>
    %268 = vector.broadcast %267 : vector<1x256xf32> to vector<4x256xf32>
    %269 = arith.mulf %266, %268 : vector<4x256xf32>
    %270 = arith.addf %230, %269 : vector<4x256xf32>
    %cst_152 = arith.constant 0.000000e+00 : f32
    %271 = vector.broadcast %cst_152 : f32 to vector<4x256xf32>
    %c0_153 = arith.constant 0 : index
    %c82 = arith.constant 82 : index
    %272 = vector.load %arg8[%c0_153, %c82] : memref<4x512xf32, #tpu.memory_space<vmem>>, vector<4x256xf32>
    %c0_154 = arith.constant 0 : index
    %c5 = arith.constant 5 : index
    %273 = vector.load %arg5[%c0_154, %c5] : memref<4x49xf32, #tpu.memory_space<vmem>>, vector<4x1xf32>
    %274 = vector.broadcast %273 : vector<4x1xf32> to vector<4x256xf32>
    %275 = arith.mulf %272, %274 : vector<4x256xf32>
    %276 = arith.addf %271, %275 : vector<4x256xf32>
    %c0_155 = arith.constant 0 : index
    %c98 = arith.constant 98 : index
    %277 = vector.load %arg8[%c0_155, %c98] : memref<4x512xf32, #tpu.memory_space<vmem>>, vector<4x256xf32>
    %c0_156 = arith.constant 0 : index
    %c12 = arith.constant 12 : index
    %278 = vector.load %arg5[%c0_156, %c12] : memref<4x49xf32, #tpu.memory_space<vmem>>, vector<4x1xf32>
    %279 = vector.broadcast %278 : vector<4x1xf32> to vector<4x256xf32>
    %280 = arith.mulf %277, %279 : vector<4x256xf32>
    %281 = arith.addf %276, %280 : vector<4x256xf32>
    %c0_157 = arith.constant 0 : index
    %c114 = arith.constant 114 : index
    %282 = vector.load %arg8[%c0_157, %c114] : memref<4x512xf32, #tpu.memory_space<vmem>>, vector<4x256xf32>
    %c0_158 = arith.constant 0 : index
    %c19 = arith.constant 19 : index
    %283 = vector.load %arg5[%c0_158, %c19] : memref<4x49xf32, #tpu.memory_space<vmem>>, vector<4x1xf32>
    %284 = vector.broadcast %283 : vector<4x1xf32> to vector<4x256xf32>
    %285 = arith.mulf %282, %284 : vector<4x256xf32>
    %286 = arith.addf %281, %285 : vector<4x256xf32>
    %c0_159 = arith.constant 0 : index
    %c130 = arith.constant 130 : index
    %287 = vector.load %arg8[%c0_159, %c130] : memref<4x512xf32, #tpu.memory_space<vmem>>, vector<4x256xf32>
    %c0_160 = arith.constant 0 : index
    %c26 = arith.constant 26 : index
    %288 = vector.load %arg5[%c0_160, %c26] : memref<4x49xf32, #tpu.memory_space<vmem>>, vector<4x1xf32>
    %289 = vector.broadcast %288 : vector<4x1xf32> to vector<4x256xf32>
    %290 = arith.mulf %287, %289 : vector<4x256xf32>
    %291 = arith.addf %286, %290 : vector<4x256xf32>
    %c0_161 = arith.constant 0 : index
    %c146 = arith.constant 146 : index
    %292 = vector.load %arg8[%c0_161, %c146] : memref<4x512xf32, #tpu.memory_space<vmem>>, vector<4x256xf32>
    %c0_162 = arith.constant 0 : index
    %c33 = arith.constant 33 : index
    %293 = vector.load %arg5[%c0_162, %c33] : memref<4x49xf32, #tpu.memory_space<vmem>>, vector<4x1xf32>
    %294 = vector.broadcast %293 : vector<4x1xf32> to vector<4x256xf32>
    %295 = arith.mulf %292, %294 : vector<4x256xf32>
    %296 = arith.addf %291, %295 : vector<4x256xf32>
    %c0_163 = arith.constant 0 : index
    %c162 = arith.constant 162 : index
    %297 = vector.load %arg8[%c0_163, %c162] : memref<4x512xf32, #tpu.memory_space<vmem>>, vector<4x256xf32>
    %c0_164 = arith.constant 0 : index
    %c40 = arith.constant 40 : index
    %298 = vector.load %arg5[%c0_164, %c40] : memref<4x49xf32, #tpu.memory_space<vmem>>, vector<4x1xf32>
    %299 = vector.broadcast %298 : vector<4x1xf32> to vector<4x256xf32>
    %300 = arith.mulf %297, %299 : vector<4x256xf32>
    %301 = arith.addf %296, %300 : vector<4x256xf32>
    %c0_165 = arith.constant 0 : index
    %c178 = arith.constant 178 : index
    %302 = vector.load %arg8[%c0_165, %c178] : memref<4x512xf32, #tpu.memory_space<vmem>>, vector<4x256xf32>
    %c0_166 = arith.constant 0 : index
    %c47 = arith.constant 47 : index
    %303 = vector.load %arg5[%c0_166, %c47] : memref<4x49xf32, #tpu.memory_space<vmem>>, vector<4x1xf32>
    %304 = vector.broadcast %303 : vector<4x1xf32> to vector<4x256xf32>
    %305 = arith.mulf %302, %304 : vector<4x256xf32>
    %306 = arith.addf %301, %305 : vector<4x256xf32>
    %c5_167 = arith.constant 5 : index
    %c0_168 = arith.constant 0 : index
    %307 = vector.load %arg4[%c5_167, %c0_168] : memref<7x256xf32, #tpu.memory_space<vmem>>, vector<1x256xf32>
    %308 = vector.broadcast %307 : vector<1x256xf32> to vector<4x256xf32>
    %309 = arith.mulf %306, %308 : vector<4x256xf32>
    %310 = arith.addf %270, %309 : vector<4x256xf32>
    %cst_169 = arith.constant 0.000000e+00 : f32
    %311 = vector.broadcast %cst_169 : f32 to vector<4x256xf32>
    %c0_170 = arith.constant 0 : index
    %c83 = arith.constant 83 : index
    %312 = vector.load %arg8[%c0_170, %c83] : memref<4x512xf32, #tpu.memory_space<vmem>>, vector<4x256xf32>
    %c0_171 = arith.constant 0 : index
    %c6 = arith.constant 6 : index
    %313 = vector.load %arg5[%c0_171, %c6] : memref<4x49xf32, #tpu.memory_space<vmem>>, vector<4x1xf32>
    %314 = vector.broadcast %313 : vector<4x1xf32> to vector<4x256xf32>
    %315 = arith.mulf %312, %314 : vector<4x256xf32>
    %316 = arith.addf %311, %315 : vector<4x256xf32>
    %c0_172 = arith.constant 0 : index
    %c99 = arith.constant 99 : index
    %317 = vector.load %arg8[%c0_172, %c99] : memref<4x512xf32, #tpu.memory_space<vmem>>, vector<4x256xf32>
    %c0_173 = arith.constant 0 : index
    %c13 = arith.constant 13 : index
    %318 = vector.load %arg5[%c0_173, %c13] : memref<4x49xf32, #tpu.memory_space<vmem>>, vector<4x1xf32>
    %319 = vector.broadcast %318 : vector<4x1xf32> to vector<4x256xf32>
    %320 = arith.mulf %317, %319 : vector<4x256xf32>
    %321 = arith.addf %316, %320 : vector<4x256xf32>
    %c0_174 = arith.constant 0 : index
    %c115 = arith.constant 115 : index
    %322 = vector.load %arg8[%c0_174, %c115] : memref<4x512xf32, #tpu.memory_space<vmem>>, vector<4x256xf32>
    %c0_175 = arith.constant 0 : index
    %c20 = arith.constant 20 : index
    %323 = vector.load %arg5[%c0_175, %c20] : memref<4x49xf32, #tpu.memory_space<vmem>>, vector<4x1xf32>
    %324 = vector.broadcast %323 : vector<4x1xf32> to vector<4x256xf32>
    %325 = arith.mulf %322, %324 : vector<4x256xf32>
    %326 = arith.addf %321, %325 : vector<4x256xf32>
    %c0_176 = arith.constant 0 : index
    %c131 = arith.constant 131 : index
    %327 = vector.load %arg8[%c0_176, %c131] : memref<4x512xf32, #tpu.memory_space<vmem>>, vector<4x256xf32>
    %c0_177 = arith.constant 0 : index
    %c27 = arith.constant 27 : index
    %328 = vector.load %arg5[%c0_177, %c27] : memref<4x49xf32, #tpu.memory_space<vmem>>, vector<4x1xf32>
    %329 = vector.broadcast %328 : vector<4x1xf32> to vector<4x256xf32>
    %330 = arith.mulf %327, %329 : vector<4x256xf32>
    %331 = arith.addf %326, %330 : vector<4x256xf32>
    %c0_178 = arith.constant 0 : index
    %c147 = arith.constant 147 : index
    %332 = vector.load %arg8[%c0_178, %c147] : memref<4x512xf32, #tpu.memory_space<vmem>>, vector<4x256xf32>
    %c0_179 = arith.constant 0 : index
    %c34 = arith.constant 34 : index
    %333 = vector.load %arg5[%c0_179, %c34] : memref<4x49xf32, #tpu.memory_space<vmem>>, vector<4x1xf32>
    %334 = vector.broadcast %333 : vector<4x1xf32> to vector<4x256xf32>
    %335 = arith.mulf %332, %334 : vector<4x256xf32>
    %336 = arith.addf %331, %335 : vector<4x256xf32>
    %c0_180 = arith.constant 0 : index
    %c163 = arith.constant 163 : index
    %337 = vector.load %arg8[%c0_180, %c163] : memref<4x512xf32, #tpu.memory_space<vmem>>, vector<4x256xf32>
    %c0_181 = arith.constant 0 : index
    %c41 = arith.constant 41 : index
    %338 = vector.load %arg5[%c0_181, %c41] : memref<4x49xf32, #tpu.memory_space<vmem>>, vector<4x1xf32>
    %339 = vector.broadcast %338 : vector<4x1xf32> to vector<4x256xf32>
    %340 = arith.mulf %337, %339 : vector<4x256xf32>
    %341 = arith.addf %336, %340 : vector<4x256xf32>
    %c0_182 = arith.constant 0 : index
    %c179 = arith.constant 179 : index
    %342 = vector.load %arg8[%c0_182, %c179] : memref<4x512xf32, #tpu.memory_space<vmem>>, vector<4x256xf32>
    %c0_183 = arith.constant 0 : index
    %c48 = arith.constant 48 : index
    %343 = vector.load %arg5[%c0_183, %c48] : memref<4x49xf32, #tpu.memory_space<vmem>>, vector<4x1xf32>
    %344 = vector.broadcast %343 : vector<4x1xf32> to vector<4x256xf32>
    %345 = arith.mulf %342, %344 : vector<4x256xf32>
    %346 = arith.addf %341, %345 : vector<4x256xf32>
    %c6_184 = arith.constant 6 : index
    %c0_185 = arith.constant 0 : index
    %347 = vector.load %arg4[%c6_184, %c0_185] : memref<7x256xf32, #tpu.memory_space<vmem>>, vector<1x256xf32>
    %348 = vector.broadcast %347 : vector<1x256xf32> to vector<4x256xf32>
    %349 = arith.mulf %346, %348 : vector<4x256xf32>
    %350 = arith.addf %310, %349 : vector<4x256xf32>
    %351 = vector.extract_strided_slice %350 {offsets = [0, 0], sizes = [1, 256], strides = [1, 1]} : vector<4x256xf32> to vector<1x256xf32>
    %352 = vector.extract_strided_slice %350 {offsets = [1, 0], sizes = [1, 256], strides = [1, 1]} : vector<4x256xf32> to vector<1x256xf32>
    %353 = arith.addf %351, %352 : vector<1x256xf32>
    %cst_186 = arith.constant 5.000000e-01 : f32
    %354 = vector.broadcast %cst_186 : f32 to vector<1x256xf32>
    %355 = arith.mulf %354, %353 : vector<1x256xf32>
    %356 = math.tanh %355 : vector<1x256xf32>
    %cst_187 = arith.constant 1.000000e+00 : f32
    %357 = vector.broadcast %cst_187 : f32 to vector<1x256xf32>
    %358 = arith.addf %356, %357 : vector<1x256xf32>
    %cst_188 = arith.constant 5.000000e-01 : f32
    %359 = vector.broadcast %cst_188 : f32 to vector<1x256xf32>
    %360 = arith.mulf %359, %358 : vector<1x256xf32>
    %c0_189 = arith.constant 0 : index
    %c0_190 = arith.constant 0 : index
    %c0_191 = arith.constant 0 : index
    %361 = vector.load %arg7[%c0_189, %c0_190, %c0_191] : memref<2x64x256xf32, #tpu.memory_space<vmem>>, vector<1x64x256xf32>
    %362 = vector.shape_cast %361 : vector<1x64x256xf32> to vector<64x256xf32>
    %363 = vector.broadcast %360 : vector<1x256xf32> to vector<64x256xf32>
    %364 = arith.mulf %362, %363 : vector<64x256xf32>
    %c0_192 = arith.constant 0 : index
    %c0_193 = arith.constant 0 : index
    %c0_194 = arith.constant 0 : index
    %365 = vector.load %arg6[%c0_192, %c0_193, %c0_194] : memref<2x64x256xf32, #tpu.memory_space<vmem>>, vector<1x64x256xf32>
    %366 = vector.shape_cast %365 : vector<1x64x256xf32> to vector<64x256xf32>
    %367 = vector.shape_cast %364 : vector<64x256xf32> to vector<1x64x256xf32>
    tpu.vector_store %arg6[%c0_192, %c0_193, %c0_194], %367 {strides = array<i32>} : memref<2x64x256xf32, #tpu.memory_space<vmem>>, vector<1x64x256xf32>,
    %368 = vector.extract_strided_slice %350 {offsets = [2, 0], sizes = [1, 256], strides = [1, 1]} : vector<4x256xf32> to vector<1x256xf32>
    %369 = vector.extract_strided_slice %350 {offsets = [3, 0], sizes = [1, 256], strides = [1, 1]} : vector<4x256xf32> to vector<1x256xf32>
    %370 = arith.addf %368, %369 : vector<1x256xf32>
    %cst_195 = arith.constant 5.000000e-01 : f32
    %371 = vector.broadcast %cst_195 : f32 to vector<1x256xf32>
    %372 = arith.mulf %371, %370 : vector<1x256xf32>
    %373 = math.tanh %372 : vector<1x256xf32>
    %cst_196 = arith.constant 1.000000e+00 : f32
    %374 = vector.broadcast %cst_196 : f32 to vector<1x256xf32>
    %375 = arith.addf %373, %374 : vector<1x256xf32>
    %cst_197 = arith.constant 5.000000e-01 : f32
    %376 = vector.broadcast %cst_197 : f32 to vector<1x256xf32>
    %377 = arith.mulf %376, %375 : vector<1x256xf32>
    %c1_198 = arith.constant 1 : index
    %c0_199 = arith.constant 0 : index
    %c0_200 = arith.constant 0 : index
    %378 = vector.load %arg7[%c1_198, %c0_199, %c0_200] : memref<2x64x256xf32, #tpu.memory_space<vmem>>, vector<1x64x256xf32>
    %379 = vector.shape_cast %378 : vector<1x64x256xf32> to vector<64x256xf32>
    %380 = vector.broadcast %377 : vector<1x256xf32> to vector<64x256xf32>
    %381 = arith.mulf %379, %380 : vector<64x256xf32>
    %c1_201 = arith.constant 1 : index
    %c0_202 = arith.constant 0 : index
    %c0_203 = arith.constant 0 : index
    %382 = vector.load %arg6[%c1_201, %c0_202, %c0_203] : memref<2x64x256xf32, #tpu.memory_space<vmem>>, vector<1x64x256xf32>
    %383 = vector.shape_cast %382 : vector<1x64x256xf32> to vector<64x256xf32>
    %384 = vector.shape_cast %381 : vector<64x256xf32> to vector<1x64x256xf32>
    tpu.vector_store %arg6[%c1_201, %c0_202, %c0_203], %384 {strides = array<i32>} : memref<2x64x256xf32, #tpu.memory_space<vmem>>, vector<1x64x256xf32>,
    return
  }
  func.func @transform_0(%arg0: i32) -> (i32, i32, i32) {
    %c0_i32 = arith.constant 0 : i32
    %c0_i32_0 = arith.constant 0 : i32
    %c0_i32_1 = arith.constant 0 : i32
    return %arg0, %c0_i32, %c0_i32_0 : i32, i32, i32
  }
  func.func @transform_1(%arg0: i32) -> (i32, i32) {
    %c0_i32 = arith.constant 0 : i32
    %c0_i32_0 = arith.constant 0 : i32
    %c0_i32_1 = arith.constant 0 : i32
    return %c0_i32, %c0_i32_0 : i32, i32
  }
  func.func @transform_2(%arg0: i32) -> (i32, i32) {
    %c0_i32 = arith.constant 0 : i32
    %c0_i32_0 = arith.constant 0 : i32
    %c0_i32_1 = arith.constant 0 : i32
    return %c0_i32, %c0_i32_0 : i32, i32
  }
  func.func @transform_3(%arg0: i32) -> (i32, i32) {
    %c0_i32 = arith.constant 0 : i32
    %c0_i32_0 = arith.constant 0 : i32
    %c0_i32_1 = arith.constant 0 : i32
    return %c0_i32, %c0_i32_0 : i32, i32
  }
  func.func @transform_4(%arg0: i32) -> (i32, i32) {
    %c0_i32 = arith.constant 0 : i32
    %c0_i32_0 = arith.constant 0 : i32
    %c0_i32_1 = arith.constant 0 : i32
    return %c0_i32, %c0_i32_0 : i32, i32
  }
  func.func @transform_5(%arg0: i32) -> (i32, i32, i32) {
    %c0_i32 = arith.constant 0 : i32
    %c0_i32_0 = arith.constant 0 : i32
    %c0_i32_1 = arith.constant 0 : i32
    return %arg0, %c0_i32, %c0_i32_0 : i32, i32, i32
  }
}

</mosaic_0001>

<llo_original>
// kernel: tpu_custom_call.1
$region0: #{tpu_custom_call.1}
  #allocation0 [shape = 'u32[]', space=smem, size = 0x4, offset = 0x4, fixed_abs, tag = 'smem constant byte address 0x4 - core index']
  #allocation1 [shape = 'u32[144,128]{1,0:T(1,128)}', space=vmem, size = 0x12000, scoped, tag = 'internal scratch']
  #allocation2 [shape = 'f32[2,64,256]{2,1,0:T(8,128)}', space=vmem, size = 0x20000, scoped, tag = 'scratch operand']
  #allocation3 [shape = 'f32[4,512]{1,0:T(4,128)}', space=vmem, size = 0x2000, scoped, tag = 'scratch operand']
  %s0 = inlined_call_operand.hbm [shape: f32[4,64,256], index: 0, kind: input, shape index: {}]
  %s1 = inlined_call_operand.vmem [shape: f32[64,64], index: 1, kind: input, shape index: {}]
  %s2 = inlined_call_operand.vmem [shape: f32[64,1], index: 2, kind: input, shape index: {}]
  %s3 = inlined_call_operand.hbm [shape: f32[7,256], index: 3, kind: input, shape index: {}]
  %s4 = inlined_call_operand.vmem [shape: f32[4,49], index: 4, kind: input, shape index: {}]
  %s5 = inlined_call_operand.hbm [shape: f32[4,64,256], index: 5, kind: output, shape index: {}]
  %s6 = sld [smem:[#allocation0]]
  $region61: #{tpu_custom_call.1} parent=0
    _
  %s8 = ssub.s32 1, %s6
  %s9 = scalar_select 0, %s8, %s6
  $region1: #{tpu_custom_call.1} parent=0
    #allocation4 [shape = 'u8[262144]{0}', space=vmem, size = 0x40000, scoped, tag = 'input window, operand 0']
    #allocation5 [shape = 's32[2]{0}', space=sflag, size = 0x8, scoped, tag = 'scoped memory for tpu_custom_call.1']
    #allocation6 [shape = 's32[2]{0}', space=sflag, size = 0x8, scoped, tag = 'scoped memory for tpu_custom_call.1']
    #allocation7 [shape = 'u8[8192]{0}', space=vmem, size = 0x2000, scoped, tag = 'input window, operand 3, single buffered']
    #allocation8 [shape = 's32[1]{0}', space=sflag, size = 0x4, scoped, tag = 'scoped memory for tpu_custom_call.1']
    #allocation9 [shape = 'u8[262144]{0}', space=vmem, size = 0x40000, scoped, tag = 'output window, operand 0']
    %10 = vsyncpa [#allocation5], 0
    %s11 = scalar_lea.sflag [#allocation5], 1
    %12 = vsyncpa %s11, 0
    %13 = vsyncpa [#allocation8], 0
    %14 = vsyncpa [#allocation6], 0
    %s15 = scalar_lea.sflag [#allocation6], 1
    %16 = vsyncpa %s15, 0
    loop: start=0, step=1, limit=4
    $region2: #{tpu_custom_call.1} parent=1 // loop_pre_header
      _
    $region3: #{tpu_custom_call.1} parent=1 // loop_header
      %s18 = sphi 0, %s22
      %p19 = scmp.ge.s32.totalorder %s18, 4
      %s28 = sphi 0, %s30
      %s31 = sphi 0, %s28
      %s32 = sphi 0, %s31
      %s48 = sphi 0, %s32
      %s52 = sphi 0, %s52
      %s54 = sphi 0, %s52
      %s55 = sphi 0, %s54
      %s69 = sphi 0, %s55
      %s73 = sphi 0, %s73
      %s75 = sphi 0, %s73
      %s76 = sphi 0, %s75
      %s90 = sphi 0, %s76
      %s94 = sphi 0, %s94
      %s96 = sphi 0, %s94
      %s97 = sphi 0, %s96
      %s111 = sphi 0, %s97
      %s115 = sphi 0, %s115
      %s117 = sphi 0, %s115
      %s118 = sphi 0, %s117
      %s132 = sphi 0, %s118
      %s138 = sphi 0, %s140
      %s141 = sphi 0, %s138
      %s142 = sphi 0, %s141
      %s158 = sphi 0, %s142
    $region4: #{tpu_custom_call.1} parent=1 // loop_header_branch
      %21 = sbr.rel (%p19) target = $region8
    $region5: #{tpu_custom_call.1} parent=1 // loop_body
      %s23 = ssub.s32 %s18, 1
      %s24 = ssub.s32 %s18, 2
      %s25 = sadd.s32 %s18, 1
      %s26 = ssub.s32 %s18, %s25
      %p27 = scmp.eq.s32.totalorder %s26, 0
      %s29 = sadd.s32 %s28, 1
      %s30 = scalar_select %p27, %s28, %s29
      %p33 = pneg %p27
      %p34 = scmp.eq.s32.totalorder %s18, 1
      %p35 = por %p33, %p34
      %p36 = scmp.ne.s32.totalorder %s28, %s31
      %p37 = scmp.eq.s32.totalorder %s18, 0
      %p38 = por %p36, %p37
      %p39 = scmp.ne.s32.totalorder %s28, %s31
      %p40 = scmp.eq.s32.totalorder %s23, 1
      %p41 = por %p39, %p40
      %p42 = scmp.ne.s32.totalorder %s31, %s32
      %p43 = scmp.eq.s32.totalorder %s23, 0
      %p44 = por %p42, %p43
      %p45 = scmp.ne.s32.totalorder %s31, %s32
      %p46 = scmp.eq.s32.totalorder %s24, 1
      %p47 = por %p45, %p46
      %p49 = scmp.ne.s32.totalorder %s32, %s48
      %p50 = scmp.eq.s32.totalorder %s24, 0
      %p51 = por %p49, %p50
      %s53 = sadd.s32 %s52, 1
      %p56 = scmp.eq.s32.totalorder %s18, 1
      %p57 = scmp.ne.s32.totalorder %s52, %s54
      %p58 = scmp.eq.s32.totalorder %s18, 0
      %p59 = por %p57, %p58
      %p60 = scmp.ne.s32.totalorder %s52, %s54
      %p61 = scmp.eq.s32.totalorder %s23, 1
      %p62 = por %p60, %p61
      %p63 = scmp.ne.s32.totalorder %s54, %s55
      %p64 = scmp.eq.s32.totalorder %s23, 0
      %p65 = por %p63, %p64
      %p66 = scmp.ne.s32.totalorder %s54, %s55
      %p67 = scmp.eq.s32.totalorder %s24, 1
      %p68 = por %p66, %p67
      %p70 = scmp.ne.s32.totalorder %s55, %s69
      %p71 = scmp.eq.s32.totalorder %s24, 0
      %p72 = por %p70, %p71
      %s74 = sadd.s32 %s73, 1
      %p77 = scmp.eq.s32.totalorder %s18, 1
      %p78 = scmp.ne.s32.totalorder %s73, %s75
      %p79 = scmp.eq.s32.totalorder %s18, 0
      %p80 = por %p78, %p79
      %p81 = scmp.ne.s32.totalorder %s73, %s75
      %p82 = scmp.eq.s32.totalorder %s23, 1
      %p83 = por %p81, %p82
      %p84 = scmp.ne.s32.totalorder %s75, %s76
      %p85 = scmp.eq.s32.totalorder %s23, 0
      %p86 = por %p84, %p85
      %p87 = scmp.ne.s32.totalorder %s75, %s76
      %p88 = scmp.eq.s32.totalorder %s24, 1
      %p89 = por %p87, %p88
      %p91 = scmp.ne.s32.totalorder %s76, %s90
      %p92 = scmp.eq.s32.totalorder %s24, 0
      %p93 = por %p91, %p92
      %s95 = sadd.s32 %s94, 1
      %p98 = scmp.eq.s32.totalorder %s18, 1
      %p99 = scmp.ne.s32.totalorder %s94, %s96
      %p100 = scmp.eq.s32.totalorder %s18, 0
      %p101 = por %p99, %p100
      %p102 = scmp.ne.s32.totalorder %s94, %s96
      %p103 = scmp.eq.s32.totalorder %s23, 1
      %p104 = por %p102, %p103
      %p105 = scmp.ne.s32.totalorder %s96, %s97
      %p106 = scmp.eq.s32.totalorder %s23, 0
      %p107 = por %p105, %p106
      %p108 = scmp.ne.s32.totalorder %s96, %s97
      %p109 = scmp.eq.s32.totalorder %s24, 1
      %p110 = por %p108, %p109
      %p112 = scmp.ne.s32.totalorder %s97, %s111
      %p113 = scmp.eq.s32.totalorder %s24, 0
      %p114 = por %p112, %p113
      %s116 = sadd.s32 %s115, 1
      %p119 = scmp.eq.s32.totalorder %s18, 1
      %p120 = scmp.ne.s32.totalorder %s115, %s117
      %p121 = scmp.eq.s32.totalorder %s18, 0
      %p122 = por %p120, %p121
      %p123 = scmp.ne.s32.totalorder %s115, %s117
      %p124 = scmp.eq.s32.totalorder %s23, 1
      %p125 = por %p123, %p124
      %p126 = scmp.ne.s32.totalorder %s117, %s118
      %p127 = scmp.eq.s32.totalorder %s23, 0
      %p128 = por %p126, %p127
      %p129 = scmp.ne.s32.totalorder %s117, %s118
      %p130 = scmp.eq.s32.totalorder %s24, 1
      %p131 = por %p129, %p130
      %p133 = scmp.ne.s32.totalorder %s118, %s132
      %p134 = scmp.eq.s32.totalorder %s24, 0
      %p135 = por %p133, %p134
      %s136 = ssub.s32 %s18, %s25
      %p137 = scmp.eq.s32.totalorder %s136, 0
      %s139 = sadd.s32 %s138, 1
      %s140 = scalar_select %p137, %s138, %s139
      %p143 = pneg %p137
      %p144 = scmp.eq.s32.totalorder %s18, 1
      %p145 = por %p143, %p144
      %p146 = scmp.ne.s32.totalorder %s138, %s141
      %p147 = scmp.eq.s32.totalorder %s18, 0
      %p148 = por %p146, %p147
      %p149 = scmp.ne.s32.totalorder %s138, %s141
      %p150 = scmp.eq.s32.totalorder %s23, 1
      %p151 = por %p149, %p150
      %p152 = scmp.ne.s32.totalorder %s141, %s142
      %p153 = scmp.eq.s32.totalorder %s23, 0
      %p154 = por %p152, %p153
      %p155 = scmp.ne.s32.totalorder %s141, %s142
      %p156 = scmp.eq.s32.totalorder %s24, 1
      %p157 = por %p155, %p156
      %p159 = scmp.ne.s32.totalorder %s142, %s158
      %p160 = scmp.eq.s32.totalorder %s24, 0
      %p161 = por %p159, %p160
      %p162 = scmp.le.s32.totalorder 1, %s18
      %p163 = scmp.lt.s32.totalorder %s18, 3
      %p164 = pnand %p162, %p163
      %p165 = pneg %p164
      // Predicated region
      $region9: #{tpu_custom_call.1} parent=5 // pred_check
        _
      $region10: #{tpu_custom_call.1} parent=5 // pred_check_branch
        %167 = sbr.rel (%p164) target = $region12
      $region11: #{tpu_custom_call.1} parent=5 // pred_region
        %s168 = ssub.s32 %s18, 1
        // Predicated region
        $region13: #{tpu_custom_call.1} parent=11 // pred_check
          %p169 = pneg %p65
        $region14: #{tpu_custom_call.1} parent=11 // pred_check_branch
          %171 = sbr.rel (%p169) target = $region16
        $region15: #{tpu_custom_call.1} parent=11 // pred_region
          _
        $region16: #{tpu_custom_call.1} parent=11 // pred_fallthru
          _
        // Predicated region
        $region17: #{tpu_custom_call.1} parent=11 // pred_check
          %p172 = pneg %p86
        $region18: #{tpu_custom_call.1} parent=11 // pred_check_branch
          %174 = sbr.rel (%p172) target = $region20
        $region19: #{tpu_custom_call.1} parent=11 // pred_region
          _
        $region20: #{tpu_custom_call.1} parent=11 // pred_fallthru
          _
        // Predicated region
        $region21: #{tpu_custom_call.1} parent=11 // pred_check
          %p175 = pneg %p107
        $region22: #{tpu_custom_call.1} parent=11 // pred_check_branch
          %177 = sbr.rel (%p175) target = $region24
        $region23: #{tpu_custom_call.1} parent=11 // pred_region
          %s179 = ssub.s32 256, 256
          %180 = vsyncadd [#allocation8], %s179
          %s182 = sshll.u32 [#allocation7], 4
          %s183 = int_to_ptr.vmem [resolvable:$true] %s182
          %185 = dma.hbm_to_vmem [thread:$0]  %s3, 256, %s183, [#allocation8]
        $region24: #{tpu_custom_call.1} parent=11 // pred_fallthru
          _
        // Predicated region
        $region25: #{tpu_custom_call.1} parent=11 // pred_check
          %p186 = pneg %p128
        $region26: #{tpu_custom_call.1} parent=11 // pred_check_branch
          %188 = sbr.rel (%p186) target = $region28
        $region27: #{tpu_custom_call.1} parent=11 // pred_region
          _
        $region28: #{tpu_custom_call.1} parent=11 // pred_fallthru
          _
      $region12: #{tpu_custom_call.1} parent=5 // pred_fallthru
        _
      %p189 = scmp.lt.s32.totalorder %s18, 2
      // Predicated region
      $region29: #{tpu_custom_call.1} parent=5 // pred_check
        %p190 = pneg %p189
      $region30: #{tpu_custom_call.1} parent=5 // pred_check_branch
        %192 = sbr.rel (%p190) target = $region32
      $region31: #{tpu_custom_call.1} parent=5 // pred_region
        // Predicated region
        $region33: #{tpu_custom_call.1} parent=31 // pred_check
          %p193 = pneg %p38
        $region34: #{tpu_custom_call.1} parent=31 // pred_check_branch
          %195 = sbr.rel (%p193) target = $region36
        $region35: #{tpu_custom_call.1} parent=31 // pred_region
          %s196 = sand.u32 %s28, 1
          %s197 = scalar_lea.sflag [#allocation5], %s196
          %s198 = sand.u32 %s28, 1
          %s199 = smul.addr %s198, 256
          %s200 = scalar_lea.vmem [#allocation4], %s199
          %s201 = smul.u32 2, %s18
          %s203 = ssub.s32 4096, 4096
          %204 = vsyncadd %s197, %s203
          %s205 = smul.addr %s201, 16
          %s206 = smul.addr %s205, 128
          %s207 = scalar_lea.hbm %s0, %s206
          %s208 = sshll.u32 %s200, 4
          %s209 = int_to_ptr.vmem [resolvable:$true] %s208
          %214 = dma.hbm_to_vmem [thread:$0]  %s207, 4096, %s209, %s197, 256, 256, 16
        $region36: #{tpu_custom_call.1} parent=31 // pred_fallthru
          _
      $region32: #{tpu_custom_call.1} parent=5 // pred_fallthru
        _
      %p215 = scmp.le.s32.totalorder 1, %s18
      %p216 = scmp.lt.s32.totalorder %s18, 3
      %p217 = pnand %p215, %p216
      %p218 = pneg %p217
      // Predicated region
      $region37: #{tpu_custom_call.1} parent=5 // pred_check
        _
      $region38: #{tpu_custom_call.1} parent=5 // pred_check_branch
        %220 = sbr.rel (%p217) target = $region40
      $region39: #{tpu_custom_call.1} parent=5 // pred_region
        %s221 = ssub.s32 %s18, 1
        %s222 = sand.u32 %s31, 1
        %s223 = scalar_lea.sflag [#allocation5], %s222
        %s224 = sand.u32 %s31, 1
        %s225 = smul.addr %s224, 256
        %s226 = scalar_lea.vmem [#allocation4], %s225
        // Predicated region
        $region41: #{tpu_custom_call.1} parent=39 // pred_check
          %p227 = pneg %p44
        $region42: #{tpu_custom_call.1} parent=39 // pred_check_branch
          %229 = sbr.rel (%p227) target = $region44
        $region43: #{tpu_custom_call.1} parent=39 // pred_region
          %230 = dma.done %s223, 4096
        $region44: #{tpu_custom_call.1} parent=39 // pred_fallthru
          _
        // Predicated region
        $region45: #{tpu_custom_call.1} parent=39 // pred_check
          %p231 = pneg %p107
        $region46: #{tpu_custom_call.1} parent=39 // pred_check_branch
          %233 = sbr.rel (%p231) target = $region48
        $region47: #{tpu_custom_call.1} parent=39 // pred_region
          %234 = dma.done [#allocation8], 256
        $region48: #{tpu_custom_call.1} parent=39 // pred_fallthru
          _
        %s235 = sand.u32 %s31, 1
        %s236 = scalar_lea.sflag [#allocation5], %s235
        %s237 = sand.u32 %s31, 1
        %s238 = smul.addr %s237, 256
        %s239 = scalar_lea.vmem [#allocation4], %s238
        %p240 = pneg %p44
        %p241 = pneg %p41
        %p242 = pneg %p65
        %p243 = pneg %p62
        %p244 = pneg %p86
        %p245 = pneg %p83
        %p246 = pneg %p107
        %p247 = pneg %p104
        %p248 = pneg %p128
        %p249 = pneg %p125
        %p250 = pneg %p154
        %p251 = pneg %p151
        %s252 = sand.u32 %s141, 1
        %s253 = scalar_lea.sflag [#allocation6], %s252
        %s254 = sand.u32 %s141, 1
        %s255 = smul.addr %s254, 256
        %s256 = scalar_lea.vmem [#allocation9], %s255
        %s257 = smul.u32 2, %s23
        %s258 = smul.u32 2, %s23
        %v259 = vld [vmem:[%s226] sm:$0xff]
        %v260 = vld [vmem:[%s226 + $0x8] sm:$0xff]
        %v261 = vld [vmem:[%s226 + $0x10] sm:$0xff]
        %v262 = vld [vmem:[%s226 + $0x18] sm:$0xff]
        %v263 = vld [vmem:[%s226 + $0x20] sm:$0xff]
        %v264 = vld [vmem:[%s226 + $0x28] sm:$0xff]
        %v265 = vld [vmem:[%s226 + $0x30] sm:$0xff]
        %v266 = vld [vmem:[%s226 + $0x38] sm:$0xff]
        %v267 = vld [vmem:[%s226 + $0x40] sm:$0xff]
        %v268 = vld [vmem:[%s226 + $0x48] sm:$0xff]
        %v269 = vld [vmem:[%s226 + $0x50] sm:$0xff]
        %v270 = vld [vmem:[%s226 + $0x58] sm:$0xff]
        %v271 = vld [vmem:[%s226 + $0x60] sm:$0xff]
        %v272 = vld [vmem:[%s226 + $0x68] sm:$0xff]
        %v273 = vld [vmem:[%s226 + $0x70] sm:$0xff]
        %v274 = vld [vmem:[%s226 + $0x78] sm:$0xff]
        %v275 = vadd.f32 %v259, %v260
        %276 = vadd.xlane.f32.xlu0 %v275
        %v277 = vpop.xlane.xlu0 %276
        %v278 = vadd.f32 %v261, %v262
        %279 = vadd.xlane.f32.xlu0 %v278
        %v280 = vpop.xlane.xlu0 %279
        %v281 = vadd.f32 %v263, %v264
        %282 = vadd.xlane.f32.xlu0 %v281
        %v283 = vpop.xlane.xlu0 %282
        %v284 = vadd.f32 %v265, %v266
        %285 = vadd.xlane.f32.xlu0 %v284
        %v286 = vpop.xlane.xlu0 %285
        %v287 = vadd.f32 %v267, %v268
        %288 = vadd.xlane.f32.xlu0 %v287
        %v289 = vpop.xlane.xlu0 %288
        %v290 = vadd.f32 %v269, %v270
        %291 = vadd.xlane.f32.xlu0 %v290
        %v292 = vpop.xlane.xlu0 %291
        %v293 = vadd.f32 %v271, %v272
        %294 = vadd.xlane.f32.xlu0 %v293
        %v295 = vpop.xlane.xlu0 %294
        %v296 = vadd.f32 %v273, %v274
        %297 = vadd.xlane.f32.xlu0 %v296
        %v298 = vpop.xlane.xlu0 %297
        %v299 = vmul.f32 %v277, 0.00390625
        %v300 = vmul.f32 %v280, 0.00390625
        %v301 = vmul.f32 %v283, 0.00390625
        %v302 = vmul.f32 %v286, 0.00390625
        %v303 = vmul.f32 %v289, 0.00390625
        %v304 = vmul.f32 %v292, 0.00390625
        %v305 = vmul.f32 %v295, 0.00390625
        %v306 = vmul.f32 %v298, 0.00390625
        %v307 = vld [vmem:[%s1] sm:$0xff]
        %v308 = vld [vmem:[%s1 + $0x8] sm:$0xff]
        %v309 = vld [vmem:[%s1 + $0x10] sm:$0xff]
        %v310 = vld [vmem:[%s1 + $0x18] sm:$0xff]
        %v311 = vld [vmem:[%s1 + $0x20] sm:$0xff]
        %v312 = vld [vmem:[%s1 + $0x28] sm:$0xff]
        %v313 = vld [vmem:[%s1 + $0x30] sm:$0xff]
        %v314 = vld [vmem:[%s1 + $0x38] sm:$0xff]
        %v315 = vld [vmem:[%s2] sm:$0xff]
        %v316 = vld [vmem:[%s2 + $0x8] sm:$0xff]
        %v317 = vld [vmem:[%s2 + $0x10] sm:$0xff]
        %v318 = vld [vmem:[%s2 + $0x18] sm:$0xff]
        %v319 = vld [vmem:[%s2 + $0x20] sm:$0xff]
        %v320 = vld [vmem:[%s2 + $0x28] sm:$0xff]
        %v321 = vld [vmem:[%s2 + $0x30] sm:$0xff]
        %v322 = vld [vmem:[%s2 + $0x38] sm:$0xff]
        %vm323 = vcmask 523264
        %v325 = vsel %vm323, %v307, 0
        %v328 = vsel %vm323, %v308, 0
        %v331 = vsel %vm323, %v309, 0
        %v334 = vsel %vm323, %v310, 0
        %v337 = vsel %vm323, %v311, 0
        %v340 = vsel %vm323, %v312, 0
        %v343 = vsel %vm323, %v313, 0
        %v346 = vsel %vm323, %v314, 0
        %348 = vmatprep.subr.mxu0 0.0
        %349 = vmatpush1.msra.mxu0 %v299
        %350 = vmatprep.subr.mxu0 0.0
        %351 = vmatpush1.msra.mxu0 %v300
        %352 = vmatprep.subr.mxu0 0.0
        %353 = vmatpush1.msra.mxu0 %v301
        %354 = vmatprep.subr.mxu0 0.0
        %355 = vmatpush1.msra.mxu0 %v302
        %356 = vmatprep.subr.mxu0 0.0
        %357 = vmatpush1.msra.mxu0 %v303
        %358 = vmatprep.subr.mxu0 0.0
        %359 = vmatpush1.msra.mxu0 %v304
        %360 = vmatprep.subr.mxu0 0.0
        %361 = vmatpush1.msra.mxu0 %v305
        %362 = vmatprep.subr.mxu0 0.0
        %363 = vmatpush1.msra.mxu0 %v306
        %364 = vmatprep.subr.mxu0 0.0
        %365 = vmatpush1.msra.mxu0 0.0
        %366 = vmatprep.subr.mxu0 0.0
        %367 = vmatpush1.msra.mxu0 0.0
        %368 = vmatprep.subr.mxu0 0.0
        %369 = vmatpush1.msra.mxu0 0.0
        %370 = vmatprep.subr.mxu0 0.0
        %371 = vmatpush1.msra.mxu0 0.0
        %372 = vmatprep.subr.mxu0 0.0
        %373 = vmatpush1.msra.mxu0 0.0
        %374 = vmatprep.subr.mxu0 0.0
        %375 = vmatpush1.msra.mxu0 0.0
        %376 = vmatprep.subr.mxu0 0.0
        %377 = vmatpush1.msra.mxu0 0.0
        %378 = vmatprep.subr.mxu0 0.0
        %379 = vmatpush1.msra.mxu0 0.0
        %380 = vmatprep.subr.mxu0 0.0
        %381 = vmatpush1.msra.mxu0 0.0
        %382 = vmatprep.subr.mxu0 0.0
        %383 = vmatpush1.msra.mxu0 0.0
        %384 = vmatprep.subr.mxu0 0.0
        %385 = vmatpush1.msra.mxu0 0.0
        %386 = vmatprep.subr.mxu0 0.0
        %387 = vmatpush1.msra.mxu0 0.0
        %388 = vmatprep.subr.mxu0 0.0
        %389 = vmatpush1.msra.mxu0 0.0
        %390 = vmatprep.subr.mxu0 0.0
        %391 = vmatpush1.msra.mxu0 0.0
        %392 = vmatprep.subr.mxu0 0.0
        %393 = vmatpush1.msra.mxu0 0.0
        %394 = vmatprep.subr.mxu0 0.0
        %395 = vmatpush1.msra.mxu0 0.0
        %396 = vmatprep.subr.mxu0 0.0
        %397 = vmatpush1.msra.mxu0 0.0
        %398 = vmatprep.subr.mxu0 0.0
        %399 = vmatpush1.msra.mxu0 0.0
        %400 = vmatprep.subr.mxu0 0.0
        %401 = vmatpush1.msra.mxu0 0.0
        %402 = vmatprep.subr.mxu0 0.0
        %403 = vmatpush1.msra.mxu0 0.0
        %404 = vmatprep.subr.mxu0 0.0
        %405 = vmatpush1.msra.mxu0 0.0
        %406 = vmatprep.subr.mxu0 0.0
        %407 = vmatpush1.msra.mxu0 0.0
        %408 = vmatprep.subr.mxu0 0.0
        %409 = vmatpush1.msra.mxu0 0.0
        %410 = vmatprep.subr.mxu0 0.0
        %411 = vmatpush1.msra.mxu0 0.0
        %412 = vmatprep.mubr.f32.mxu0 0.0
        %413 = vmatmul.mubr.f32.gmra.mrb[0].mxu0 %v325
        %v414 = vpop.f32.mrb[0].mxu0
        %v415 = vadd.f32 %v315, %v414
        %v416 = vpop.f32.mrb[0].mxu0
        %417 = vmatprep.mubr.f32.mxu0 0.0
        %418 = vmatmul.mubr.f32.gmra.mrb[0].mxu0 %v328
        %v419 = vpop.f32.mrb[0].mxu0
        %v420 = vadd.f32 %v316, %v419
        %v421 = vpop.f32.mrb[0].mxu0
        %422 = vmatprep.mubr.f32.mxu0 0.0
        %423 = vmatmul.mubr.f32.gmra.mrb[0].mxu0 %v331
        %v424 = vpop.f32.mrb[0].mxu0
        %v425 = vadd.f32 %v317, %v424
        %v426 = vpop.f32.mrb[0].mxu0
        %427 = vmatprep.mubr.f32.mxu0 0.0
        %428 = vmatmul.mubr.f32.gmra.mrb[0].mxu0 %v334
        %v429 = vpop.f32.mrb[0].mxu0
        %v430 = vadd.f32 %v318, %v429
        %v431 = vpop.f32.mrb[0].mxu0
        %432 = vmatprep.mubr.f32.mxu0 0.0
        %433 = vmatmul.mubr.f32.gmra.mrb[0].mxu0 %v337
        %v434 = vpop.f32.mrb[0].mxu0
        %v435 = vadd.f32 %v319, %v434
        %v436 = vpop.f32.mrb[0].mxu0
        %437 = vmatprep.mubr.f32.mxu0 0.0
        %438 = vmatmul.mubr.f32.gmra.mrb[0].mxu0 %v340
        %v439 = vpop.f32.mrb[0].mxu0
        %v440 = vadd.f32 %v320, %v439
        %v441 = vpop.f32.mrb[0].mxu0
        %442 = vmatprep.mubr.f32.mxu0 0.0
        %443 = vmatmul.mubr.f32.gmra.mrb[0].mxu0 %v343
        %v444 = vpop.f32.mrb[0].mxu0
        %v445 = vadd.f32 %v321, %v444
        %v446 = vpop.f32.mrb[0].mxu0
        %447 = vmatprep.mubr.f32.mxu0 0.0
        %448 = vmatmul.mubr.f32.gmra.mrb[0].mxu0 %v346
        %v449 = vpop.f32.mrb[0].mxu0
        %v450 = vadd.f32 %v322, %v449
        %v451 = vpop.f32.mrb[0].mxu0
        %452 = vdwg.mxu0
        %v453 = vmul.f32 %v415, 0.5
        %v454 = vmul.f32 %v420, 0.5
        %v455 = vmul.f32 %v425, 0.5
        %v456 = vmul.f32 %v430, 0.5
        %v457 = vmul.f32 %v435, 0.5
        %v458 = vmul.f32 %v440, 0.5
        %v459 = vmul.f32 %v445, 0.5
        %v460 = vmul.f32 %v450, 0.5
        %v461 = vtanh.pop %v453
        %v462 = vtanh.pop %v454
        %v463 = vtanh.pop %v455
        %v464 = vtanh.pop %v456
        %v465 = vtanh.pop %v457
        %v466 = vtanh.pop %v458
        %v467 = vtanh.pop %v459
        %v468 = vtanh.pop %v460
        %v469 = vadd.f32 %v461, 1.0
        %v470 = vadd.f32 %v462, 1.0
        %v471 = vadd.f32 %v463, 1.0
        %v472 = vadd.f32 %v464, 1.0
        %v473 = vadd.f32 %v465, 1.0
        %v474 = vadd.f32 %v466, 1.0
        %v475 = vadd.f32 %v467, 1.0
        %v476 = vadd.f32 %v468, 1.0
        %v477 = vmul.f32 %v469, 0.5
        %v478 = vmul.f32 %v470, 0.5
        %v479 = vmul.f32 %v471, 0.5
        %v480 = vmul.f32 %v472, 0.5
        %v481 = vmul.f32 %v473, 0.5
        %v482 = vmul.f32 %v474, 0.5
        %v483 = vmul.f32 %v475, 0.5
        %v484 = vmul.f32 %v476, 0.5
        %s485 = scalar_lea.vmem %s226, 128 [#allocation4]
        %v486 = vld [vmem:[%s485] sm:$0xff]
        %v487 = vld [vmem:[%s485 + $0x8] sm:$0xff]
        %v488 = vld [vmem:[%s485 + $0x10] sm:$0xff]
        %v489 = vld [vmem:[%s485 + $0x18] sm:$0xff]
        %v490 = vld [vmem:[%s485 + $0x20] sm:$0xff]
        %v491 = vld [vmem:[%s485 + $0x28] sm:$0xff]
        %v492 = vld [vmem:[%s485 + $0x30] sm:$0xff]
        %v493 = vld [vmem:[%s485 + $0x38] sm:$0xff]
        %v494 = vld [vmem:[%s485 + $0x40] sm:$0xff]
        %v495 = vld [vmem:[%s485 + $0x48] sm:$0xff]
        %v496 = vld [vmem:[%s485 + $0x50] sm:$0xff]
        %v497 = vld [vmem:[%s485 + $0x58] sm:$0xff]
        %v498 = vld [vmem:[%s485 + $0x60] sm:$0xff]
        %v499 = vld [vmem:[%s485 + $0x68] sm:$0xff]
        %v500 = vld [vmem:[%s485 + $0x70] sm:$0xff]
        %v501 = vld [vmem:[%s485 + $0x78] sm:$0xff]
        %v502 = vadd.f32 %v486, %v487
        %503 = vadd.xlane.f32.xlu0 %v502
        %v504 = vpop.xlane.xlu0 %503
        %v505 = vadd.f32 %v488, %v489
        %506 = vadd.xlane.f32.xlu0 %v505
        %v507 = vpop.xlane.xlu0 %506
        %v508 = vadd.f32 %v490, %v491
        %509 = vadd.xlane.f32.xlu0 %v508
        %v510 = vpop.xlane.xlu0 %509
        %v511 = vadd.f32 %v492, %v493
        %512 = vadd.xlane.f32.xlu0 %v511
        %v513 = vpop.xlane.xlu0 %512
        %v514 = vadd.f32 %v494, %v495
        %515 = vadd.xlane.f32.xlu0 %v514
        %v516 = vpop.xlane.xlu0 %515
        %v517 = vadd.f32 %v496, %v497
        %518 = vadd.xlane.f32.xlu0 %v517
        %v519 = vpop.xlane.xlu0 %518
        %v520 = vadd.f32 %v498, %v499
        %521 = vadd.xlane.f32.xlu0 %v520
        %v522 = vpop.xlane.xlu0 %521
        %v523 = vadd.f32 %v500, %v501
        %524 = vadd.xlane.f32.xlu0 %v523
        %v525 = vpop.xlane.xlu0 %524
        %v526 = vmul.f32 %v504, 0.00390625
        %v527 = vmul.f32 %v507, 0.00390625
        %v528 = vmul.f32 %v510, 0.00390625
        %v529 = vmul.f32 %v513, 0.00390625
        %v530 = vmul.f32 %v516, 0.00390625
        %v531 = vmul.f32 %v519, 0.00390625
        %v532 = vmul.f32 %v522, 0.00390625
        %v533 = vmul.f32 %v525, 0.00390625
        %534 = vmatprep.subr.mxu0 0.0
        %535 = vmatpush1.msra.mxu0 %v526
        %536 = vmatprep.subr.mxu0 0.0
        %537 = vmatpush1.msra.mxu0 %v527
        %538 = vmatprep.subr.mxu0 0.0
        %539 = vmatpush1.msra.mxu0 %v528
        %540 = vmatprep.subr.mxu0 0.0
        %541 = vmatpush1.msra.mxu0 %v529
        %542 = vmatprep.subr.mxu0 0.0
        %543 = vmatpush1.msra.mxu0 %v530
        %544 = vmatprep.subr.mxu0 0.0
        %545 = vmatpush1.msra.mxu0 %v531
        %546 = vmatprep.subr.mxu0 0.0
        %547 = vmatpush1.msra.mxu0 %v532
        %548 = vmatprep.subr.mxu0 0.0
        %549 = vmatpush1.msra.mxu0 %v533
        %550 = vmatprep.subr.mxu0 0.0
        %551 = vmatpush1.msra.mxu0 0.0
        %552 = vmatprep.subr.mxu0 0.0
        %553 = vmatpush1.msra.mxu0 0.0
        %554 = vmatprep.subr.mxu0 0.0
        %555 = vmatpush1.msra.mxu0 0.0
        %556 = vmatprep.subr.mxu0 0.0
        %557 = vmatpush1.msra.mxu0 0.0
        %558 = vmatprep.subr.mxu0 0.0
        %559 = vmatpush1.msra.mxu0 0.0
        %560 = vmatprep.subr.mxu0 0.0
        %561 = vmatpush1.msra.mxu0 0.0
        %562 = vmatprep.subr.mxu0 0.0
        %563 = vmatpush1.msra.mxu0 0.0
        %564 = vmatprep.subr.mxu0 0.0
        %565 = vmatpush1.msra.mxu0 0.0
        %566 = vmatprep.subr.mxu0 0.0
        %567 = vmatpush1.msra.mxu0 0.0
        %568 = vmatprep.subr.mxu0 0.0
        %569 = vmatpush1.msra.mxu0 0.0
        %570 = vmatprep.subr.mxu0 0.0
        %571 = vmatpush1.msra.mxu0 0.0
        %572 = vmatprep.subr.mxu0 0.0
        %573 = vmatpush1.msra.mxu0 0.0
        %574 = vmatprep.subr.mxu0 0.0
        %575 = vmatpush1.msra.mxu0 0.0
        %576 = vmatprep.subr.mxu0 0.0
        %577 = vmatpush1.msra.mxu0 0.0
        %578 = vmatprep.subr.mxu0 0.0
        %579 = vmatpush1.msra.mxu0 0.0
        %580 = vmatprep.subr.mxu0 0.0
        %581 = vmatpush1.msra.mxu0 0.0
        %582 = vmatprep.subr.mxu0 0.0
        %583 = vmatpush1.msra.mxu0 0.0
        %584 = vmatprep.subr.mxu0 0.0
        %585 = vmatpush1.msra.mxu0 0.0
        %586 = vmatprep.subr.mxu0 0.0
        %587 = vmatpush1.msra.mxu0 0.0
        %588 = vmatprep.subr.mxu0 0.0
        %589 = vmatpush1.msra.mxu0 0.0
        %590 = vmatprep.subr.mxu0 0.0
        %591 = vmatpush1.msra.mxu0 0.0
        %592 = vmatprep.subr.mxu0 0.0
        %593 = vmatpush1.msra.mxu0 0.0
        %594 = vmatprep.subr.mxu0 0.0
        %595 = vmatpush1.msra.mxu0 0.0
        %596 = vmatprep.subr.mxu0 0.0
        %597 = vmatpush1.msra.mxu0 0.0
        %598 = vmatprep.mubr.f32.mxu0 0.0
        %599 = vmatmul.mubr.f32.gmra.mrb[0].mxu0 %v325
        %v600 = vpop.f32.mrb[0].mxu0
        %v601 = vadd.f32 %v315, %v600
        %v602 = vpop.f32.mrb[0].mxu0
        %603 = vmatprep.mubr.f32.mxu0 0.0
        %604 = vmatmul.mubr.f32.gmra.mrb[0].mxu0 %v328
        %v605 = vpop.f32.mrb[0].mxu0
        %v606 = vadd.f32 %v316, %v605
        %v607 = vpop.f32.mrb[0].mxu0
        %608 = vmatprep.mubr.f32.mxu0 0.0
        %609 = vmatmul.mubr.f32.gmra.mrb[0].mxu0 %v331
        %v610 = vpop.f32.mrb[0].mxu0
        %v611 = vadd.f32 %v317, %v610
        %v612 = vpop.f32.mrb[0].mxu0
        %613 = vmatprep.mubr.f32.mxu0 0.0
        %614 = vmatmul.mubr.f32.gmra.mrb[0].mxu0 %v334
        %v615 = vpop.f32.mrb[0].mxu0
        %v616 = vadd.f32 %v318, %v615
        %v617 = vpop.f32.mrb[0].mxu0
        %618 = vmatprep.mubr.f32.mxu0 0.0
        %619 = vmatmul.mubr.f32.gmra.mrb[0].mxu0 %v337
        %v620 = vpop.f32.mrb[0].mxu0
        %v621 = vadd.f32 %v319, %v620
        %v622 = vpop.f32.mrb[0].mxu0
        %623 = vmatprep.mubr.f32.mxu0 0.0
        %624 = vmatmul.mubr.f32.gmra.mrb[0].mxu0 %v340
        %v625 = vpop.f32.mrb[0].mxu0
        %v626 = vadd.f32 %v320, %v625
        %v627 = vpop.f32.mrb[0].mxu0
        %628 = vmatprep.mubr.f32.mxu0 0.0
        %629 = vmatmul.mubr.f32.gmra.mrb[0].mxu0 %v343
        %v630 = vpop.f32.mrb[0].mxu0
        %v631 = vadd.f32 %v321, %v630
        %v632 = vpop.f32.mrb[0].mxu0
        %633 = vmatprep.mubr.f32.mxu0 0.0
        %634 = vmatmul.mubr.f32.gmra.mrb[0].mxu0 %v346
        %v635 = vpop.f32.mrb[0].mxu0
        %v636 = vadd.f32 %v322, %v635
        %v637 = vpop.f32.mrb[0].mxu0
        %638 = vdwg.mxu0
        %v639 = vmul.f32 %v601, 0.5
        %v640 = vmul.f32 %v606, 0.5
        %v641 = vmul.f32 %v611, 0.5
        %v642 = vmul.f32 %v616, 0.5
        %v643 = vmul.f32 %v621, 0.5
        %v644 = vmul.f32 %v626, 0.5
        %v645 = vmul.f32 %v631, 0.5
        %v646 = vmul.f32 %v636, 0.5
        %v647 = vtanh.pop %v639
        %v648 = vtanh.pop %v640
        %v649 = vtanh.pop %v641
        %v650 = vtanh.pop %v642
        %v651 = vtanh.pop %v643
        %v652 = vtanh.pop %v644
        %v653 = vtanh.pop %v645
        %v654 = vtanh.pop %v646
        %v655 = vadd.f32 %v647, 1.0
        %v656 = vadd.f32 %v648, 1.0
        %v657 = vadd.f32 %v649, 1.0
        %v658 = vadd.f32 %v650, 1.0
        %v659 = vadd.f32 %v651, 1.0
        %v660 = vadd.f32 %v652, 1.0
        %v661 = vadd.f32 %v653, 1.0
        %v662 = vadd.f32 %v654, 1.0
        %v663 = vmul.f32 %v655, 0.5
        %v664 = vmul.f32 %v656, 0.5
        %v665 = vmul.f32 %v657, 0.5
        %v666 = vmul.f32 %v658, 0.5
        %v667 = vmul.f32 %v659, 0.5
        %v668 = vmul.f32 %v660, 0.5
        %v669 = vmul.f32 %v661, 0.5
        %v670 = vmul.f32 %v662, 0.5
        %672 = vset.pattern.permute.xlu0 0
        %673 = vperm.xlu0 %672, %v477
        %v674 = vpop.permute.xlu0 %673
        %677 = vset.pattern.permute.xlu0 0
        %678 = vperm.xlu0 %677, %v478
        %v679 = vpop.permute.xlu0 %678
        %682 = vset.pattern.permute.xlu0 0
        %683 = vperm.xlu0 %682, %v479
        %v684 = vpop.permute.xlu0 %683
        %687 = vset.pattern.permute.xlu0 0
        %688 = vperm.xlu0 %687, %v480
        %v689 = vpop.permute.xlu0 %688
        %692 = vset.pattern.permute.xlu0 0
        %693 = vperm.xlu0 %692, %v481
        %v694 = vpop.permute.xlu0 %693
        %697 = vset.pattern.permute.xlu0 0
        %698 = vperm.xlu0 %697, %v482
        %v699 = vpop.permute.xlu0 %698
        %702 = vset.pattern.permute.xlu0 0
        %703 = vperm.xlu0 %702, %v483
        %v704 = vpop.permute.xlu0 %703
        %707 = vset.pattern.permute.xlu0 0
        %708 = vperm.xlu0 %707, %v484
        %v709 = vpop.permute.xlu0 %708
        %v711 = vmul.f32 %v259, %v674
        %v712 = vmul.f32 %v260, %v674
        %v713 = vmul.f32 %v261, %v679
        %v714 = vmul.f32 %v262, %v679
        %v715 = vmul.f32 %v263, %v684
        %v716 = vmul.f32 %v264, %v684
        %v717 = vmul.f32 %v265, %v689
        %v718 = vmul.f32 %v266, %v689
        %v719 = vmul.f32 %v267, %v694
        %v720 = vmul.f32 %v268, %v694
        %v721 = vmul.f32 %v269, %v699
        %v722 = vmul.f32 %v270, %v699
        %v723 = vmul.f32 %v271, %v704
        %v724 = vmul.f32 %v272, %v704
        %v725 = vmul.f32 %v273, %v709
        %v726 = vmul.f32 %v274, %v709
        %727 = vst [vmem:[#allocation2] sm:$0xff] %v711
        %728 = vst [vmem:[#allocation2 + $0x8] sm:$0xff] %v712
        %729 = vst [vmem:[#allocation2 + $0x10] sm:$0xff] %v713
        %730 = vst [vmem:[#allocation2 + $0x18] sm:$0xff] %v714
        %731 = vst [vmem:[#allocation2 + $0x20] sm:$0xff] %v715
        %732 = vst [vmem:[#allocation2 + $0x28] sm:$0xff] %v716
        %733 = vst [vmem:[#allocation2 + $0x30] sm:$0xff] %v717
        %734 = vst [vmem:[#allocation2 + $0x38] sm:$0xff] %v718
        %735 = vst [vmem:[#allocation2 + $0x40] sm:$0xff] %v719
        %736 = vst [vmem:[#allocation2 + $0x48] sm:$0xff] %v720
        %737 = vst [vmem:[#allocation2 + $0x50] sm:$0xff] %v721
        %738 = vst [vmem:[#allocation2 + $0x58] sm:$0xff] %v722
        %739 = vst [vmem:[#allocation2 + $0x60] sm:$0xff] %v723
        %740 = vst [vmem:[#allocation2 + $0x68] sm:$0xff] %v724
        %741 = vst [vmem:[#allocation2 + $0x70] sm:$0xff] %v725
        %742 = vst [vmem:[#allocation2 + $0x78] sm:$0xff] %v726
        %v743 = vld [vmem:[%s485] sm:$0xff]
        %v744 = vld [vmem:[%s485 + $0x8] sm:$0xff]
        %v745 = vld [vmem:[%s485 + $0x10] sm:$0xff]
        %v746 = vld [vmem:[%s485 + $0x18] sm:$0xff]
        %v747 = vld [vmem:[%s485 + $0x20] sm:$0xff]
        %v748 = vld [vmem:[%s485 + $0x28] sm:$0xff]
        %v749 = vld [vmem:[%s485 + $0x30] sm:$0xff]
        %v750 = vld [vmem:[%s485 + $0x38] sm:$0xff]
        %v751 = vld [vmem:[%s485 + $0x40] sm:$0xff]
        %v752 = vld [vmem:[%s485 + $0x48] sm:$0xff]
        %v753 = vld [vmem:[%s485 + $0x50] sm:$0xff]
        %v754 = vld [vmem:[%s485 + $0x58] sm:$0xff]
        %v755 = vld [vmem:[%s485 + $0x60] sm:$0xff]
        %v756 = vld [vmem:[%s485 + $0x68] sm:$0xff]
        %v757 = vld [vmem:[%s485 + $0x70] sm:$0xff]
        %v758 = vld [vmem:[%s485 + $0x78] sm:$0xff]
        %760 = vset.pattern.permute.xlu0 0
        %761 = vperm.xlu0 %760, %v663
        %v762 = vpop.permute.xlu0 %761
        %765 = vset.pattern.permute.xlu0 0
        %766 = vperm.xlu0 %765, %v664
        %v767 = vpop.permute.xlu0 %766
        %770 = vset.pattern.permute.xlu0 0
        %771 = vperm.xlu0 %770, %v665
        %v772 = vpop.permute.xlu0 %771
        %775 = vset.pattern.permute.xlu0 0
        %776 = vperm.xlu0 %775, %v666
        %v777 = vpop.permute.xlu0 %776
        %780 = vset.pattern.permute.xlu0 0
        %781 = vperm.xlu0 %780, %v667
        %v782 = vpop.permute.xlu0 %781
        %785 = vset.pattern.permute.xlu0 0
        %786 = vperm.xlu0 %785, %v668
        %v787 = vpop.permute.xlu0 %786
        %790 = vset.pattern.permute.xlu0 0
        %791 = vperm.xlu0 %790, %v669
        %v792 = vpop.permute.xlu0 %791
        %795 = vset.pattern.permute.xlu0 0
        %796 = vperm.xlu0 %795, %v670
        %v797 = vpop.permute.xlu0 %796
        %v799 = vmul.f32 %v743, %v762
        %v800 = vmul.f32 %v744, %v762
        %v801 = vmul.f32 %v745, %v767
        %v802 = vmul.f32 %v746, %v767
        %v803 = vmul.f32 %v747, %v772
        %v804 = vmul.f32 %v748, %v772
        %v805 = vmul.f32 %v749, %v777
        %v806 = vmul.f32 %v750, %v777
        %v807 = vmul.f32 %v751, %v782
        %v808 = vmul.f32 %v752, %v782
        %v809 = vmul.f32 %v753, %v787
        %v810 = vmul.f32 %v754, %v787
        %v811 = vmul.f32 %v755, %v792
        %v812 = vmul.f32 %v756, %v792
        %v813 = vmul.f32 %v757, %v797
        %v814 = vmul.f32 %v758, %v797
        %s815 = scalar_lea.vmem [#allocation2], 128
        %816 = vst [vmem:[%s815] sm:$0xff] %v799
        %817 = vst [vmem:[%s815 + $0x8] sm:$0xff] %v800
        %818 = vst [vmem:[%s815 + $0x10] sm:$0xff] %v801
        %819 = vst [vmem:[%s815 + $0x18] sm:$0xff] %v802
        %820 = vst [vmem:[%s815 + $0x20] sm:$0xff] %v803
        %821 = vst [vmem:[%s815 + $0x28] sm:$0xff] %v804
        %822 = vst [vmem:[%s815 + $0x30] sm:$0xff] %v805
        %823 = vst [vmem:[%s815 + $0x38] sm:$0xff] %v806
        %824 = vst [vmem:[%s815 + $0x40] sm:$0xff] %v807
        %825 = vst [vmem:[%s815 + $0x48] sm:$0xff] %v808
        %826 = vst [vmem:[%s815 + $0x50] sm:$0xff] %v809
        %827 = vst [vmem:[%s815 + $0x58] sm:$0xff] %v810
        %828 = vst [vmem:[%s815 + $0x60] sm:$0xff] %v811
        %829 = vst [vmem:[%s815 + $0x68] sm:$0xff] %v812
        %830 = vst [vmem:[%s815 + $0x70] sm:$0xff] %v813
        %831 = vst [vmem:[%s815 + $0x78] sm:$0xff] %v814
        %832 = vst [vmem:[#allocation3] sm:$0xf] 0.0
        %833 = vst [vmem:[#allocation3 + $0xc] sm:$0xf] 0.0
        %v834 = vld [vmem:[#allocation2] sm:$0xff]
        %v835 = vld [vmem:[#allocation2 + $0x8] sm:$0xff]
        %v836 = vld [vmem:[#allocation2 + $0x10] sm:$0xff]
        %v837 = vld [vmem:[#allocation2 + $0x18] sm:$0xff]
        %v838 = vld [vmem:[#allocation2 + $0x20] sm:$0xff]
        %v839 = vld [vmem:[#allocation2 + $0x28] sm:$0xff]
        %v840 = vld [vmem:[#allocation2 + $0x30] sm:$0xff]
        %v841 = vld [vmem:[#allocation2 + $0x38] sm:$0xff]
        %v842 = vld [vmem:[#allocation2 + $0x40] sm:$0xff]
        %v843 = vld [vmem:[#allocation2 + $0x48] sm:$0xff]
        %v844 = vld [vmem:[#allocation2 + $0x50] sm:$0xff]
        %v845 = vld [vmem:[#allocation2 + $0x58] sm:$0xff]
        %v846 = vld [vmem:[#allocation2 + $0x60] sm:$0xff]
        %v847 = vld [vmem:[#allocation2 + $0x68] sm:$0xff]
        %v848 = vld [vmem:[#allocation2 + $0x70] sm:$0xff]
        %v849 = vld [vmem:[#allocation2 + $0x78] sm:$0xff]
        %v851 = vsel %vm323, 0.015625, 0
        %853 = vmatprep.subr.mxu0 %v835
        %854 = vmatpush1.msra.mxu0 %v834
        %855 = vmatprep.subr.mxu0 %v837
        %856 = vmatpush1.msra.mxu0 %v836
        %857 = vmatprep.subr.mxu0 %v839
        %858 = vmatpush1.msra.mxu0 %v838
        %859 = vmatprep.subr.mxu0 %v841
        %860 = vmatpush1.msra.mxu0 %v840
        %861 = vmatprep.subr.mxu0 %v843
        %862 = vmatpush1.msra.mxu0 %v842
        %863 = vmatprep.subr.mxu0 %v845
        %864 = vmatpush1.msra.mxu0 %v844
        %865 = vmatprep.subr.mxu0 %v847
        %866 = vmatpush1.msra.mxu0 %v846
        %867 = vmatprep.subr.mxu0 %v849
        %868 = vmatpush1.msra.mxu0 %v848
        %869 = vmatprep.subr.mxu0 0.0
        %870 = vmatpush1.msra.mxu0 0.0
        %871 = vmatprep.subr.mxu0 0.0
        %872 = vmatpush1.msra.mxu0 0.0
        %873 = vmatprep.subr.mxu0 0.0
        %874 = vmatpush1.msra.mxu0 0.0
        %875 = vmatprep.subr.mxu0 0.0
        %876 = vmatpush1.msra.mxu0 0.0
        %877 = vmatprep.subr.mxu0 0.0
        %878 = vmatpush1.msra.mxu0 0.0
        %879 = vmatprep.subr.mxu0 0.0
        %880 = vmatpush1.msra.mxu0 0.0
        %881 = vmatprep.subr.mxu0 0.0
        %882 = vmatpush1.msra.mxu0 0.0
        %883 = vmatprep.subr.mxu0 0.0
        %884 = vmatpush1.msra.mxu0 0.0
        %885 = vmatprep.subr.mxu0 0.0
        %886 = vmatpush1.msra.mxu0 0.0
        %887 = vmatprep.subr.mxu0 0.0
        %888 = vmatpush1.msra.mxu0 0.0
        %889 = vmatprep.subr.mxu0 0.0
        %890 = vmatpush1.msra.mxu0 0.0
        %891 = vmatprep.subr.mxu0 0.0
        %892 = vmatpush1.msra.mxu0 0.0
        %893 = vmatprep.subr.mxu0 0.0
        %894 = vmatpush1.msra.mxu0 0.0
        %895 = vmatprep.subr.mxu0 0.0
        %896 = vmatpush1.msra.mxu0 0.0
        %897 = vmatprep.subr.mxu0 0.0
        %898 = vmatpush1.msra.mxu0 0.0
        %899 = vmatprep.subr.mxu0 0.0
        %900 = vmatpush1.msra.mxu0 0.0
        %901 = vmatprep.subr.mxu0 0.0
        %902 = vmatpush1.msra.mxu0 0.0
        %903 = vmatprep.subr.mxu0 0.0
        %904 = vmatpush1.msra.mxu0 0.0
        %905 = vmatprep.subr.mxu0 0.0
        %906 = vmatpush1.msra.mxu0 0.0
        %907 = vmatprep.subr.mxu0 0.0
        %908 = vmatpush1.msra.mxu0 0.0
        %909 = vmatprep.subr.mxu0 0.0
        %910 = vmatpush1.msra.mxu0 0.0
        %911 = vmatprep.subr.mxu0 0.0
        %912 = vmatpush1.msra.mxu0 0.0
        %913 = vmatprep.subr.mxu0 0.0
        %914 = vmatpush1.msra.mxu0 0.0
        %915 = vmatprep.subr.mxu0 0.0
        %916 = vmatpush1.msra.mxu0 0.0
        %917 = vmatprep.mubr.f32.mxu0 0.0
        %918 = vmatmul.mubr.f32.gmra.mrb[0].mxu0 %v851
        %v919 = vpop.f32.mrb[0].mxu0
        %v920 = vadd.f32 0.0, %v919
        %v921 = vpop.f32.mrb[0].mxu0
        %v922 = vadd.f32 0.0, %v921
        %923 = vdwg.mxu0
        %v924 = vmax.f32 %v834, %v838
        %v925 = vmax.f32 %v836, %v840
        %v926 = vmax.f32 %v924, %v842
        %v927 = vmax.f32 %v925, %v844
        %v928 = vmax.f32 %v926, %v846
        %v929 = vmax.f32 %v927, %v848
        %v930 = vmax.f32 %v928, %v929
        %v931 = vrot.slane %v930, 4
        %v932 = vmax.f32 %v930, %v931
        %v933 = vrot.slane %v932, 2
        %v934 = vmax.f32 %v932, %v933
        %v935 = vrot.slane %v934, 1
        %v936 = vmax.f32 %v934, %v935
        %v937 = vmax.f32 %v835, %v839
        %v938 = vmax.f32 %v837, %v841
        %v939 = vmax.f32 %v937, %v843
        %v940 = vmax.f32 %v938, %v845
        %v941 = vmax.f32 %v939, %v847
        %v942 = vmax.f32 %v940, %v849
        %v943 = vmax.f32 %v941, %v942
        %v944 = vrot.slane %v943, 4
        %v945 = vmax.f32 %v943, %v944
        %v946 = vrot.slane %v945, 2
        %v947 = vmax.f32 %v945, %v946
        %v948 = vrot.slane %v947, 1
        %v949 = vmax.f32 %v947, %v948
        %v952 = vcombine.low %v920, %v922
        %v954 = vunpack.c.l.s4 1966171168
        %v955 = vunpack.c.0.s8 %v954
        %v956 = vlaneseq
        %v957 = vshrl.u32 %v956, 7
        %v958 = vsub.s32 %v955, %v957
        %v959 = vrot.slane %v952, %v958
        %v961 = vunpack.c.l.s4 1966171168
        %v962 = vunpack.c.0.s8 %v961
        %v963 = vlaneseq
        %v964 = vshrl.u32 %v963, 7
        %v965 = vsub.s32 %v962, %v964
        %v966 = vrot.slane %v959, %v965
        %v968 = vlaneseq
        %vm969 = vcmp.ge.s32.totalorder %v968, 0
        %vm970 = vcmp.lt.s32.totalorder %v968, 256
        %vm971 = vmand %vm969, %vm970
        %s972 = scalar_lea.vmem [#allocation3], 4
        %973 = vst.msk [vmem:[%s972] ss:$4 sm:$0x3] %vm971, %v966
        %v976 = vcombine.low %v936, %v949
        %v978 = vunpack.c.l.s4 1966171168
        %v979 = vunpack.c.0.s8 %v978
        %v980 = vlaneseq
        %v981 = vshrl.u32 %v980, 7
        %v982 = vsub.s32 %v979, %v981
        %v983 = vrot.slane %v976, %v982
        %v985 = vunpack.c.l.s4 1966171168
        %v986 = vunpack.c.0.s8 %v985
        %v987 = vlaneseq
        %v988 = vshrl.u32 %v987, 7
        %v989 = vsub.s32 %v986, %v988
        %v990 = vrot.slane %v983, %v989
        %s992 = scalar_lea.vmem [#allocation3], 5
        %993 = vst.msk [vmem:[%s992] ss:$4 sm:$0x3] %vm971, %v990
        %v994 = vld [vmem:[%s815] sm:$0xff]
        %v995 = vld [vmem:[%s815 + $0x8] sm:$0xff]
        %v996 = vld [vmem:[%s815 + $0x10] sm:$0xff]
        %v997 = vld [vmem:[%s815 + $0x18] sm:$0xff]
        %v998 = vld [vmem:[%s815 + $0x20] sm:$0xff]
        %v999 = vld [vmem:[%s815 + $0x28] sm:$0xff]
        %v1000 = vld [vmem:[%s815 + $0x30] sm:$0xff]
        %v1001 = vld [vmem:[%s815 + $0x38] sm:$0xff]
        %v1002 = vld [vmem:[%s815 + $0x40] sm:$0xff]
        %v1003 = vld [vmem:[%s815 + $0x48] sm:$0xff]
        %v1004 = vld [vmem:[%s815 + $0x50] sm:$0xff]
        %v1005 = vld [vmem:[%s815 + $0x58] sm:$0xff]
        %v1006 = vld [vmem:[%s815 + $0x60] sm:$0xff]
        %v1007 = vld [vmem:[%s815 + $0x68] sm:$0xff]
        %v1008 = vld [vmem:[%s815 + $0x70] sm:$0xff]
        %v1009 = vld [vmem:[%s815 + $0x78] sm:$0xff]
        %1010 = vmatprep.subr.mxu0 %v995
        %1011 = vmatpush1.msra.mxu0 %v994
        %1012 = vmatprep.subr.mxu0 %v997
        %1013 = vmatpush1.msra.mxu0 %v996
        %1014 = vmatprep.subr.mxu0 %v999
        %1015 = vmatpush1.msra.mxu0 %v998
        %1016 = vmatprep.subr.mxu0 %v1001
        %1017 = vmatpush1.msra.mxu0 %v1000
        %1018 = vmatprep.subr.mxu0 %v1003
        %1019 = vmatpush1.msra.mxu0 %v1002
        %1020 = vmatprep.subr.mxu0 %v1005
        %1021 = vmatpush1.msra.mxu0 %v1004
        %1022 = vmatprep.subr.mxu0 %v1007
        %1023 = vmatpush1.msra.mxu0 %v1006
        %1024 = vmatprep.subr.mxu0 %v1009
        %1025 = vmatpush1.msra.mxu0 %v1008
        %1026 = vmatprep.subr.mxu0 0.0
        %1027 = vmatpush1.msra.mxu0 0.0
        %1028 = vmatprep.subr.mxu0 0.0
        %1029 = vmatpush1.msra.mxu0 0.0
        %1030 = vmatprep.subr.mxu0 0.0
        %1031 = vmatpush1.msra.mxu0 0.0
        %1032 = vmatprep.subr.mxu0 0.0
        %1033 = vmatpush1.msra.mxu0 0.0
        %1034 = vmatprep.subr.mxu0 0.0
        %1035 = vmatpush1.msra.mxu0 0.0
        %1036 = vmatprep.subr.mxu0 0.0
        %1037 = vmatpush1.msra.mxu0 0.0
        %1038 = vmatprep.subr.mxu0 0.0
        %1039 = vmatpush1.msra.mxu0 0.0
        %1040 = vmatprep.subr.mxu0 0.0
        %1041 = vmatpush1.msra.mxu0 0.0
        %1042 = vmatprep.subr.mxu0 0.0
        %1043 = vmatpush1.msra.mxu0 0.0
        %1044 = vmatprep.subr.mxu0 0.0
        %1045 = vmatpush1.msra.mxu0 0.0
        %1046 = vmatprep.subr.mxu0 0.0
        %1047 = vmatpush1.msra.mxu0 0.0
        %1048 = vmatprep.subr.mxu0 0.0
        %1049 = vmatpush1.msra.mxu0 0.0
        %1050 = vmatprep.subr.mxu0 0.0
        %1051 = vmatpush1.msra.mxu0 0.0
        %1052 = vmatprep.subr.mxu0 0.0
        %1053 = vmatpush1.msra.mxu0 0.0
        %1054 = vmatprep.subr.mxu0 0.0
        %1055 = vmatpush1.msra.mxu0 0.0
        %1056 = vmatprep.subr.mxu0 0.0
        %1057 = vmatpush1.msra.mxu0 0.0
        %1058 = vmatprep.subr.mxu0 0.0
        %1059 = vmatpush1.msra.mxu0 0.0
        %1060 = vmatprep.subr.mxu0 0.0
        %1061 = vmatpush1.msra.mxu0 0.0
        %1062 = vmatprep.subr.mxu0 0.0
        %1063 = vmatpush1.msra.mxu0 0.0
        %1064 = vmatprep.subr.mxu0 0.0
        %1065 = vmatpush1.msra.mxu0 0.0
        %1066 = vmatprep.subr.mxu0 0.0
        %1067 = vmatpush1.msra.mxu0 0.0
        %1068 = vmatprep.subr.mxu0 0.0
        %1069 = vmatpush1.msra.mxu0 0.0
        %1070 = vmatprep.subr.mxu0 0.0
        %1071 = vmatpush1.msra.mxu0 0.0
        %1072 = vmatprep.subr.mxu0 0.0
        %1073 = vmatpush1.msra.mxu0 0.0
        %1074 = vmatprep.mubr.f32.mxu0 0.0
        %1075 = vmatmul.mubr.f32.gmra.mrb[0].mxu0 %v851
        %v1076 = vpop.f32.mrb[0].mxu0
        %v1077 = vadd.f32 0.0, %v1076
        %v1078 = vpop.f32.mrb[0].mxu0
        %v1079 = vadd.f32 0.0, %v1078
        %1080 = vdwg.mxu0
        %v1081 = vmax.f32 %v994, %v998
        %v1082 = vmax.f32 %v996, %v1000
        %v1083 = vmax.f32 %v1081, %v1002
        %v1084 = vmax.f32 %v1082, %v1004
        %v1085 = vmax.f32 %v1083, %v1006
        %v1086 = vmax.f32 %v1084, %v1008
        %v1087 = vmax.f32 %v1085, %v1086
        %v1088 = vrot.slane %v1087, 4
        %v1089 = vmax.f32 %v1087, %v1088
        %v1090 = vrot.slane %v1089, 2
        %v1091 = vmax.f32 %v1089, %v1090
        %v1092 = vrot.slane %v1091, 1
        %v1093 = vmax.f32 %v1091, %v1092
        %v1094 = vmax.f32 %v995, %v999
        %v1095 = vmax.f32 %v997, %v1001
        %v1096 = vmax.f32 %v1094, %v1003
        %v1097 = vmax.f32 %v1095, %v1005
        %v1098 = vmax.f32 %v1096, %v1007
        %v1099 = vmax.f32 %v1097, %v1009
        %v1100 = vmax.f32 %v1098, %v1099
        %v1101 = vrot.slane %v1100, 4
        %v1102 = vmax.f32 %v1100, %v1101
        %v1103 = vrot.slane %v1102, 2
        %v1104 = vmax.f32 %v1102, %v1103
        %v1105 = vrot.slane %v1104, 1
        %v1106 = vmax.f32 %v1104, %v1105
        %v1109 = vcombine.low %v1077, %v1079
        %v1111 = vunpack.c.l.s4 1966171168
        %v1112 = vunpack.c.0.s8 %v1111
        %v1113 = vlaneseq
        %v1114 = vshrl.u32 %v1113, 7
        %v1115 = vsub.s32 %v1112, %v1114
        %v1116 = vrot.slane %v1109, %v1115
        %v1118 = vunpack.c.l.s4 1966171168
        %v1119 = vunpack.c.0.s8 %v1118
        %v1120 = vlaneseq
        %v1121 = vshrl.u32 %v1120, 7
        %v1122 = vsub.s32 %v1119, %v1121
        %v1123 = vrot.slane %v1116, %v1122
        %s1125 = scalar_lea.vmem [#allocation3], 6
        %1126 = vst.msk [vmem:[%s1125] ss:$4 sm:$0x3] %vm971, %v1123
        %v1129 = vcombine.low %v1093, %v1106
        %v1131 = vunpack.c.l.s4 1966171168
        %v1132 = vunpack.c.0.s8 %v1131
        %v1133 = vlaneseq
        %v1134 = vshrl.u32 %v1133, 7
        %v1135 = vsub.s32 %v1132, %v1134
        %v1136 = vrot.slane %v1129, %v1135
        %v1138 = vunpack.c.l.s4 1966171168
        %v1139 = vunpack.c.0.s8 %v1138
        %v1140 = vlaneseq
        %v1141 = vshrl.u32 %v1140, 7
        %v1142 = vsub.s32 %v1139, %v1141
        %v1143 = vrot.slane %v1136, %v1142
        %s1145 = scalar_lea.vmem [#allocation3], 7
        %1146 = vst.msk [vmem:[%s1145] ss:$4 sm:$0x3] %vm971, %v1143
        %v1147 = vld [vmem:[#allocation3] sm:$0xff]
        %v1148 = vld [vmem:[#allocation3 + $0x8] sm:$0xf]
        %v1149 = vld [vmem:[%s4] sm:$0xf]
        %1151 = vset.pattern.permute.xlu0 0
        %1152 = vperm.xlu0 %1151, %v1149
        %v1153 = vpop.permute.xlu0 %1152
        %v1155 = vunpack.c.l.s4 839922192
        %v1156 = vunpack.c.0.s8 %v1155
        %v1157 = vlaneseq
        %v1158 = vshrl.u32 %v1157, 7
        %v1159 = vsub.s32 %v1156, %v1158
        %v1160 = vrot.slane %v1153, %v1159
        %v1162 = vmul.f32 %v1147, %v1160
        %v1163 = vmul.f32 %v1148, %v1160
        %v1164 = vadd.f32 %v1162, 0.0
        %v1165 = vadd.f32 %v1163, 0.0
        %1166 = vset.pattern.permute.xlu0 7
        %1167 = vperm.xlu0 %1166, %v1149
        %v1168 = vpop.permute.xlu0 %1167
        %v1170 = vunpack.c.l.s4 839922192
        %v1171 = vunpack.c.0.s8 %v1170
        %v1172 = vlaneseq
        %v1173 = vshrl.u32 %v1172, 7
        %v1174 = vsub.s32 %v1171, %v1173
        %v1175 = vrot.slane %v1168, %v1174
        %v1177 = vmul.f32 %v1147, %v1175
        %v1178 = vmul.f32 %v1148, %v1175
        %1181 = vrot.lane.b32.xlu0 %v1177, 112
        %v1182 = vpop.permute.xlu0 %1181
        %1183 = vrot.lane.b32.xlu0 %v1178, 112
        %v1184 = vpop.permute.xlu0 %1183
        %v1185 = vrot.slane %v1182, 4
        %v1186 = vrot.slane %v1184, 4
        %vm1187 = vcmask 1043456
        %v1188 = vsel %vm1187, %v1185, %v1186
        %vm1189 = vcmask 916480
        %v1190 = vsel %vm1189, %v1182, %v1188
        %v1193 = vadd.f32 %v1164, %v1190
        %v1194 = vadd.f32 %v1165, %v1184
        %1195 = vset.pattern.permute.xlu0 14
        %1196 = vperm.xlu0 %1195, %v1149
        %v1197 = vpop.permute.xlu0 %1196
        %v1199 = vunpack.c.l.s4 839922192
        %v1200 = vunpack.c.0.s8 %v1199
        %v1201 = vlaneseq
        %v1202 = vshrl.u32 %v1201, 7
        %v1203 = vsub.s32 %v1200, %v1202
        %v1204 = vrot.slane %v1197, %v1203
        %v1206 = vmul.f32 %v1147, %v1204
        %v1207 = vmul.f32 %v1148, %v1204
        %1210 = vrot.lane.b32.xlu0 %v1206, 96
        %v1211 = vpop.permute.xlu0 %1210
        %1212 = vrot.lane.b32.xlu0 %v1207, 96
        %v1213 = vpop.permute.xlu0 %1212
        %v1214 = vrot.slane %v1211, 4
        %v1215 = vrot.slane %v1213, 4
        %v1216 = vsel %vm1187, %v1214, %v1215
        %vm1217 = vcmask 785408
        %v1218 = vsel %vm1217, %v1211, %v1216
        %v1221 = vadd.f32 %v1193, %v1218
        %v1222 = vadd.f32 %v1194, %v1213
        %1223 = vset.pattern.permute.xlu0 21
        %1224 = vperm.xlu0 %1223, %v1149
        %v1225 = vpop.permute.xlu0 %1224
        %v1227 = vunpack.c.l.s4 839922192
        %v1228 = vunpack.c.0.s8 %v1227
        %v1229 = vlaneseq
        %v1230 = vshrl.u32 %v1229, 7
        %v1231 = vsub.s32 %v1228, %v1230
        %v1232 = vrot.slane %v1225, %v1231
        %v1234 = vmul.f32 %v1147, %v1232
        %v1235 = vmul.f32 %v1148, %v1232
        %1238 = vrot.lane.b32.xlu0 %v1234, 80
        %v1239 = vpop.permute.xlu0 %1238
        %1240 = vrot.lane.b32.xlu0 %v1235, 80
        %v1241 = vpop.permute.xlu0 %1240
        %v1242 = vrot.slane %v1239, 4
        %v1243 = vrot.slane %v1241, 4
        %v1244 = vsel %vm1187, %v1242, %v1243
        %vm1245 = vcmask 654336
        %v1246 = vsel %vm1245, %v1239, %v1244
        %v1249 = vadd.f32 %v1221, %v1246
        %v1250 = vadd.f32 %v1222, %v1241
        %v1251 = vld [vmem:[#allocation3 + $0x4] sm:$0xff]
        %v1252 = vld [vmem:[#allocation3 + $0xc] sm:$0xf]
        %1253 = vset.pattern.permute.xlu0 28
        %1254 = vperm.xlu0 %1253, %v1149
        %v1255 = vpop.permute.xlu0 %1254
        %v1257 = vunpack.c.l.s4 839922192
        %v1258 = vunpack.c.0.s8 %v1257
        %v1259 = vlaneseq
        %v1260 = vshrl.u32 %v1259, 7
        %v1261 = vsub.s32 %v1258, %v1260
        %v1262 = vrot.slane %v1255, %v1261
        %v1264 = vmul.f32 %v1251, %v1262
        %v1265 = vmul.f32 %v1252, %v1262
        %1268 = vrot.lane.b32.xlu0 %v1264, 64
        %v1269 = vpop.permute.xlu0 %1268
        %1270 = vrot.lane.b32.xlu0 %v1265, 64
        %v1271 = vpop.permute.xlu0 %1270
        %v1272 = vrot.slane %v1269, 4
        %v1273 = vsel %vm323, %v1272, %v1269
        %v1274 = vsel %vm323, %v1272, %v1271
        %v1277 = vadd.f32 %v1249, %v1273
        %v1278 = vadd.f32 %v1250, %v1274
        %1279 = vset.pattern.permute.xlu0 35
        %1280 = vperm.xlu0 %1279, %v1149
        %v1281 = vpop.permute.xlu0 %1280
        %v1283 = vunpack.c.l.s4 839922192
        %v1284 = vunpack.c.0.s8 %v1283
        %v1285 = vlaneseq
        %v1286 = vshrl.u32 %v1285, 7
        %v1287 = vsub.s32 %v1284, %v1286
        %v1288 = vrot.slane %v1281, %v1287
        %v1290 = vmul.f32 %v1251, %v1288
        %v1291 = vmul.f32 %v1252, %v1288
        %1294 = vrot.lane.b32.xlu0 %v1290, 48
        %v1295 = vpop.permute.xlu0 %1294
        %1296 = vrot.lane.b32.xlu0 %v1291, 48
        %v1297 = vpop.permute.xlu0 %1296
        %v1298 = vrot.slane %v1295, 4
        %vm1299 = vcmask 392192
        %v1300 = vsel %vm1299, %v1298, %v1295
        %v1301 = vsel %vm1299, %v1298, %v1297
        %v1304 = vadd.f32 %v1277, %v1300
        %v1305 = vadd.f32 %v1278, %v1301
        %1306 = vset.pattern.permute.xlu0 42
        %1307 = vperm.xlu0 %1306, %v1149
        %v1308 = vpop.permute.xlu0 %1307
        %v1310 = vunpack.c.l.s4 839922192
        %v1311 = vunpack.c.0.s8 %v1310
        %v1312 = vlaneseq
        %v1313 = vshrl.u32 %v1312, 7
        %v1314 = vsub.s32 %v1311, %v1313
        %v1315 = vrot.slane %v1308, %v1314
        %v1317 = vmul.f32 %v1251, %v1315
        %v1318 = vmul.f32 %v1252, %v1315
        %1321 = vrot.lane.b32.xlu0 %v1317, 32
        %v1322 = vpop.permute.xlu0 %1321
        %1323 = vrot.lane.b32.xlu0 %v1318, 32
        %v1324 = vpop.permute.xlu0 %1323
        %v1325 = vrot.slane %v1322, 4
        %vm1326 = vcmask 261120
        %v1327 = vsel %vm1326, %v1325, %v1322
        %v1328 = vsel %vm1326, %v1325, %v1324
        %v1331 = vadd.f32 %v1304, %v1327
        %v1332 = vadd.f32 %v1305, %v1328
        %v1333 = vld [vmem:[#allocation7] ss:$8 sm:$0x3]
        %v1335 = vlaneseq
        %v1336 = vshrl.u32 %v1335, 7
        %v1337 = vsub.s32 0, %v1336
        %v1338 = vrot.slane %v1333, %v1337
        %v1339 = vlaneseq
        %v1340 = vshrl.u32 %v1339, 7
        %v1341 = vsub.s32 1, %v1340
        %v1342 = vrot.slane %v1333, %v1341
        %v1343 = vcombine.low %v1338, %v1342
        %1344 = vrot.lane.b32.xlu0 %v1343, 77
        %v1345 = vpop.permute.xlu0 %1344
        %v1346 = vrot.slane %v1345, 4
        %vm1347 = vcmask 629760
        %v1348 = vsel %vm1347, %v1346, %v1345
        %v1351 = vmul.f32 %v1331, %v1348
        %v1352 = vmul.f32 %v1332, %v1346
        %v1353 = vadd.f32 %v1351, 0.0
        %v1354 = vadd.f32 %v1352, 0.0
        %v1355 = vld [vmem:[#allocation3] sm:$0xff]
        %v1356 = vld [vmem:[#allocation3 + $0x8] sm:$0xf]
        %v1357 = vld [vmem:[%s4] sm:$0xf]
        %1359 = vset.pattern.permute.xlu0 1
        %1360 = vperm.xlu0 %1359, %v1357
        %v1361 = vpop.permute.xlu0 %1360
        %v1363 = vunpack.c.l.s4 839922192
        %v1364 = vunpack.c.0.s8 %v1363
        %v1365 = vlaneseq
        %v1366 = vshrl.u32 %v1365, 7
        %v1367 = vsub.s32 %v1364, %v1366
        %v1368 = vrot.slane %v1361, %v1367
        %v1370 = vmul.f32 %v1355, %v1368
        %v1371 = vmul.f32 %v1356, %v1368
        %v1372 = vadd.f32 %v1370, 0.0
        %v1373 = vadd.f32 %v1371, 0.0
        %1374 = vset.pattern.permute.xlu0 8
        %1375 = vperm.xlu0 %1374, %v1357
        %v1376 = vpop.permute.xlu0 %1375
        %v1378 = vunpack.c.l.s4 839922192
        %v1379 = vunpack.c.0.s8 %v1378
        %v1380 = vlaneseq
        %v1381 = vshrl.u32 %v1380, 7
        %v1382 = vsub.s32 %v1379, %v1381
        %v1383 = vrot.slane %v1376, %v1382
        %v1385 = vmul.f32 %v1355, %v1383
        %v1386 = vmul.f32 %v1356, %v1383
        %1389 = vrot.lane.b32.xlu0 %v1385, 112
        %v1390 = vpop.permute.xlu0 %1389
        %1391 = vrot.lane.b32.xlu0 %v1386, 112
        %v1392 = vpop.permute.xlu0 %1391
        %v1393 = vrot.slane %v1390, 4
        %v1394 = vrot.slane %v1392, 4
        %v1395 = vsel %vm1187, %v1393, %v1394
        %v1396 = vsel %vm1189, %v1390, %v1395
        %v1399 = vadd.f32 %v1372, %v1396
        %v1400 = vadd.f32 %v1373, %v1392
        %1401 = vset.pattern.permute.xlu0 15
        %1402 = vperm.xlu0 %1401, %v1357
        %v1403 = vpop.permute.xlu0 %1402
        %v1405 = vunpack.c.l.s4 839922192
        %v1406 = vunpack.c.0.s8 %v1405
        %v1407 = vlaneseq
        %v1408 = vshrl.u32 %v1407, 7
        %v1409 = vsub.s32 %v1406, %v1408
        %v1410 = vrot.slane %v1403, %v1409
        %v1412 = vmul.f32 %v1355, %v1410
        %v1413 = vmul.f32 %v1356, %v1410
        %1416 = vrot.lane.b32.xlu0 %v1412, 96
        %v1417 = vpop.permute.xlu0 %1416
        %1418 = vrot.lane.b32.xlu0 %v1413, 96
        %v1419 = vpop.permute.xlu0 %1418
        %v1420 = vrot.slane %v1417, 4
        %v1421 = vrot.slane %v1419, 4
        %v1422 = vsel %vm1187, %v1420, %v1421
        %v1423 = vsel %vm1217, %v1417, %v1422
        %v1426 = vadd.f32 %v1399, %v1423
        %v1427 = vadd.f32 %v1400, %v1419
        %1428 = vset.pattern.permute.xlu0 22
        %1429 = vperm.xlu0 %1428, %v1357
        %v1430 = vpop.permute.xlu0 %1429
        %v1432 = vunpack.c.l.s4 839922192
        %v1433 = vunpack.c.0.s8 %v1432
        %v1434 = vlaneseq
        %v1435 = vshrl.u32 %v1434, 7
        %v1436 = vsub.s32 %v1433, %v1435
        %v1437 = vrot.slane %v1430, %v1436
        %v1439 = vmul.f32 %v1355, %v1437
        %v1440 = vmul.f32 %v1356, %v1437
        %1443 = vrot.lane.b32.xlu0 %v1439, 80
        %v1444 = vpop.permute.xlu0 %1443
        %1445 = vrot.lane.b32.xlu0 %v1440, 80
        %v1446 = vpop.permute.xlu0 %1445
        %v1447 = vrot.slane %v1444, 4
        %v1448 = vrot.slane %v1446, 4
        %v1449 = vsel %vm1187, %v1447, %v1448
        %v1450 = vsel %vm1245, %v1444, %v1449
        %v1453 = vadd.f32 %v1426, %v1450
        %v1454 = vadd.f32 %v1427, %v1446
        %v1455 = vld [vmem:[#allocation3 + $0x4] sm:$0xff]
        %v1456 = vld [vmem:[#allocation3 + $0xc] sm:$0xf]
        %1457 = vset.pattern.permute.xlu0 29
        %1458 = vperm.xlu0 %1457, %v1357
        %v1459 = vpop.permute.xlu0 %1458
        %v1461 = vunpack.c.l.s4 839922192
        %v1462 = vunpack.c.0.s8 %v1461
        %v1463 = vlaneseq
        %v1464 = vshrl.u32 %v1463, 7
        %v1465 = vsub.s32 %v1462, %v1464
        %v1466 = vrot.slane %v1459, %v1465
        %v1468 = vmul.f32 %v1455, %v1466
        %v1469 = vmul.f32 %v1456, %v1466
        %1472 = vrot.lane.b32.xlu0 %v1468, 64
        %v1473 = vpop.permute.xlu0 %1472
        %1474 = vrot.lane.b32.xlu0 %v1469, 64
        %v1475 = vpop.permute.xlu0 %1474
        %v1476 = vrot.slane %v1473, 4
        %v1477 = vsel %vm323, %v1476, %v1473
        %v1478 = vsel %vm323, %v1476, %v1475
        %v1481 = vadd.f32 %v1453, %v1477
        %v1482 = vadd.f32 %v1454, %v1478
        %1483 = vset.pattern.permute.xlu0 36
        %1484 = vperm.xlu0 %1483, %v1357
        %v1485 = vpop.permute.xlu0 %1484
        %v1487 = vunpack.c.l.s4 839922192
        %v1488 = vunpack.c.0.s8 %v1487
        %v1489 = vlaneseq
        %v1490 = vshrl.u32 %v1489, 7
        %v1491 = vsub.s32 %v1488, %v1490
        %v1492 = vrot.slane %v1485, %v1491
        %v1494 = vmul.f32 %v1455, %v1492
        %v1495 = vmul.f32 %v1456, %v1492
        %1498 = vrot.lane.b32.xlu0 %v1494, 48
        %v1499 = vpop.permute.xlu0 %1498
        %1500 = vrot.lane.b32.xlu0 %v1495, 48
        %v1501 = vpop.permute.xlu0 %1500
        %v1502 = vrot.slane %v1499, 4
        %v1503 = vsel %vm1299, %v1502, %v1499
        %v1504 = vsel %vm1299, %v1502, %v1501
        %v1507 = vadd.f32 %v1481, %v1503
        %v1508 = vadd.f32 %v1482, %v1504
        %1509 = vset.pattern.permute.xlu0 43
        %1510 = vperm.xlu0 %1509, %v1357
        %v1511 = vpop.permute.xlu0 %1510
        %v1513 = vunpack.c.l.s4 839922192
        %v1514 = vunpack.c.0.s8 %v1513
        %v1515 = vlaneseq
        %v1516 = vshrl.u32 %v1515, 7
        %v1517 = vsub.s32 %v1514, %v1516
        %v1518 = vrot.slane %v1511, %v1517
        %v1520 = vmul.f32 %v1455, %v1518
        %v1521 = vmul.f32 %v1456, %v1518
        %1524 = vrot.lane.b32.xlu0 %v1520, 32
        %v1525 = vpop.permute.xlu0 %1524
        %1526 = vrot.lane.b32.xlu0 %v1521, 32
        %v1527 = vpop.permute.xlu0 %1526
        %v1528 = vrot.slane %v1525, 4
        %v1529 = vsel %vm1326, %v1528, %v1525
        %v1530 = vsel %vm1326, %v1528, %v1527
        %v1533 = vadd.f32 %v1507, %v1529
        %v1534 = vadd.f32 %v1508, %v1530
        %s1535 = scalar_lea.vmem [#allocation7], 1
        %v1536 = vld [vmem:[%s1535] ss:$8 sm:$0x3]
        %v1538 = vlaneseq
        %v1539 = vshrl.u32 %v1538, 7
        %v1540 = vsub.s32 0, %v1539
        %v1541 = vrot.slane %v1536, %v1540
        %v1542 = vlaneseq
        %v1543 = vshrl.u32 %v1542, 7
        %v1544 = vsub.s32 1, %v1543
        %v1545 = vrot.slane %v1536, %v1544
        %v1546 = vcombine.low %v1541, %v1545
        %1547 = vrot.lane.b32.xlu0 %v1546, 78
        %v1548 = vpop.permute.xlu0 %1547
        %v1549 = vrot.slane %v1548, 4
        %vm1550 = vcmask 637952
        %v1551 = vsel %vm1550, %v1549, %v1548
        %v1554 = vmul.f32 %v1533, %v1551
        %v1555 = vmul.f32 %v1534, %v1549
        %1558 = vrot.lane.b32.xlu0 %v1554, 127
        %v1559 = vpop.permute.xlu0 %1558
        %1560 = vrot.lane.b32.xlu0 %v1555, 127
        %v1561 = vpop.permute.xlu0 %1560
        %v1562 = vrot.slane %v1559, 4
        %v1563 = vrot.slane %v1561, 4
        %v1564 = vsel %vm1187, %v1562, %v1563
        %vm1565 = vcmask 1039360
        %v1566 = vsel %vm1565, %v1559, %v1564
        %v1569 = vadd.f32 %v1353, %v1566
        %v1570 = vadd.f32 %v1354, %v1561
        %v1571 = vld [vmem:[#allocation3] sm:$0xff]
        %v1572 = vld [vmem:[#allocation3 + $0x8] sm:$0xf]
        %v1573 = vld [vmem:[%s4] sm:$0xf]
        %1575 = vset.pattern.permute.xlu0 2
        %1576 = vperm.xlu0 %1575, %v1573
        %v1577 = vpop.permute.xlu0 %1576
        %v1579 = vunpack.c.l.s4 839922192
        %v1580 = vunpack.c.0.s8 %v1579
        %v1581 = vlaneseq
        %v1582 = vshrl.u32 %v1581, 7
        %v1583 = vsub.s32 %v1580, %v1582
        %v1584 = vrot.slane %v1577, %v1583
        %v1586 = vmul.f32 %v1571, %v1584
        %v1587 = vmul.f32 %v1572, %v1584
        %v1588 = vadd.f32 %v1586, 0.0
        %v1589 = vadd.f32 %v1587, 0.0
        %1590 = vset.pattern.permute.xlu0 9
        %1591 = vperm.xlu0 %1590, %v1573
        %v1592 = vpop.permute.xlu0 %1591
        %v1594 = vunpack.c.l.s4 839922192
        %v1595 = vunpack.c.0.s8 %v1594
        %v1596 = vlaneseq
        %v1597 = vshrl.u32 %v1596, 7
        %v1598 = vsub.s32 %v1595, %v1597
        %v1599 = vrot.slane %v1592, %v1598
        %v1601 = vmul.f32 %v1571, %v1599
        %v1602 = vmul.f32 %v1572, %v1599
        %1605 = vrot.lane.b32.xlu0 %v1601, 112
        %v1606 = vpop.permute.xlu0 %1605
        %1607 = vrot.lane.b32.xlu0 %v1602, 112
        %v1608 = vpop.permute.xlu0 %1607
        %v1609 = vrot.slane %v1606, 4
        %v1610 = vrot.slane %v1608, 4
        %v1611 = vsel %vm1187, %v1609, %v1610
        %v1612 = vsel %vm1189, %v1606, %v1611
        %v1615 = vadd.f32 %v1588, %v1612
        %v1616 = vadd.f32 %v1589, %v1608
        %1617 = vset.pattern.permute.xlu0 16
        %1618 = vperm.xlu0 %1617, %v1573
        %v1619 = vpop.permute.xlu0 %1618
        %v1621 = vunpack.c.l.s4 839922192
        %v1622 = vunpack.c.0.s8 %v1621
        %v1623 = vlaneseq
        %v1624 = vshrl.u32 %v1623, 7
        %v1625 = vsub.s32 %v1622, %v1624
        %v1626 = vrot.slane %v1619, %v1625
        %v1628 = vmul.f32 %v1571, %v1626
        %v1629 = vmul.f32 %v1572, %v1626
        %1632 = vrot.lane.b32.xlu0 %v1628, 96
        %v1633 = vpop.permute.xlu0 %1632
        %1634 = vrot.lane.b32.xlu0 %v1629, 96
        %v1635 = vpop.permute.xlu0 %1634
        %v1636 = vrot.slane %v1633, 4
        %v1637 = vrot.slane %v1635, 4
        %v1638 = vsel %vm1187, %v1636, %v1637
        %v1639 = vsel %vm1217, %v1633, %v1638
        %v1642 = vadd.f32 %v1615, %v1639
        %v1643 = vadd.f32 %v1616, %v1635
        %1644 = vset.pattern.permute.xlu0 23
        %1645 = vperm.xlu0 %1644, %v1573
        %v1646 = vpop.permute.xlu0 %1645
        %v1648 = vunpack.c.l.s4 839922192
        %v1649 = vunpack.c.0.s8 %v1648
        %v1650 = vlaneseq
        %v1651 = vshrl.u32 %v1650, 7
        %v1652 = vsub.s32 %v1649, %v1651
        %v1653 = vrot.slane %v1646, %v1652
        %v1655 = vmul.f32 %v1571, %v1653
        %v1656 = vmul.f32 %v1572, %v1653
        %1659 = vrot.lane.b32.xlu0 %v1655, 80
        %v1660 = vpop.permute.xlu0 %1659
        %1661 = vrot.lane.b32.xlu0 %v1656, 80
        %v1662 = vpop.permute.xlu0 %1661
        %v1663 = vrot.slane %v1660, 4
        %v1664 = vrot.slane %v1662, 4
        %v1665 = vsel %vm1187, %v1663, %v1664
        %v1666 = vsel %vm1245, %v1660, %v1665
        %v1669 = vadd.f32 %v1642, %v1666
        %v1670 = vadd.f32 %v1643, %v1662
        %v1671 = vld [vmem:[#allocation3 + $0x4] sm:$0xff]
        %v1672 = vld [vmem:[#allocation3 + $0xc] sm:$0xf]
        %1673 = vset.pattern.permute.xlu0 30
        %1674 = vperm.xlu0 %1673, %v1573
        %v1675 = vpop.permute.xlu0 %1674
        %v1677 = vunpack.c.l.s4 839922192
        %v1678 = vunpack.c.0.s8 %v1677
        %v1679 = vlaneseq
        %v1680 = vshrl.u32 %v1679, 7
        %v1681 = vsub.s32 %v1678, %v1680
        %v1682 = vrot.slane %v1675, %v1681
        %v1684 = vmul.f32 %v1671, %v1682
        %v1685 = vmul.f32 %v1672, %v1682
        %1688 = vrot.lane.b32.xlu0 %v1684, 64
        %v1689 = vpop.permute.xlu0 %1688
        %1690 = vrot.lane.b32.xlu0 %v1685, 64
        %v1691 = vpop.permute.xlu0 %1690
        %v1692 = vrot.slane %v1689, 4
        %v1693 = vsel %vm323, %v1692, %v1689
        %v1694 = vsel %vm323, %v1692, %v1691
        %v1697 = vadd.f32 %v1669, %v1693
        %v1698 = vadd.f32 %v1670, %v1694
        %1699 = vset.pattern.permute.xlu0 37
        %1700 = vperm.xlu0 %1699, %v1573
        %v1701 = vpop.permute.xlu0 %1700
        %v1703 = vunpack.c.l.s4 839922192
        %v1704 = vunpack.c.0.s8 %v1703
        %v1705 = vlaneseq
        %v1706 = vshrl.u32 %v1705, 7
        %v1707 = vsub.s32 %v1704, %v1706
        %v1708 = vrot.slane %v1701, %v1707
        %v1710 = vmul.f32 %v1671, %v1708
        %v1711 = vmul.f32 %v1672, %v1708
        %1714 = vrot.lane.b32.xlu0 %v1710, 48
        %v1715 = vpop.permute.xlu0 %1714
        %1716 = vrot.lane.b32.xlu0 %v1711, 48
        %v1717 = vpop.permute.xlu0 %1716
        %v1718 = vrot.slane %v1715, 4
        %v1719 = vsel %vm1299, %v1718, %v1715
        %v1720 = vsel %vm1299, %v1718, %v1717
        %v1723 = vadd.f32 %v1697, %v1719
        %v1724 = vadd.f32 %v1698, %v1720
        %1725 = vset.pattern.permute.xlu0 44
        %1726 = vperm.xlu0 %1725, %v1573
        %v1727 = vpop.permute.xlu0 %1726
        %v1729 = vunpack.c.l.s4 839922192
        %v1730 = vunpack.c.0.s8 %v1729
        %v1731 = vlaneseq
        %v1732 = vshrl.u32 %v1731, 7
        %v1733 = vsub.s32 %v1730, %v1732
        %v1734 = vrot.slane %v1727, %v1733
        %v1736 = vmul.f32 %v1671, %v1734
        %v1737 = vmul.f32 %v1672, %v1734
        %1740 = vrot.lane.b32.xlu0 %v1736, 32
        %v1741 = vpop.permute.xlu0 %1740
        %1742 = vrot.lane.b32.xlu0 %v1737, 32
        %v1743 = vpop.permute.xlu0 %1742
        %v1744 = vrot.slane %v1741, 4
        %v1745 = vsel %vm1326, %v1744, %v1741
        %v1746 = vsel %vm1326, %v1744, %v1743
        %v1749 = vadd.f32 %v1723, %v1745
        %v1750 = vadd.f32 %v1724, %v1746
        %s1751 = scalar_lea.vmem [#allocation7], 2
        %v1752 = vld [vmem:[%s1751] ss:$8 sm:$0x3]
        %v1754 = vlaneseq
        %v1755 = vshrl.u32 %v1754, 7
        %v1756 = vsub.s32 0, %v1755
        %v1757 = vrot.slane %v1752, %v1756
        %v1758 = vlaneseq
        %v1759 = vshrl.u32 %v1758, 7
        %v1760 = vsub.s32 1, %v1759
        %v1761 = vrot.slane %v1752, %v1760
        %v1762 = vcombine.low %v1757, %v1761
        %1763 = vrot.lane.b32.xlu0 %v1762, 79
        %v1764 = vpop.permute.xlu0 %1763
        %v1765 = vrot.slane %v1764, 4
        %vm1766 = vcmask 646144
        %v1767 = vsel %vm1766, %v1765, %v1764
        %v1770 = vmul.f32 %v1749, %v1767
        %v1771 = vmul.f32 %v1750, %v1765
        %1774 = vrot.lane.b32.xlu0 %v1770, 126
        %v1775 = vpop.permute.xlu0 %1774
        %1776 = vrot.lane.b32.xlu0 %v1771, 126
        %v1777 = vpop.permute.xlu0 %1776
        %v1778 = vrot.slane %v1775, 4
        %v1779 = vrot.slane %v1777, 4
        %v1780 = vsel %vm1187, %v1778, %v1779
        %vm1781 = vcmask 1031168
        %v1782 = vsel %vm1781, %v1775, %v1780
        %v1785 = vadd.f32 %v1569, %v1782
        %v1786 = vadd.f32 %v1570, %v1777
        %v1787 = vld [vmem:[#allocation3] sm:$0xff]
        %v1788 = vld [vmem:[#allocation3 + $0x8] sm:$0xf]
        %v1789 = vld [vmem:[%s4] sm:$0xf]
        %1791 = vset.pattern.permute.xlu0 3
        %1792 = vperm.xlu0 %1791, %v1789
        %v1793 = vpop.permute.xlu0 %1792
        %v1795 = vunpack.c.l.s4 839922192
        %v1796 = vunpack.c.0.s8 %v1795
        %v1797 = vlaneseq
        %v1798 = vshrl.u32 %v1797, 7
        %v1799 = vsub.s32 %v1796, %v1798
        %v1800 = vrot.slane %v1793, %v1799
        %v1802 = vmul.f32 %v1787, %v1800
        %v1803 = vmul.f32 %v1788, %v1800
        %v1804 = vadd.f32 %v1802, 0.0
        %v1805 = vadd.f32 %v1803, 0.0
        %1806 = vset.pattern.permute.xlu0 10
        %1807 = vperm.xlu0 %1806, %v1789
        %v1808 = vpop.permute.xlu0 %1807
        %v1810 = vunpack.c.l.s4 839922192
        %v1811 = vunpack.c.0.s8 %v1810
        %v1812 = vlaneseq
        %v1813 = vshrl.u32 %v1812, 7
        %v1814 = vsub.s32 %v1811, %v1813
        %v1815 = vrot.slane %v1808, %v1814
        %v1817 = vmul.f32 %v1787, %v1815
        %v1818 = vmul.f32 %v1788, %v1815
        %1821 = vrot.lane.b32.xlu0 %v1817, 112
        %v1822 = vpop.permute.xlu0 %1821
        %1823 = vrot.lane.b32.xlu0 %v1818, 112
        %v1824 = vpop.permute.xlu0 %1823
        %v1825 = vrot.slane %v1822, 4
        %v1826 = vrot.slane %v1824, 4
        %v1827 = vsel %vm1187, %v1825, %v1826
        %v1828 = vsel %vm1189, %v1822, %v1827
        %v1831 = vadd.f32 %v1804, %v1828
        %v1832 = vadd.f32 %v1805, %v1824
        %1833 = vset.pattern.permute.xlu0 17
        %1834 = vperm.xlu0 %1833, %v1789
        %v1835 = vpop.permute.xlu0 %1834
        %v1837 = vunpack.c.l.s4 839922192
        %v1838 = vunpack.c.0.s8 %v1837
        %v1839 = vlaneseq
        %v1840 = vshrl.u32 %v1839, 7
        %v1841 = vsub.s32 %v1838, %v1840
        %v1842 = vrot.slane %v1835, %v1841
        %v1844 = vmul.f32 %v1787, %v1842
        %v1845 = vmul.f32 %v1788, %v1842
        %1848 = vrot.lane.b32.xlu0 %v1844, 96
        %v1849 = vpop.permute.xlu0 %1848
        %1850 = vrot.lane.b32.xlu0 %v1845, 96
        %v1851 = vpop.permute.xlu0 %1850
        %v1852 = vrot.slane %v1849, 4
        %v1853 = vrot.slane %v1851, 4
        %v1854 = vsel %vm1187, %v1852, %v1853
        %v1855 = vsel %vm1217, %v1849, %v1854
        %v1858 = vadd.f32 %v1831, %v1855
        %v1859 = vadd.f32 %v1832, %v1851
        %v1860 = vld [vmem:[#allocation3 + $0x4] sm:$0xff]
        %1861 = vset.pattern.permute.xlu0 24
        %1862 = vperm.xlu0 %1861, %v1789
        %v1863 = vpop.permute.xlu0 %1862
        %v1865 = vunpack.c.l.s4 839922192
        %v1866 = vunpack.c.0.s8 %v1865
        %v1867 = vlaneseq
        %v1868 = vshrl.u32 %v1867, 7
        %v1869 = vsub.s32 %v1866, %v1868
        %v1870 = vrot.slane %v1863, %v1869
        %v1872 = vmul.f32 %v1860, %v1870
        %1874 = vrot.lane.b32.xlu0 %v1872, 80
        %v1875 = vpop.permute.xlu0 %1874
        %v1876 = vrot.slane %v1875, 4
        %v1877 = vsel %vm1245, %v1876, %v1875
        %v1880 = vadd.f32 %v1858, %v1877
        %v1881 = vadd.f32 %v1859, %v1876
        %v1882 = vld [vmem:[#allocation3 + $0x4] sm:$0xff]
        %v1883 = vld [vmem:[#allocation3 + $0xc] sm:$0xf]
        %1884 = vset.pattern.permute.xlu0 31
        %1885 = vperm.xlu0 %1884, %v1789
        %v1886 = vpop.permute.xlu0 %1885
        %v1888 = vunpack.c.l.s4 839922192
        %v1889 = vunpack.c.0.s8 %v1888
        %v1890 = vlaneseq
        %v1891 = vshrl.u32 %v1890, 7
        %v1892 = vsub.s32 %v1889, %v1891
        %v1893 = vrot.slane %v1886, %v1892
        %v1895 = vmul.f32 %v1882, %v1893
        %v1896 = vmul.f32 %v1883, %v1893
        %1899 = vrot.lane.b32.xlu0 %v1895, 64
        %v1900 = vpop.permute.xlu0 %1899
        %1901 = vrot.lane.b32.xlu0 %v1896, 64
        %v1902 = vpop.permute.xlu0 %1901
        %v1903 = vrot.slane %v1900, 4
        %v1904 = vsel %vm323, %v1903, %v1900
        %v1905 = vsel %vm323, %v1903, %v1902
        %v1908 = vadd.f32 %v1880, %v1904
        %v1909 = vadd.f32 %v1881, %v1905
        %1910 = vset.pattern.permute.xlu0 38
        %1911 = vperm.xlu0 %1910, %v1789
        %v1912 = vpop.permute.xlu0 %1911
        %v1914 = vunpack.c.l.s4 839922192
        %v1915 = vunpack.c.0.s8 %v1914
        %v1916 = vlaneseq
        %v1917 = vshrl.u32 %v1916, 7
        %v1918 = vsub.s32 %v1915, %v1917
        %v1919 = vrot.slane %v1912, %v1918
        %v1921 = vmul.f32 %v1882, %v1919
        %v1922 = vmul.f32 %v1883, %v1919
        %1925 = vrot.lane.b32.xlu0 %v1921, 48
        %v1926 = vpop.permute.xlu0 %1925
        %1927 = vrot.lane.b32.xlu0 %v1922, 48
        %v1928 = vpop.permute.xlu0 %1927
        %v1929 = vrot.slane %v1926, 4
        %v1930 = vsel %vm1299, %v1929, %v1926
        %v1931 = vsel %vm1299, %v1929, %v1928
        %v1934 = vadd.f32 %v1908, %v1930
        %v1935 = vadd.f32 %v1909, %v1931
        %1936 = vset.pattern.permute.xlu0 45
        %1937 = vperm.xlu0 %1936, %v1789
        %v1938 = vpop.permute.xlu0 %1937
        %v1940 = vunpack.c.l.s4 839922192
        %v1941 = vunpack.c.0.s8 %v1940
        %v1942 = vlaneseq
        %v1943 = vshrl.u32 %v1942, 7
        %v1944 = vsub.s32 %v1941, %v1943
        %v1945 = vrot.slane %v1938, %v1944
        %v1947 = vmul.f32 %v1882, %v1945
        %v1948 = vmul.f32 %v1883, %v1945
        %1951 = vrot.lane.b32.xlu0 %v1947, 32
        %v1952 = vpop.permute.xlu0 %1951
        %1953 = vrot.lane.b32.xlu0 %v1948, 32
        %v1954 = vpop.permute.xlu0 %1953
        %v1955 = vrot.slane %v1952, 4
        %v1956 = vsel %vm1326, %v1955, %v1952
        %v1957 = vsel %vm1326, %v1955, %v1954
        %v1960 = vadd.f32 %v1934, %v1956
        %v1961 = vadd.f32 %v1935, %v1957
        %s1962 = scalar_lea.vmem [#allocation7], 3
        %v1963 = vld [vmem:[%s1962] ss:$8 sm:$0x3]
        %v1965 = vlaneseq
        %v1966 = vshrl.u32 %v1965, 7
        %v1967 = vsub.s32 0, %v1966
        %v1968 = vrot.slane %v1963, %v1967
        %v1969 = vlaneseq
        %v1970 = vshrl.u32 %v1969, 7
        %v1971 = vsub.s32 1, %v1970
        %v1972 = vrot.slane %v1963, %v1971
        %v1973 = vcombine.low %v1968, %v1972
        %1974 = vrot.lane.b32.xlu0 %v1973, 80
        %v1975 = vpop.permute.xlu0 %1974
        %v1976 = vrot.slane %v1975, 4
        %v1977 = vsel %vm1245, %v1976, %v1975
        %v1980 = vmul.f32 %v1960, %v1977
        %v1981 = vmul.f32 %v1961, %v1976
        %1984 = vrot.lane.b32.xlu0 %v1980, 125
        %v1985 = vpop.permute.xlu0 %1984
        %1986 = vrot.lane.b32.xlu0 %v1981, 125
        %v1987 = vpop.permute.xlu0 %1986
        %v1988 = vrot.slane %v1985, 4
        %v1989 = vrot.slane %v1987, 4
        %v1990 = vsel %vm1187, %v1988, %v1989
        %vm1991 = vcmask 1022976
        %v1992 = vsel %vm1991, %v1985, %v1990
        %v1995 = vadd.f32 %v1785, %v1992
        %v1996 = vadd.f32 %v1786, %v1987
        %v1997 = vld [vmem:[#allocation3] sm:$0xff]
        %v1998 = vld [vmem:[#allocation3 + $0x8] sm:$0xf]
        %v1999 = vld [vmem:[%s4] sm:$0xf]
        %2001 = vset.pattern.permute.xlu0 4
        %2002 = vperm.xlu0 %2001, %v1999
        %v2003 = vpop.permute.xlu0 %2002
        %v2005 = vunpack.c.l.s4 839922192
        %v2006 = vunpack.c.0.s8 %v2005
        %v2007 = vlaneseq
        %v2008 = vshrl.u32 %v2007, 7
        %v2009 = vsub.s32 %v2006, %v2008
        %v2010 = vrot.slane %v2003, %v2009
        %v2012 = vmul.f32 %v1997, %v2010
        %v2013 = vmul.f32 %v1998, %v2010
        %v2014 = vadd.f32 %v2012, 0.0
        %v2015 = vadd.f32 %v2013, 0.0
        %2016 = vset.pattern.permute.xlu0 11
        %2017 = vperm.xlu0 %2016, %v1999
        %v2018 = vpop.permute.xlu0 %2017
        %v2020 = vunpack.c.l.s4 839922192
        %v2021 = vunpack.c.0.s8 %v2020
        %v2022 = vlaneseq
        %v2023 = vshrl.u32 %v2022, 7
        %v2024 = vsub.s32 %v2021, %v2023
        %v2025 = vrot.slane %v2018, %v2024
        %v2027 = vmul.f32 %v1997, %v2025
        %v2028 = vmul.f32 %v1998, %v2025
        %2031 = vrot.lane.b32.xlu0 %v2027, 112
        %v2032 = vpop.permute.xlu0 %2031
        %2033 = vrot.lane.b32.xlu0 %v2028, 112
        %v2034 = vpop.permute.xlu0 %2033
        %v2035 = vrot.slane %v2032, 4
        %v2036 = vrot.slane %v2034, 4
        %v2037 = vsel %vm1187, %v2035, %v2036
        %v2038 = vsel %vm1189, %v2032, %v2037
        %v2041 = vadd.f32 %v2014, %v2038
        %v2042 = vadd.f32 %v2015, %v2034
        %2043 = vset.pattern.permute.xlu0 18
        %2044 = vperm.xlu0 %2043, %v1999
        %v2045 = vpop.permute.xlu0 %2044
        %v2047 = vunpack.c.l.s4 839922192
        %v2048 = vunpack.c.0.s8 %v2047
        %v2049 = vlaneseq
        %v2050 = vshrl.u32 %v2049, 7
        %v2051 = vsub.s32 %v2048, %v2050
        %v2052 = vrot.slane %v2045, %v2051
        %v2054 = vmul.f32 %v1997, %v2052
        %v2055 = vmul.f32 %v1998, %v2052
        %2058 = vrot.lane.b32.xlu0 %v2054, 96
        %v2059 = vpop.permute.xlu0 %2058
        %2060 = vrot.lane.b32.xlu0 %v2055, 96
        %v2061 = vpop.permute.xlu0 %2060
        %v2062 = vrot.slane %v2059, 4
        %v2063 = vrot.slane %v2061, 4
        %v2064 = vsel %vm1187, %v2062, %v2063
        %v2065 = vsel %vm1217, %v2059, %v2064
        %v2068 = vadd.f32 %v2041, %v2065
        %v2069 = vadd.f32 %v2042, %v2061
        %v2070 = vld [vmem:[#allocation3 + $0x4] sm:$0xff]
        %v2071 = vld [vmem:[#allocation3 + $0xc] sm:$0xf]
        %2072 = vset.pattern.permute.xlu0 25
        %2073 = vperm.xlu0 %2072, %v1999
        %v2074 = vpop.permute.xlu0 %2073
        %v2076 = vunpack.c.l.s4 839922192
        %v2077 = vunpack.c.0.s8 %v2076
        %v2078 = vlaneseq
        %v2079 = vshrl.u32 %v2078, 7
        %v2080 = vsub.s32 %v2077, %v2079
        %v2081 = vrot.slane %v2074, %v2080
        %v2083 = vmul.f32 %v2070, %v2081
        %v2084 = vmul.f32 %v2071, %v2081
        %2087 = vrot.lane.b32.xlu0 %v2083, 80
        %v2088 = vpop.permute.xlu0 %2087
        %2089 = vrot.lane.b32.xlu0 %v2084, 80
        %v2090 = vpop.permute.xlu0 %2089
        %v2091 = vrot.slane %v2088, 4
        %v2092 = vsel %vm1245, %v2091, %v2088
        %v2093 = vsel %vm1245, %v2091, %v2090
        %v2096 = vadd.f32 %v2068, %v2092
        %v2097 = vadd.f32 %v2069, %v2093
        %2098 = vset.pattern.permute.xlu0 32
        %2099 = vperm.xlu0 %2098, %v1999
        %v2100 = vpop.permute.xlu0 %2099
        %v2102 = vunpack.c.l.s4 839922192
        %v2103 = vunpack.c.0.s8 %v2102
        %v2104 = vlaneseq
        %v2105 = vshrl.u32 %v2104, 7
        %v2106 = vsub.s32 %v2103, %v2105
        %v2107 = vrot.slane %v2100, %v2106
        %v2109 = vmul.f32 %v2070, %v2107
        %v2110 = vmul.f32 %v2071, %v2107
        %2113 = vrot.lane.b32.xlu0 %v2109, 64
        %v2114 = vpop.permute.xlu0 %2113
        %2115 = vrot.lane.b32.xlu0 %v2110, 64
        %v2116 = vpop.permute.xlu0 %2115
        %v2117 = vrot.slane %v2114, 4
        %v2118 = vsel %vm323, %v2117, %v2114
        %v2119 = vsel %vm323, %v2117, %v2116
        %v2122 = vadd.f32 %v2096, %v2118
        %v2123 = vadd.f32 %v2097, %v2119
        %2124 = vset.pattern.permute.xlu0 39
        %2125 = vperm.xlu0 %2124, %v1999
        %v2126 = vpop.permute.xlu0 %2125
        %v2128 = vunpack.c.l.s4 839922192
        %v2129 = vunpack.c.0.s8 %v2128
        %v2130 = vlaneseq
        %v2131 = vshrl.u32 %v2130, 7
        %v2132 = vsub.s32 %v2129, %v2131
        %v2133 = vrot.slane %v2126, %v2132
        %v2135 = vmul.f32 %v2070, %v2133
        %v2136 = vmul.f32 %v2071, %v2133
        %2139 = vrot.lane.b32.xlu0 %v2135, 48
        %v2140 = vpop.permute.xlu0 %2139
        %2141 = vrot.lane.b32.xlu0 %v2136, 48
        %v2142 = vpop.permute.xlu0 %2141
        %v2143 = vrot.slane %v2140, 4
        %v2144 = vsel %vm1299, %v2143, %v2140
        %v2145 = vsel %vm1299, %v2143, %v2142
        %v2148 = vadd.f32 %v2122, %v2144
        %v2149 = vadd.f32 %v2123, %v2145
        %2150 = vset.pattern.permute.xlu0 46
        %2151 = vperm.xlu0 %2150, %v1999
        %v2152 = vpop.permute.xlu0 %2151
        %v2154 = vunpack.c.l.s4 839922192
        %v2155 = vunpack.c.0.s8 %v2154
        %v2156 = vlaneseq
        %v2157 = vshrl.u32 %v2156, 7
        %v2158 = vsub.s32 %v2155, %v2157
        %v2159 = vrot.slane %v2152, %v2158
        %v2161 = vmul.f32 %v2070, %v2159
        %v2162 = vmul.f32 %v2071, %v2159
        %2165 = vrot.lane.b32.xlu0 %v2161, 32
        %v2166 = vpop.permute.xlu0 %2165
        %2167 = vrot.lane.b32.xlu0 %v2162, 32
        %v2168 = vpop.permute.xlu0 %2167
        %v2169 = vrot.slane %v2166, 4
        %v2170 = vsel %vm1326, %v2169, %v2166
        %v2171 = vsel %vm1326, %v2169, %v2168
        %v2174 = vadd.f32 %v2148, %v2170
        %v2175 = vadd.f32 %v2149, %v2171
        %s2176 = scalar_lea.vmem [#allocation7], 4
        %v2177 = vld [vmem:[%s2176] ss:$8 sm:$0x3]
        %v2179 = vlaneseq
        %v2180 = vshrl.u32 %v2179, 7
        %v2181 = vsub.s32 0, %v2180
        %v2182 = vrot.slane %v2177, %v2181
        %v2183 = vlaneseq
        %v2184 = vshrl.u32 %v2183, 7
        %v2185 = vsub.s32 1, %v2184
        %v2186 = vrot.slane %v2177, %v2185
        %v2187 = vcombine.low %v2182, %v2186
        %2188 = vrot.lane.b32.xlu0 %v2187, 81
        %v2189 = vpop.permute.xlu0 %2188
        %v2190 = vrot.slane %v2189, 4
        %vm2191 = vcmask 662528
        %v2192 = vsel %vm2191, %v2190, %v2189
        %v2195 = vmul.f32 %v2174, %v2192
        %v2196 = vmul.f32 %v2175, %v2190
        %2199 = vrot.lane.b32.xlu0 %v2195, 124
        %v2200 = vpop.permute.xlu0 %2199
        %2201 = vrot.lane.b32.xlu0 %v2196, 124
        %v2202 = vpop.permute.xlu0 %2201
        %v2203 = vrot.slane %v2200, 4
        %v2204 = vrot.slane %v2202, 4
        %v2205 = vsel %vm1187, %v2203, %v2204
        %vm2206 = vcmask 1014784
        %v2207 = vsel %vm2206, %v2200, %v2205
        %v2210 = vadd.f32 %v1995, %v2207
        %v2211 = vadd.f32 %v1996, %v2202
        %v2212 = vld [vmem:[#allocation3] sm:$0xff]
        %v2213 = vld [vmem:[#allocation3 + $0x8] sm:$0xf]
        %v2214 = vld [vmem:[%s4] sm:$0xf]
        %2216 = vset.pattern.permute.xlu0 5
        %2217 = vperm.xlu0 %2216, %v2214
        %v2218 = vpop.permute.xlu0 %2217
        %v2220 = vunpack.c.l.s4 839922192
        %v2221 = vunpack.c.0.s8 %v2220
        %v2222 = vlaneseq
        %v2223 = vshrl.u32 %v2222, 7
        %v2224 = vsub.s32 %v2221, %v2223
        %v2225 = vrot.slane %v2218, %v2224
        %v2227 = vmul.f32 %v2212, %v2225
        %v2228 = vmul.f32 %v2213, %v2225
        %v2229 = vadd.f32 %v2227, 0.0
        %v2230 = vadd.f32 %v2228, 0.0
        %2231 = vset.pattern.permute.xlu0 12
        %2232 = vperm.xlu0 %2231, %v2214
        %v2233 = vpop.permute.xlu0 %2232
        %v2235 = vunpack.c.l.s4 839922192
        %v2236 = vunpack.c.0.s8 %v2235
        %v2237 = vlaneseq
        %v2238 = vshrl.u32 %v2237, 7
        %v2239 = vsub.s32 %v2236, %v2238
        %v2240 = vrot.slane %v2233, %v2239
        %v2242 = vmul.f32 %v2212, %v2240
        %v2243 = vmul.f32 %v2213, %v2240
        %2246 = vrot.lane.b32.xlu0 %v2242, 112
        %v2247 = vpop.permute.xlu0 %2246
        %2248 = vrot.lane.b32.xlu0 %v2243, 112
        %v2249 = vpop.permute.xlu0 %2248
        %v2250 = vrot.slane %v2247, 4
        %v2251 = vrot.slane %v2249, 4
        %v2252 = vsel %vm1187, %v2250, %v2251
        %v2253 = vsel %vm1189, %v2247, %v2252
        %v2256 = vadd.f32 %v2229, %v2253
        %v2257 = vadd.f32 %v2230, %v2249
        %2258 = vset.pattern.permute.xlu0 19
        %2259 = vperm.xlu0 %2258, %v2214
        %v2260 = vpop.permute.xlu0 %2259
        %v2262 = vunpack.c.l.s4 839922192
        %v2263 = vunpack.c.0.s8 %v2262
        %v2264 = vlaneseq
        %v2265 = vshrl.u32 %v2264, 7
        %v2266 = vsub.s32 %v2263, %v2265
        %v2267 = vrot.slane %v2260, %v2266
        %v2269 = vmul.f32 %v2212, %v2267
        %v2270 = vmul.f32 %v2213, %v2267
        %2273 = vrot.lane.b32.xlu0 %v2269, 96
        %v2274 = vpop.permute.xlu0 %2273
        %2275 = vrot.lane.b32.xlu0 %v2270, 96
        %v2276 = vpop.permute.xlu0 %2275
        %v2277 = vrot.slane %v2274, 4
        %v2278 = vrot.slane %v2276, 4
        %v2279 = vsel %vm1187, %v2277, %v2278
        %v2280 = vsel %vm1217, %v2274, %v2279
        %v2283 = vadd.f32 %v2256, %v2280
        %v2284 = vadd.f32 %v2257, %v2276
        %v2285 = vld [vmem:[#allocation3 + $0x4] sm:$0xff]
        %v2286 = vld [vmem:[#allocation3 + $0xc] sm:$0xf]
        %2287 = vset.pattern.permute.xlu0 26
        %2288 = vperm.xlu0 %2287, %v2214
        %v2289 = vpop.permute.xlu0 %2288
        %v2291 = vunpack.c.l.s4 839922192
        %v2292 = vunpack.c.0.s8 %v2291
        %v2293 = vlaneseq
        %v2294 = vshrl.u32 %v2293, 7
        %v2295 = vsub.s32 %v2292, %v2294
        %v2296 = vrot.slane %v2289, %v2295
        %v2298 = vmul.f32 %v2285, %v2296
        %v2299 = vmul.f32 %v2286, %v2296
        %2302 = vrot.lane.b32.xlu0 %v2298, 80
        %v2303 = vpop.permute.xlu0 %2302
        %2304 = vrot.lane.b32.xlu0 %v2299, 80
        %v2305 = vpop.permute.xlu0 %2304
        %v2306 = vrot.slane %v2303, 4
        %v2307 = vsel %vm1245, %v2306, %v2303
        %v2308 = vsel %vm1245, %v2306, %v2305
        %v2311 = vadd.f32 %v2283, %v2307
        %v2312 = vadd.f32 %v2284, %v2308
        %2313 = vset.pattern.permute.xlu0 33
        %2314 = vperm.xlu0 %2313, %v2214
        %v2315 = vpop.permute.xlu0 %2314
        %v2317 = vunpack.c.l.s4 839922192
        %v2318 = vunpack.c.0.s8 %v2317
        %v2319 = vlaneseq
        %v2320 = vshrl.u32 %v2319, 7
        %v2321 = vsub.s32 %v2318, %v2320
        %v2322 = vrot.slane %v2315, %v2321
        %v2324 = vmul.f32 %v2285, %v2322
        %v2325 = vmul.f32 %v2286, %v2322
        %2328 = vrot.lane.b32.xlu0 %v2324, 64
        %v2329 = vpop.permute.xlu0 %2328
        %2330 = vrot.lane.b32.xlu0 %v2325, 64
        %v2331 = vpop.permute.xlu0 %2330
        %v2332 = vrot.slane %v2329, 4
        %v2333 = vsel %vm323, %v2332, %v2329
        %v2334 = vsel %vm323, %v2332, %v2331
        %v2337 = vadd.f32 %v2311, %v2333
        %v2338 = vadd.f32 %v2312, %v2334
        %2339 = vset.pattern.permute.xlu0 40
        %2340 = vperm.xlu0 %2339, %v2214
        %v2341 = vpop.permute.xlu0 %2340
        %v2343 = vunpack.c.l.s4 839922192
        %v2344 = vunpack.c.0.s8 %v2343
        %v2345 = vlaneseq
        %v2346 = vshrl.u32 %v2345, 7
        %v2347 = vsub.s32 %v2344, %v2346
        %v2348 = vrot.slane %v2341, %v2347
        %v2350 = vmul.f32 %v2285, %v2348
        %v2351 = vmul.f32 %v2286, %v2348
        %2354 = vrot.lane.b32.xlu0 %v2350, 48
        %v2355 = vpop.permute.xlu0 %2354
        %2356 = vrot.lane.b32.xlu0 %v2351, 48
        %v2357 = vpop.permute.xlu0 %2356
        %v2358 = vrot.slane %v2355, 4
        %v2359 = vsel %vm1299, %v2358, %v2355
        %v2360 = vsel %vm1299, %v2358, %v2357
        %v2363 = vadd.f32 %v2337, %v2359
        %v2364 = vadd.f32 %v2338, %v2360
        %2365 = vset.pattern.permute.xlu0 47
        %2366 = vperm.xlu0 %2365, %v2214
        %v2367 = vpop.permute.xlu0 %2366
        %v2369 = vunpack.c.l.s4 839922192
        %v2370 = vunpack.c.0.s8 %v2369
        %v2371 = vlaneseq
        %v2372 = vshrl.u32 %v2371, 7
        %v2373 = vsub.s32 %v2370, %v2372
        %v2374 = vrot.slane %v2367, %v2373
        %v2376 = vmul.f32 %v2285, %v2374
        %v2377 = vmul.f32 %v2286, %v2374
        %2380 = vrot.lane.b32.xlu0 %v2376, 32
        %v2381 = vpop.permute.xlu0 %2380
        %2382 = vrot.lane.b32.xlu0 %v2377, 32
        %v2383 = vpop.permute.xlu0 %2382
        %v2384 = vrot.slane %v2381, 4
        %v2385 = vsel %vm1326, %v2384, %v2381
        %v2386 = vsel %vm1326, %v2384, %v2383
        %v2389 = vadd.f32 %v2363, %v2385
        %v2390 = vadd.f32 %v2364, %v2386
        %s2391 = scalar_lea.vmem [#allocation7], 5
        %v2392 = vld [vmem:[%s2391] ss:$8 sm:$0x3]
        %v2394 = vlaneseq
        %v2395 = vshrl.u32 %v2394, 7
        %v2396 = vsub.s32 0, %v2395
        %v2397 = vrot.slane %v2392, %v2396
        %v2398 = vlaneseq
        %v2399 = vshrl.u32 %v2398, 7
        %v2400 = vsub.s32 1, %v2399
        %v2401 = vrot.slane %v2392, %v2400
        %v2402 = vcombine.low %v2397, %v2401
        %2403 = vrot.lane.b32.xlu0 %v2402, 82
        %v2404 = vpop.permute.xlu0 %2403
        %v2405 = vrot.slane %v2404, 4
        %vm2406 = vcmask 670720
        %v2407 = vsel %vm2406, %v2405, %v2404
        %v2410 = vmul.f32 %v2389, %v2407
        %v2411 = vmul.f32 %v2390, %v2405
        %2414 = vrot.lane.b32.xlu0 %v2410, 123
        %v2415 = vpop.permute.xlu0 %2414
        %2416 = vrot.lane.b32.xlu0 %v2411, 123
        %v2417 = vpop.permute.xlu0 %2416
        %v2418 = vrot.slane %v2415, 4
        %v2419 = vrot.slane %v2417, 4
        %v2420 = vsel %vm1187, %v2418, %v2419
        %vm2421 = vcmask 1006592
        %v2422 = vsel %vm2421, %v2415, %v2420
        %v2425 = vadd.f32 %v2210, %v2422
        %v2426 = vadd.f32 %v2211, %v2417
        %v2427 = vld [vmem:[#allocation3] sm:$0xff]
        %v2428 = vld [vmem:[#allocation3 + $0x8] sm:$0xf]
        %v2429 = vld [vmem:[%s4] sm:$0xf]
        %2431 = vset.pattern.permute.xlu0 6
        %2432 = vperm.xlu0 %2431, %v2429
        %v2433 = vpop.permute.xlu0 %2432
        %v2435 = vunpack.c.l.s4 839922192
        %v2436 = vunpack.c.0.s8 %v2435
        %v2437 = vlaneseq
        %v2438 = vshrl.u32 %v2437, 7
        %v2439 = vsub.s32 %v2436, %v2438
        %v2440 = vrot.slane %v2433, %v2439
        %v2442 = vmul.f32 %v2427, %v2440
        %v2443 = vmul.f32 %v2428, %v2440
        %v2444 = vadd.f32 %v2442, 0.0
        %v2445 = vadd.f32 %v2443, 0.0
        %2446 = vset.pattern.permute.xlu0 13
        %2447 = vperm.xlu0 %2446, %v2429
        %v2448 = vpop.permute.xlu0 %2447
        %v2450 = vunpack.c.l.s4 839922192
        %v2451 = vunpack.c.0.s8 %v2450
        %v2452 = vlaneseq
        %v2453 = vshrl.u32 %v2452, 7
        %v2454 = vsub.s32 %v2451, %v2453
        %v2455 = vrot.slane %v2448, %v2454
        %v2457 = vmul.f32 %v2427, %v2455
        %v2458 = vmul.f32 %v2428, %v2455
        %2461 = vrot.lane.b32.xlu0 %v2457, 112
        %v2462 = vpop.permute.xlu0 %2461
        %2463 = vrot.lane.b32.xlu0 %v2458, 112
        %v2464 = vpop.permute.xlu0 %2463
        %v2465 = vrot.slane %v2462, 4
        %v2466 = vrot.slane %v2464, 4
        %v2467 = vsel %vm1187, %v2465, %v2466
        %v2468 = vsel %vm1189, %v2462, %v2467
        %v2471 = vadd.f32 %v2444, %v2468
        %v2472 = vadd.f32 %v2445, %v2464
        %2473 = vset.pattern.permute.xlu0 20
        %2474 = vperm.xlu0 %2473, %v2429
        %v2475 = vpop.permute.xlu0 %2474
        %v2477 = vunpack.c.l.s4 839922192
        %v2478 = vunpack.c.0.s8 %v2477
        %v2479 = vlaneseq
        %v2480 = vshrl.u32 %v2479, 7
        %v2481 = vsub.s32 %v2478, %v2480
        %v2482 = vrot.slane %v2475, %v2481
        %v2484 = vmul.f32 %v2427, %v2482
        %v2485 = vmul.f32 %v2428, %v2482
        %2488 = vrot.lane.b32.xlu0 %v2484, 96
        %v2489 = vpop.permute.xlu0 %2488
        %2490 = vrot.lane.b32.xlu0 %v2485, 96
        %v2491 = vpop.permute.xlu0 %2490
        %v2492 = vrot.slane %v2489, 4
        %v2493 = vrot.slane %v2491, 4
        %v2494 = vsel %vm1187, %v2492, %v2493
        %v2495 = vsel %vm1217, %v2489, %v2494
        %v2498 = vadd.f32 %v2471, %v2495
        %v2499 = vadd.f32 %v2472, %v2491
        %v2500 = vld [vmem:[#allocation3 + $0x4] sm:$0xff]
        %v2501 = vld [vmem:[#allocation3 + $0xc] sm:$0xf]
        %2502 = vset.pattern.permute.xlu0 27
        %2503 = vperm.xlu0 %2502, %v2429
        %v2504 = vpop.permute.xlu0 %2503
        %v2506 = vunpack.c.l.s4 839922192
        %v2507 = vunpack.c.0.s8 %v2506
        %v2508 = vlaneseq
        %v2509 = vshrl.u32 %v2508, 7
        %v2510 = vsub.s32 %v2507, %v2509
        %v2511 = vrot.slane %v2504, %v2510
        %v2513 = vmul.f32 %v2500, %v2511
        %v2514 = vmul.f32 %v2501, %v2511
        %2517 = vrot.lane.b32.xlu0 %v2513, 80
        %v2518 = vpop.permute.xlu0 %2517
        %2519 = vrot.lane.b32.xlu0 %v2514, 80
        %v2520 = vpop.permute.xlu0 %2519
        %v2521 = vrot.slane %v2518, 4
        %v2522 = vsel %vm1245, %v2521, %v2518
        %v2523 = vsel %vm1245, %v2521, %v2520
        %v2526 = vadd.f32 %v2498, %v2522
        %v2527 = vadd.f32 %v2499, %v2523
        %2528 = vset.pattern.permute.xlu0 34
        %2529 = vperm.xlu0 %2528, %v2429
        %v2530 = vpop.permute.xlu0 %2529
        %v2532 = vunpack.c.l.s4 839922192
        %v2533 = vunpack.c.0.s8 %v2532
        %v2534 = vlaneseq
        %v2535 = vshrl.u32 %v2534, 7
        %v2536 = vsub.s32 %v2533, %v2535
        %v2537 = vrot.slane %v2530, %v2536
        %v2539 = vmul.f32 %v2500, %v2537
        %v2540 = vmul.f32 %v2501, %v2537
        %2543 = vrot.lane.b32.xlu0 %v2539, 64
        %v2544 = vpop.permute.xlu0 %2543
        %2545 = vrot.lane.b32.xlu0 %v2540, 64
        %v2546 = vpop.permute.xlu0 %2545
        %v2547 = vrot.slane %v2544, 4
        %v2548 = vsel %vm323, %v2547, %v2544
        %v2549 = vsel %vm323, %v2547, %v2546
        %v2552 = vadd.f32 %v2526, %v2548
        %v2553 = vadd.f32 %v2527, %v2549
        %2554 = vset.pattern.permute.xlu0 41
        %2555 = vperm.xlu0 %2554, %v2429
        %v2556 = vpop.permute.xlu0 %2555
        %v2558 = vunpack.c.l.s4 839922192
        %v2559 = vunpack.c.0.s8 %v2558
        %v2560 = vlaneseq
        %v2561 = vshrl.u32 %v2560, 7
        %v2562 = vsub.s32 %v2559, %v2561
        %v2563 = vrot.slane %v2556, %v2562
        %v2565 = vmul.f32 %v2500, %v2563
        %v2566 = vmul.f32 %v2501, %v2563
        %2569 = vrot.lane.b32.xlu0 %v2565, 48
        %v2570 = vpop.permute.xlu0 %2569
        %2571 = vrot.lane.b32.xlu0 %v2566, 48
        %v2572 = vpop.permute.xlu0 %2571
        %v2573 = vrot.slane %v2570, 4
        %v2574 = vsel %vm1299, %v2573, %v2570
        %v2575 = vsel %vm1299, %v2573, %v2572
        %v2578 = vadd.f32 %v2552, %v2574
        %v2579 = vadd.f32 %v2553, %v2575
        %2580 = vset.pattern.permute.xlu0 48
        %2581 = vperm.xlu0 %2580, %v2429
        %v2582 = vpop.permute.xlu0 %2581
        %v2584 = vunpack.c.l.s4 839922192
        %v2585 = vunpack.c.0.s8 %v2584
        %v2586 = vlaneseq
        %v2587 = vshrl.u32 %v2586, 7
        %v2588 = vsub.s32 %v2585, %v2587
        %v2589 = vrot.slane %v2582, %v2588
        %v2591 = vmul.f32 %v2500, %v2589
        %v2592 = vmul.f32 %v2501, %v2589
        %2595 = vrot.lane.b32.xlu0 %v2591, 32
        %v2596 = vpop.permute.xlu0 %2595
        %2597 = vrot.lane.b32.xlu0 %v2592, 32
        %v2598 = vpop.permute.xlu0 %2597
        %v2599 = vrot.slane %v2596, 4
        %v2600 = vsel %vm1326, %v2599, %v2596
        %v2601 = vsel %vm1326, %v2599, %v2598
        %v2604 = vadd.f32 %v2578, %v2600
        %v2605 = vadd.f32 %v2579, %v2601
        %s2606 = scalar_lea.vmem [#allocation7], 6
        %v2607 = vld [vmem:[%s2606] ss:$8 sm:$0x3]
        %v2609 = vlaneseq
        %v2610 = vshrl.u32 %v2609, 7
        %v2611 = vsub.s32 0, %v2610
        %v2612 = vrot.slane %v2607, %v2611
        %v2613 = vlaneseq
        %v2614 = vshrl.u32 %v2613, 7
        %v2615 = vsub.s32 1, %v2614
        %v2616 = vrot.slane %v2607, %v2615
        %v2617 = vcombine.low %v2612, %v2616
        %2618 = vrot.lane.b32.xlu0 %v2617, 83
        %v2619 = vpop.permute.xlu0 %2618
        %v2620 = vrot.slane %v2619, 4
        %vm2621 = vcmask 678912
        %v2622 = vsel %vm2621, %v2620, %v2619
        %v2625 = vmul.f32 %v2604, %v2622
        %v2626 = vmul.f32 %v2605, %v2620
        %2629 = vrot.lane.b32.xlu0 %v2625, 122
        %v2630 = vpop.permute.xlu0 %2629
        %2631 = vrot.lane.b32.xlu0 %v2626, 122
        %v2632 = vpop.permute.xlu0 %2631
        %v2633 = vrot.slane %v2630, 4
        %v2634 = vrot.slane %v2632, 4
        %v2635 = vsel %vm1187, %v2633, %v2634
        %vm2636 = vcmask 998400
        %v2637 = vsel %vm2636, %v2630, %v2635
        %v2640 = vadd.f32 %v2425, %v2637
        %v2641 = vadd.f32 %v2426, %v2632
        %v2644 = vrot.slane %v2640, 5
        %v2645 = vrot.slane %v2644, 4
        %v2646 = vrot.slane %v2641, 5
        %v2647 = vrot.slane %v2646, 4
        %v2650 = vadd.f32 %v2640, %v2645
        %v2651 = vadd.f32 %v2641, %v2647
        %v2652 = vmul.f32 %v2650, 0.5
        %v2653 = vmul.f32 %v2651, 0.5
        %v2654 = vtanh.pop %v2652
        %v2655 = vtanh.pop %v2653
        %v2656 = vadd.f32 %v2654, 1.0
        %v2657 = vadd.f32 %v2655, 1.0
        %v2658 = vmul.f32 %v2656, 0.5
        %v2659 = vmul.f32 %v2657, 0.5
        %v2660 = vld [vmem:[#allocation2] sm:$0xff]
        %v2661 = vld [vmem:[#allocation2 + $0x8] sm:$0xff]
        %v2662 = vld [vmem:[#allocation2 + $0x10] sm:$0xff]
        %v2663 = vld [vmem:[#allocation2 + $0x18] sm:$0xff]
        %v2664 = vld [vmem:[#allocation2 + $0x20] sm:$0xff]
        %v2665 = vld [vmem:[#allocation2 + $0x28] sm:$0xff]
        %v2666 = vld [vmem:[#allocation2 + $0x30] sm:$0xff]
        %v2667 = vld [vmem:[#allocation2 + $0x38] sm:$0xff]
        %v2668 = vld [vmem:[#allocation2 + $0x40] sm:$0xff]
        %v2669 = vld [vmem:[#allocation2 + $0x48] sm:$0xff]
        %v2670 = vld [vmem:[#allocation2 + $0x50] sm:$0xff]
        %v2671 = vld [vmem:[#allocation2 + $0x58] sm:$0xff]
        %v2672 = vld [vmem:[#allocation2 + $0x60] sm:$0xff]
        %v2673 = vld [vmem:[#allocation2 + $0x68] sm:$0xff]
        %v2674 = vld [vmem:[#allocation2 + $0x70] sm:$0xff]
        %v2675 = vld [vmem:[#allocation2 + $0x78] sm:$0xff]
        %v2678 = vlaneseq
        %v2679 = vshrl.u32 %v2678, 7
        %v2680 = vsub.s32 0, %v2679
        %v2681 = vrot.slane %v2658, %v2680
        %v2682 = vlaneseq
        %v2683 = vshrl.u32 %v2682, 7
        %v2684 = vsub.s32 4, %v2683
        %v2685 = vrot.slane %v2658, %v2684
        %v2686 = vlaneseq
        %v2687 = vshrl.u32 %v2686, 7
        %v2688 = vsub.s32 0, %v2687
        %v2689 = vrot.slane %v2659, %v2688
        %v2693 = vlaneseq
        %v2694 = vshrl.u32 %v2693, 7
        %v2695 = vsub.s32 0, %v2694
        %v2696 = vrot.slane %v2681, %v2695
        %v2697 = vlaneseq
        %v2698 = vshrl.u32 %v2697, 7
        %v2699 = vsub.s32 0, %v2698
        %v2700 = vrot.slane %v2685, %v2699
        %v2701 = vlaneseq
        %v2702 = vshrl.u32 %v2701, 7
        %v2703 = vsub.s32 0, %v2702
        %v2704 = vrot.slane %v2689, %v2703
        %2708 = vrot.lane.b32.xlu0 %v2696, 51
        %v2709 = vpop.permute.xlu0 %2708
        %2710 = vrot.lane.b32.xlu0 %v2700, 51
        %v2711 = vpop.permute.xlu0 %2710
        %2712 = vrot.lane.b32.xlu0 %v2704, 51
        %v2713 = vpop.permute.xlu0 %2712
        %vm2714 = vcmask 416768
        %v2715 = vsel %vm2714, %v2709, %v2711
        %v2716 = vsel %vm2714, %v2711, %v2713
        %v2719 = vmul.f32 %v2660, %v2715
        %v2720 = vmul.f32 %v2661, %v2716
        %v2721 = vmul.f32 %v2662, %v2715
        %v2722 = vmul.f32 %v2663, %v2716
        %v2723 = vmul.f32 %v2664, %v2715
        %v2724 = vmul.f32 %v2665, %v2716
        %v2725 = vmul.f32 %v2666, %v2715
        %v2726 = vmul.f32 %v2667, %v2716
        %v2727 = vmul.f32 %v2668, %v2715
        %v2728 = vmul.f32 %v2669, %v2716
        %v2729 = vmul.f32 %v2670, %v2715
        %v2730 = vmul.f32 %v2671, %v2716
        %v2731 = vmul.f32 %v2672, %v2715
        %v2732 = vmul.f32 %v2673, %v2716
        %v2733 = vmul.f32 %v2674, %v2715
        %v2734 = vmul.f32 %v2675, %v2716
        %2735 = vst [vmem:[%s256] sm:$0xff] %v2719
        %2736 = vst [vmem:[%s256 + $0x8] sm:$0xff] %v2720
        %2737 = vst [vmem:[%s256 + $0x10] sm:$0xff] %v2721
        %2738 = vst [vmem:[%s256 + $0x18] sm:$0xff] %v2722
        %2739 = vst [vmem:[%s256 + $0x20] sm:$0xff] %v2723
        %2740 = vst [vmem:[%s256 + $0x28] sm:$0xff] %v2724
        %2741 = vst [vmem:[%s256 + $0x30] sm:$0xff] %v2725
        %2742 = vst [vmem:[%s256 + $0x38] sm:$0xff] %v2726
        %2743 = vst [vmem:[%s256 + $0x40] sm:$0xff] %v2727
        %2744 = vst [vmem:[%s256 + $0x48] sm:$0xff] %v2728
        %2745 = vst [vmem:[%s256 + $0x50] sm:$0xff] %v2729
        %2746 = vst [vmem:[%s256 + $0x58] sm:$0xff] %v2730
        %2747 = vst [vmem:[%s256 + $0x60] sm:$0xff] %v2731
        %2748 = vst [vmem:[%s256 + $0x68] sm:$0xff] %v2732
        %2749 = vst [vmem:[%s256 + $0x70] sm:$0xff] %v2733
        %2750 = vst [vmem:[%s256 + $0x78] sm:$0xff] %v2734
        %v2751 = vld [vmem:[%s815] sm:$0xff]
        %v2752 = vld [vmem:[%s815 + $0x8] sm:$0xff]
        %v2753 = vld [vmem:[%s815 + $0x10] sm:$0xff]
        %v2754 = vld [vmem:[%s815 + $0x18] sm:$0xff]
        %v2755 = vld [vmem:[%s815 + $0x20] sm:$0xff]
        %v2756 = vld [vmem:[%s815 + $0x28] sm:$0xff]
        %v2757 = vld [vmem:[%s815 + $0x30] sm:$0xff]
        %v2758 = vld [vmem:[%s815 + $0x38] sm:$0xff]
        %v2759 = vld [vmem:[%s815 + $0x40] sm:$0xff]
        %v2760 = vld [vmem:[%s815 + $0x48] sm:$0xff]
        %v2761 = vld [vmem:[%s815 + $0x50] sm:$0xff]
        %v2762 = vld [vmem:[%s815 + $0x58] sm:$0xff]
        %v2763 = vld [vmem:[%s815 + $0x60] sm:$0xff]
        %v2764 = vld [vmem:[%s815 + $0x68] sm:$0xff]
        %v2765 = vld [vmem:[%s815 + $0x70] sm:$0xff]
        %v2766 = vld [vmem:[%s815 + $0x78] sm:$0xff]
        %v2767 = vlaneseq
        %v2768 = vshrl.u32 %v2767, 7
        %v2769 = vsub.s32 2, %v2768
        %v2770 = vrot.slane %v2658, %v2769
        %v2771 = vlaneseq
        %v2772 = vshrl.u32 %v2771, 7
        %v2773 = vsub.s32 6, %v2772
        %v2774 = vrot.slane %v2658, %v2773
        %v2775 = vlaneseq
        %v2776 = vshrl.u32 %v2775, 7
        %v2777 = vsub.s32 2, %v2776
        %v2778 = vrot.slane %v2659, %v2777
        %v2782 = vlaneseq
        %v2783 = vshrl.u32 %v2782, 7
        %v2784 = vsub.s32 2, %v2783
        %v2785 = vrot.slane %v2770, %v2784
        %v2786 = vlaneseq
        %v2787 = vshrl.u32 %v2786, 7
        %v2788 = vsub.s32 2, %v2787
        %v2789 = vrot.slane %v2774, %v2788
        %v2790 = vlaneseq
        %v2791 = vshrl.u32 %v2790, 7
        %v2792 = vsub.s32 2, %v2791
        %v2793 = vrot.slane %v2778, %v2792
        %2797 = vrot.lane.b32.xlu0 %v2785, 51
        %v2798 = vpop.permute.xlu0 %2797
        %2799 = vrot.lane.b32.xlu0 %v2789, 51
        %v2800 = vpop.permute.xlu0 %2799
        %2801 = vrot.lane.b32.xlu0 %v2793, 51
        %v2802 = vpop.permute.xlu0 %2801
        %v2803 = vsel %vm2714, %v2798, %v2800
        %v2804 = vsel %vm2714, %v2800, %v2802
        %v2807 = vmul.f32 %v2751, %v2803
        %v2808 = vmul.f32 %v2752, %v2804
        %v2809 = vmul.f32 %v2753, %v2803
        %v2810 = vmul.f32 %v2754, %v2804
        %v2811 = vmul.f32 %v2755, %v2803
        %v2812 = vmul.f32 %v2756, %v2804
        %v2813 = vmul.f32 %v2757, %v2803
        %v2814 = vmul.f32 %v2758, %v2804
        %v2815 = vmul.f32 %v2759, %v2803
        %v2816 = vmul.f32 %v2760, %v2804
        %v2817 = vmul.f32 %v2761, %v2803
        %v2818 = vmul.f32 %v2762, %v2804
        %v2819 = vmul.f32 %v2763, %v2803
        %v2820 = vmul.f32 %v2764, %v2804
        %v2821 = vmul.f32 %v2765, %v2803
        %v2822 = vmul.f32 %v2766, %v2804
        %s2823 = scalar_lea.vmem %s256, 128 [#allocation9]
        %2824 = vst [vmem:[%s2823] sm:$0xff] %v2807
        %2825 = vst [vmem:[%s2823 + $0x8] sm:$0xff] %v2808
        %2826 = vst [vmem:[%s2823 + $0x10] sm:$0xff] %v2809
        %2827 = vst [vmem:[%s2823 + $0x18] sm:$0xff] %v2810
        %2828 = vst [vmem:[%s2823 + $0x20] sm:$0xff] %v2811
        %2829 = vst [vmem:[%s2823 + $0x28] sm:$0xff] %v2812
        %2830 = vst [vmem:[%s2823 + $0x30] sm:$0xff] %v2813
        %2831 = vst [vmem:[%s2823 + $0x38] sm:$0xff] %v2814
        %2832 = vst [vmem:[%s2823 + $0x40] sm:$0xff] %v2815
        %2833 = vst [vmem:[%s2823 + $0x48] sm:$0xff] %v2816
        %2834 = vst [vmem:[%s2823 + $0x50] sm:$0xff] %v2817
        %2835 = vst [vmem:[%s2823 + $0x58] sm:$0xff] %v2818
        %2836 = vst [vmem:[%s2823 + $0x60] sm:$0xff] %v2819
        %2837 = vst [vmem:[%s2823 + $0x68] sm:$0xff] %v2820
        %2838 = vst [vmem:[%s2823 + $0x70] sm:$0xff] %v2821
        %2839 = vst [vmem:[%s2823 + $0x78] sm:$0xff] %v2822
        %s2840 = sand.u32 %s141, 1
        %s2841 = scalar_lea.sflag [#allocation6], %s2840
        %s2842 = sand.u32 %s141, 1
        %s2843 = smul.addr %s2842, 256
        %s2844 = scalar_lea.vmem [#allocation9], %s2843
        // Predicated region
        $region49: #{tpu_custom_call.1} parent=39 // pred_check
          %p2845 = pneg %p151
        $region50: #{tpu_custom_call.1} parent=39 // pred_check_branch
          %2847 = sbr.rel (%p2845) target = $region52
        $region51: #{tpu_custom_call.1} parent=39 // pred_region
          %s2848 = smul.u32 2, %s23
          %s2850 = ssub.s32 4096, 4096
          %2851 = vsyncadd %s2841, %s2850
          %s2852 = smul.addr %s2848, 16
          %s2853 = smul.addr %s2852, 128
          %s2854 = scalar_lea.hbm %s5, %s2853
          %s2855 = sshll.u32 %s2844, 4
          %s2856 = int_to_ptr.vmem [resolvable:$true] %s2855
          %2861 = dma.vmem_to_hbm [thread:$0]  %s2856, 4096, %s2854, %s2841, 256, 256, 16
        $region52: #{tpu_custom_call.1} parent=39 // pred_fallthru
          _
      $region40: #{tpu_custom_call.1} parent=5 // pred_fallthru
        _
      %p2862 = scmp.le.s32.totalorder 2, %s18
      // Predicated region
      $region53: #{tpu_custom_call.1} parent=5 // pred_check
        %p2863 = pneg %p2862
      $region54: #{tpu_custom_call.1} parent=5 // pred_check_branch
        %2865 = sbr.rel (%p2863) target = $region56
      $region55: #{tpu_custom_call.1} parent=5 // pred_region
        %s2866 = ssub.s32 %s18, 2
        // Predicated region
        $region57: #{tpu_custom_call.1} parent=55 // pred_check
          %p2867 = pneg %p157
        $region58: #{tpu_custom_call.1} parent=55 // pred_check_branch
          %2869 = sbr.rel (%p2867) target = $region60
        $region59: #{tpu_custom_call.1} parent=55 // pred_region
          %s2870 = sand.u32 %s142, 1
          %s2871 = scalar_lea.sflag [#allocation6], %s2870
          %s2872 = sand.u32 %s142, 1
          %s2873 = smul.addr %s2872, 256
          %s2874 = scalar_lea.vmem [#allocation9], %s2873
          %2875 = dma.done %s2871, 4096
        $region60: #{tpu_custom_call.1} parent=55 // pred_fallthru
          _
      $region56: #{tpu_custom_call.1} parent=5 // pred_fallthru
        _
    $region6: #{tpu_custom_call.1} parent=1 // loop_footer
      %s22 = sadd.s32 1, %s18
    $region7: #{tpu_custom_call.1} parent=1 // loop_footer_branch
      %17 = sbr.rel target = $region3
    $region8: #{tpu_custom_call.1} parent=1 // loop_exit
      _
    %2876 = vsyncpa [#allocation5], 1
    %s2877 = scalar_lea.sflag [#allocation5], 1
    %2878 = vsyncpa %s2877, 1
    %2879 = vsyncpa [#allocation8], 1
    %2880 = vsyncpa [#allocation6], 1
    %s2881 = scalar_lea.sflag [#allocation6], 1
    %2882 = vsyncpa %s2881, 1

</llo_original>
